<compile_context>
chip_gen: v5e
topology: v5e:2x2
jax: 0.10.0
libtpu: 0.0.40
codegen_flags: <defaults>
</compile_context>

<pallas_src>
import jax
import jax.numpy as jnp
from jax.experimental import pallas as pl
from jax.experimental.pallas import tpu as pltpu

# ---- small CLIP-text config -------------------------------------------------
B = 2          # batch
S = 16         # sequence length (stand-in for max_length=77)
H = 128        # hidden size
NUM_HEADS = 2
HEAD_DIM = H // NUM_HEADS
FF = 4 * H     # MLP intermediate
L = 2          # transformer layers
VOCAB = 512
EPS = 1e-5
BS = B * S     # batch folded into the matmul M dimension


def _layer_norm(v, w, b):
    mu = jnp.mean(v, axis=-1, keepdims=True)
    var = jnp.mean((v - mu) ** 2, axis=-1, keepdims=True)
    return (v - mu) * jax.lax.rsqrt(var + EPS) * w + b


def clip_text_kernel(
    x_ref,                       # (BS, H) token+pos embeddings (read at l==0)
    ln1_w, ln1_b,                # (1, 1, H)
    wq, bq, wk, bk, wv, bv,      # (1, H, H) bf16, (1, 1, H) f32
    wo, bo,                      # (1, H, H) bf16, (1, 1, H) f32
    ln2_w, ln2_b,                # (1, 1, H)
    w1, b1,                      # (1, H, FF) bf16, (1, 1, FF) f32
    w2, b2,                      # (1, FF, H) bf16, (1, 1, H) f32
    lnf_w, lnf_b,                # (1, 1, H)
    o_ref,                       # (BS, H)
    x_sc,                        # VMEM (BS, H) f32 running activation
    attn_sc,                     # VMEM (BS, H) f32 per-head output slab
):
    l = pl.program_id(0)

    @pl.when(l == 0)
    def _():
        x_sc[...] = x_ref[...].astype(jnp.float32)

    x = x_sc[...]                                         # (BS, H) f32
    scale = jnp.float32(1.0 / (HEAD_DIM ** 0.5))

    # causal mask over (B, S, S) — CLIP text model uses a causal mask
    row = jax.lax.broadcasted_iota(jnp.int32, (B, S, S), 1)
    col = jax.lax.broadcasted_iota(jnp.int32, (B, S, S), 2)
    causal = col <= row

    # ---- self-attention block (pre-LN), batch folded into matmul M dim ----
    h_ln = _layer_norm(x, ln1_w[0], ln1_b[0])
    h_bf = h_ln.astype(jnp.bfloat16)                      # bf16 only at MXU inputs
    q = jnp.dot(h_bf, wq[0], preferred_element_type=jnp.float32) + bq[0]
    k = jnp.dot(h_bf, wk[0], preferred_element_type=jnp.float32) + bk[0]
    v = jnp.dot(h_bf, wv[0], preferred_element_type=jnp.float32) + bv[0]

    # Per-head attention, batched over B with a 3-D einsum; head outputs go
    # straight into attn_sc at their lane offset (no concatenate relayout).
    # (At CLIP-L scale, heads would also be folded into the einsum batch dim.)
    for hd in range(NUM_HEADS):
        lo = hd * HEAD_DIM
        qh = q[:, lo:lo + HEAD_DIM].reshape(B, S, HEAD_DIM)
        kh = k[:, lo:lo + HEAD_DIM].reshape(B, S, HEAD_DIM)
        vh = v[:, lo:lo + HEAD_DIM].reshape(B, S, HEAD_DIM)
        s = jnp.einsum("bqd,bkd->bqk", qh, kh,
                       preferred_element_type=jnp.float32) * scale
        s = jnp.where(causal, s, jnp.float32(-1e9))
        s = s - jnp.max(s, axis=-1, keepdims=True)
        p = jnp.exp(s)
        denom = jnp.sum(p, axis=-1, keepdims=True)
        p = p * pl.reciprocal(denom, approx=True)         # EUP, frees VALU
        oh = jnp.einsum("bqk,bkd->bqd", p, vh,
                        preferred_element_type=jnp.float32)
        attn_sc[:, lo:lo + HEAD_DIM] = oh.reshape(BS, HEAD_DIM)

    attn = jnp.dot(attn_sc[...].astype(jnp.bfloat16), wo[0],
                   preferred_element_type=jnp.float32) + bo[0]
    x = x + attn

    # ---- MLP block (pre-LN, QuickGELU) ----
    h_ln = _layer_norm(x, ln2_w[0], ln2_b[0])
    hmid = jnp.dot(h_ln.astype(jnp.bfloat16), w1[0],
                   preferred_element_type=jnp.float32) + b1[0]
    hmid = hmid * jax.nn.sigmoid(1.702 * hmid)            # QuickGELU (CLIP)
    x = x + jnp.dot(hmid.astype(jnp.bfloat16), w2[0],
                    preferred_element_type=jnp.float32) + b2[0]

    x_sc[...] = x

    @pl.when(l == L - 1)
    def _():
        o_ref[...] = _layer_norm(x, lnf_w[0], lnf_b[0]).astype(o_ref.dtype)


def _per_layer_spec(shape):
    """Block = one layer's slice of a (L, ...) parameter, indexed by grid l."""
    blk = (1,) + tuple(shape[1:])
    nd = len(shape) - 1
    return pl.BlockSpec(blk, lambda l, _nd=nd: (l,) + (0,) * _nd)


def _const_spec(shape):
    """Full-array block with a constant index (fetched once)."""
    nd = len(shape)
    return pl.BlockSpec(tuple(shape), lambda l, _nd=nd: (0,) * _nd)


def clip_text_forward_pallas(x_emb, params):
    """x_emb: (B, S, H) token+pos embeddings. Returns last_hidden_state (B, S, H)."""
    weight_order = [
        "ln1_w", "ln1_b",
        "wq", "bq", "wk", "bk", "wv", "bv", "wo", "bo",
        "ln2_w", "ln2_b",
        "w1", "b1", "w2", "b2",
    ]
    per_layer_args = []
    for kname in weight_order:
        w = params[kname]
        if w.ndim == 2:               # (L, D) vectors -> (L, 1, D) so the block's
            w = w.reshape(w.shape[0], 1, w.shape[1])   # last-2 dims are full dims
        per_layer_args.append(w)
    final_args = [params["lnf_w"].reshape(1, 1, H),
                  params["lnf_b"].reshape(1, 1, H)]

    x2d = x_emb.reshape(BS, H)

    in_specs = [pl.BlockSpec((BS, H), lambda l: (0, 0))]
    in_specs += [_per_layer_spec(w.shape) for w in per_layer_args]
    in_specs += [_const_spec(w.shape) for w in final_args]

    out = pl.pallas_call(
        clip_text_kernel,
        out_shape=jax.ShapeDtypeStruct((BS, H), jnp.float32),
        grid=(L,),
        in_specs=in_specs,
        out_specs=pl.BlockSpec((BS, H), lambda l: (0, 0)),
        scratch_shapes=[
            pltpu.VMEM((BS, H), jnp.float32),   # running activation
            pltpu.VMEM((BS, H), jnp.float32),   # per-head attention outputs
        ],
        compiler_params=pltpu.CompilerParams(
            dimension_semantics=("arbitrary",),   # layer axis carries state
            vmem_limit_bytes=48 * 1024 * 1024,    # headroom for streamed layers
        ),
    )(x2d, *per_layer_args, *final_args)
    return out.reshape(B, S, H)


# ---- plain-JAX reference (same math incl. bf16 matmul weights) ---------------
def clip_text_forward_ref(x_emb, params):
    causal = jnp.tril(jnp.ones((S, S), dtype=bool))
    scale = 1.0 / jnp.sqrt(jnp.float32(HEAD_DIM))

    def dot_bf16(a, w):
        return jnp.dot(a.astype(jnp.bfloat16), w,
                       preferred_element_type=jnp.float32)

    def one_seq(x):
        x = x.astype(jnp.float32)
        for l in range(L):
            h_ln = _layer_norm(x, params["ln1_w"][l], params["ln1_b"][l])
            q = dot_bf16(h_ln, params["wq"][l]) + params["bq"][l]
            k = dot_bf16(h_ln, params["wk"][l]) + params["bk"][l]
            v = dot_bf16(h_ln, params["wv"][l]) + params["bv"][l]
            heads = []
            for hd in range(NUM_HEADS):
                sl = slice(hd * HEAD_DIM, (hd + 1) * HEAD_DIM)
                s = (q[:, sl] @ k[:, sl].T) * scale
                s = jnp.where(causal, s, -1e9)
                p = jax.nn.softmax(s, axis=-1)
                heads.append(p @ v[:, sl])
            attn = dot_bf16(jnp.concatenate(heads, axis=-1),
                            params["wo"][l]) + params["bo"][l]
            x = x + attn
            h_ln = _layer_norm(x, params["ln2_w"][l], params["ln2_b"][l])
            hmid = dot_bf16(h_ln, params["w1"][l]) + params["b1"][l]
            hmid = hmid * jax.nn.sigmoid(1.702 * hmid)
            x = x + dot_bf16(hmid, params["w2"][l]) + params["b2"][l]
        return _layer_norm(x, params["lnf_w"][0], params["lnf_b"][0])

    return jax.vmap(one_seq)(x_emb)


def init_params(key):
    ks = jax.random.split(key, 8)
    std = 0.02

    def w_bf16(k, shape):   # MXU weights in bf16; everything else f32
        return (std * jax.random.normal(k, shape, jnp.float32)).astype(jnp.bfloat16)

    return {
        "tok_emb": std * jax.random.normal(ks[0], (VOCAB, H), jnp.float32),
        "pos_emb": std * jax.random.normal(ks[1], (S, H), jnp.float32),
        "ln1_w": jnp.ones((L, H), jnp.float32),
        "ln1_b": jnp.zeros((L, H), jnp.float32),
        "wq": w_bf16(ks[2], (L, H, H)),
        "bq": jnp.zeros((L, H), jnp.float32),
        "wk": w_bf16(ks[3], (L, H, H)),
        "bk": jnp.zeros((L, H), jnp.float32),
        "wv": w_bf16(ks[4], (L, H, H)),
        "bv": jnp.zeros((L, H), jnp.float32),
        "wo": w_bf16(ks[5], (L, H, H)),
        "bo": jnp.zeros((L, H), jnp.float32),
        "ln2_w": jnp.ones((L, H), jnp.float32),
        "ln2_b": jnp.zeros((L, H), jnp.float32),
        "w1": w_bf16(ks[6], (L, H, FF)),
        "b1": jnp.zeros((L, FF), jnp.float32),
        "w2": w_bf16(ks[7], (L, FF, H)),
        "b2": jnp.zeros((L, H), jnp.float32),
        "lnf_w": jnp.ones((1, H), jnp.float32),
        "lnf_b": jnp.zeros((1, H), jnp.float32),
    }


if __name__ == "__main__":
    key = jax.random.PRNGKey(0)
    kp, kt = jax.random.split(key)
    params = init_params(kp)

    # TODO(synk): the CLIPTokenizer (BPE over text strings) has no Pallas
    # equivalent; deterministic random token ids stand in for `input_ids`.
    tokens = jax.random.randint(kt, (B, S), 0, VOCAB)          # (B, S) int32

    # embedding lookup + positional embedding (glue, plain JAX)
    x_emb = params["tok_emb"][tokens] + params["pos_emb"][None, :, :]  # (B,S,H)

    z = clip_text_forward_pallas(x_emb, params)
    z = jax.block_until_ready(z)

    z_ref = clip_text_forward_ref(x_emb, params)
    assert z.shape == (B, S, H)
    max_err = float(jnp.max(jnp.abs(z - z_ref)))
    assert jnp.allclose(z, z_ref, atol=2e-2, rtol=2e-2), (
        f"mismatch vs reference (max abs err {max_err})")

    print("KERNEL_OK")
</pallas_src>

<mosaic_0001>
module attributes {stable_mosaic.version = 11 : i64} {
  func.func @clip_text_kernel(%arg0: i32, %arg1: memref<32x128xf32, #tpu.memory_space<vmem>>, %arg2: memref<1x1x128xf32, #tpu.memory_space<vmem>>, %arg3: memref<1x1x128xf32, #tpu.memory_space<vmem>>, %arg4: memref<1x128x128xbf16, #tpu.memory_space<vmem>>, %arg5: memref<1x1x128xf32, #tpu.memory_space<vmem>>, %arg6: memref<1x128x128xbf16, #tpu.memory_space<vmem>>, %arg7: memref<1x1x128xf32, #tpu.memory_space<vmem>>, %arg8: memref<1x128x128xbf16, #tpu.memory_space<vmem>>, %arg9: memref<1x1x128xf32, #tpu.memory_space<vmem>>, %arg10: memref<1x128x128xbf16, #tpu.memory_space<vmem>>, %arg11: memref<1x1x128xf32, #tpu.memory_space<vmem>>, %arg12: memref<1x1x128xf32, #tpu.memory_space<vmem>>, %arg13: memref<1x1x128xf32, #tpu.memory_space<vmem>>, %arg14: memref<1x128x512xbf16, #tpu.memory_space<vmem>>, %arg15: memref<1x1x512xf32, #tpu.memory_space<vmem>>, %arg16: memref<1x512x128xbf16, #tpu.memory_space<vmem>>, %arg17: memref<1x1x128xf32, #tpu.memory_space<vmem>>, %arg18: memref<1x1x128xf32, #tpu.memory_space<vmem>>, %arg19: memref<1x1x128xf32, #tpu.memory_space<vmem>>, %arg20: memref<32x128xf32, #tpu.memory_space<vmem>>, %arg21: memref<32x128xf32, #tpu.memory_space<vmem>>, %arg22: memref<32x128xf32, #tpu.memory_space<vmem>>) attributes {dimension_semantics = [#tpu.dimension_semantics<arbitrary>], iteration_bounds = array<i64: 2>, scalar_prefetch = 0 : i64, scratch_operands = 2 : i64, tpu.core_type = #tpu.core_type<tc>, window_params = [{pipeline_mode = #tpu.pipeline_mode<synchronous>, transform_indices = @transform_0, window_bounds = array<i64: 32, 128>}, {transform_indices = @transform_1, window_bounds = array<i64: 1, 1, 128>}, {transform_indices = @transform_2, window_bounds = array<i64: 1, 1, 128>}, {transform_indices = @transform_3, window_bounds = array<i64: 1, 128, 128>}, {transform_indices = @transform_4, window_bounds = array<i64: 1, 1, 128>}, {transform_indices = @transform_5, window_bounds = array<i64: 1, 128, 128>}, {transform_indices = @transform_6, window_bounds = array<i64: 1, 1, 128>}, {transform_indices = @transform_7, window_bounds = array<i64: 1, 128, 128>}, {transform_indices = @transform_8, window_bounds = array<i64: 1, 1, 128>}, {transform_indices = @transform_9, window_bounds = array<i64: 1, 128, 128>}, {transform_indices = @transform_10, window_bounds = array<i64: 1, 1, 128>}, {transform_indices = @transform_11, window_bounds = array<i64: 1, 1, 128>}, {transform_indices = @transform_12, window_bounds = array<i64: 1, 1, 128>}, {transform_indices = @transform_13, window_bounds = array<i64: 1, 128, 512>}, {transform_indices = @transform_14, window_bounds = array<i64: 1, 1, 512>}, {transform_indices = @transform_15, window_bounds = array<i64: 1, 512, 128>}, {transform_indices = @transform_16, window_bounds = array<i64: 1, 1, 128>}, {pipeline_mode = #tpu.pipeline_mode<synchronous>, transform_indices = @transform_17, window_bounds = array<i64: 1, 1, 128>}, {pipeline_mode = #tpu.pipeline_mode<synchronous>, transform_indices = @transform_18, window_bounds = array<i64: 1, 1, 128>}, {pipeline_mode = #tpu.pipeline_mode<synchronous>, transform_indices = @transform_19, window_bounds = array<i64: 32, 128>}]} {
    %c0_i32 = arith.constant 0 : i32
    %0 = arith.cmpi eq, %arg0, %c0_i32 : i32
    %1 = arith.extui %0 : i1 to i32
    %c0_i32_0 = arith.constant 0 : i32
    %2 = arith.cmpi ne, %1, %c0_i32_0 : i32
    scf.if %2 {
      %c0_87 = arith.constant 0 : index
      %c0_88 = arith.constant 0 : index
      %168 = vector.load %arg1[%c0_87, %c0_88] : memref<32x128xf32, #tpu.memory_space<vmem>>, vector<32x128xf32>
      %c0_89 = arith.constant 0 : index
      %c0_90 = arith.constant 0 : index
      %169 = vector.load %arg21[%c0_89, %c0_90] : memref<32x128xf32, #tpu.memory_space<vmem>>, vector<32x128xf32>
      tpu.vector_store %arg21[%c0_89, %c0_90], %168 {strides = array<i32>} : memref<32x128xf32, #tpu.memory_space<vmem>>, vector<32x128xf32>,
    } else {
    }
    %c0 = arith.constant 0 : index
    %c0_1 = arith.constant 0 : index
    %3 = vector.load %arg21[%c0, %c0_1] : memref<32x128xf32, #tpu.memory_space<vmem>>, vector<32x128xf32>
    %4 = tpu.iota {dimensions = array<i32: 1>} : vector<2x16x16xi32>
    %5 = tpu.iota {dimensions = array<i32: 2>} : vector<2x16x16xi32>
    %6 = arith.cmpi sle, %5, %4 : vector<2x16x16xi32>
    %c0_2 = arith.constant 0 : index
    %c0_3 = arith.constant 0 : index
    %c0_4 = arith.constant 0 : index
    %7 = vector.load %arg2[%c0_2, %c0_3, %c0_4] : memref<1x1x128xf32, #tpu.memory_space<vmem>>, vector<1x1x128xf32>
    %8 = vector.shape_cast %7 : vector<1x1x128xf32> to vector<1x128xf32>
    %c0_5 = arith.constant 0 : index
    %c0_6 = arith.constant 0 : index
    %c0_7 = arith.constant 0 : index
    %9 = vector.load %arg3[%c0_5, %c0_6, %c0_7] : memref<1x1x128xf32, #tpu.memory_space<vmem>>, vector<1x1x128xf32>
    %10 = vector.shape_cast %9 : vector<1x1x128xf32> to vector<1x128xf32>
    %cst = arith.constant dense<0.000000e+00> : vector<32xf32>
    %11 = vector.multi_reduction <add>, %3, %cst [1] : vector<32x128xf32> to vector<32xf32>
    %12 = vector.shape_cast %11 : vector<32xf32> to vector<32x1xf32>
    %cst_8 = arith.constant 1.280000e+02 : f32
    %13 = vector.broadcast %cst_8 : f32 to vector<32x1xf32>
    %14 = arith.divf %12, %13 : vector<32x1xf32>
    %15 = vector.broadcast %14 : vector<32x1xf32> to vector<32x128xf32>
    %16 = arith.subf %3, %15 : vector<32x128xf32>
    %17 = arith.mulf %16, %16 : vector<32x128xf32>
    %cst_9 = arith.constant dense<0.000000e+00> : vector<32xf32>
    %18 = vector.multi_reduction <add>, %17, %cst_9 [1] : vector<32x128xf32> to vector<32xf32>
    %19 = vector.shape_cast %18 : vector<32xf32> to vector<32x1xf32>
    %cst_10 = arith.constant 1.280000e+02 : f32
    %20 = vector.broadcast %cst_10 : f32 to vector<32x1xf32>
    %21 = arith.divf %19, %20 : vector<32x1xf32>
    %22 = vector.broadcast %14 : vector<32x1xf32> to vector<32x128xf32>
    %23 = arith.subf %3, %22 : vector<32x128xf32>
    %cst_11 = arith.constant 9.99999974E-6 : f32
    %24 = vector.broadcast %cst_11 : f32 to vector<32x1xf32>
    %25 = arith.addf %21, %24 : vector<32x1xf32>
    %26 = math.rsqrt %25 : vector<32x1xf32>
    %27 = vector.broadcast %26 : vector<32x1xf32> to vector<32x128xf32>
    %28 = arith.mulf %23, %27 : vector<32x128xf32>
    %29 = vector.broadcast %8 : vector<1x128xf32> to vector<32x128xf32>
    %30 = arith.mulf %28, %29 : vector<32x128xf32>
    %31 = vector.broadcast %10 : vector<1x128xf32> to vector<32x128xf32>
    %32 = arith.addf %30, %31 : vector<32x128xf32>
    %33 = arith.truncf %32 : vector<32x128xf32> to vector<32x128xbf16>
    %c0_12 = arith.constant 0 : index
    %c0_13 = arith.constant 0 : index
    %c0_14 = arith.constant 0 : index
    %34 = vector.load %arg4[%c0_12, %c0_13, %c0_14] : memref<1x128x128xbf16, #tpu.memory_space<vmem>>, vector<1x128x128xbf16>
    %35 = vector.shape_cast %34 : vector<1x128x128xbf16> to vector<128x128xbf16>
    %cst_15 = arith.constant dense<0.000000e+00> : vector<32x128xf32>
    %36 = tpu.matmul %33, %35, %cst_15 {dimension_numbers = #tpu.dot_dimension_numbers<[1], [0], [0], [1], [0, 0, 1, 1], [], []>} : vector<32x128xbf16>, vector<128x128xbf16>, vector<32x128xf32> -> vector<32x128xf32>
    %c0_16 = arith.constant 0 : index
    %c0_17 = arith.constant 0 : index
    %c0_18 = arith.constant 0 : index
    %37 = vector.load %arg5[%c0_16, %c0_17, %c0_18] : memref<1x1x128xf32, #tpu.memory_space<vmem>>, vector<1x1x128xf32>
    %38 = vector.shape_cast %37 : vector<1x1x128xf32> to vector<1x128xf32>
    %39 = vector.broadcast %38 : vector<1x128xf32> to vector<32x128xf32>
    %40 = arith.addf %36, %39 : vector<32x128xf32>
    %c0_19 = arith.constant 0 : index
    %c0_20 = arith.constant 0 : index
    %c0_21 = arith.constant 0 : index
    %41 = vector.load %arg6[%c0_19, %c0_20, %c0_21] : memref<1x128x128xbf16, #tpu.memory_space<vmem>>, vector<1x128x128xbf16>
    %42 = vector.shape_cast %41 : vector<1x128x128xbf16> to vector<128x128xbf16>
    %cst_22 = arith.constant dense<0.000000e+00> : vector<32x128xf32>
    %43 = tpu.matmul %33, %42, %cst_22 {dimension_numbers = #tpu.dot_dimension_numbers<[1], [0], [0], [1], [0, 0, 1, 1], [], []>} : vector<32x128xbf16>, vector<128x128xbf16>, vector<32x128xf32> -> vector<32x128xf32>
    %c0_23 = arith.constant 0 : index
    %c0_24 = arith.constant 0 : index
    %c0_25 = arith.constant 0 : index
    %44 = vector.load %arg7[%c0_23, %c0_24, %c0_25] : memref<1x1x128xf32, #tpu.memory_space<vmem>>, vector<1x1x128xf32>
    %45 = vector.shape_cast %44 : vector<1x1x128xf32> to vector<1x128xf32>
    %46 = vector.broadcast %45 : vector<1x128xf32> to vector<32x128xf32>
    %47 = arith.addf %43, %46 : vector<32x128xf32>
    %c0_26 = arith.constant 0 : index
    %c0_27 = arith.constant 0 : index
    %c0_28 = arith.constant 0 : index
    %48 = vector.load %arg8[%c0_26, %c0_27, %c0_28] : memref<1x128x128xbf16, #tpu.memory_space<vmem>>, vector<1x128x128xbf16>
    %49 = vector.shape_cast %48 : vector<1x128x128xbf16> to vector<128x128xbf16>
    %cst_29 = arith.constant dense<0.000000e+00> : vector<32x128xf32>
    %50 = tpu.matmul %33, %49, %cst_29 {dimension_numbers = #tpu.dot_dimension_numbers<[1], [0], [0], [1], [0, 0, 1, 1], [], []>} : vector<32x128xbf16>, vector<128x128xbf16>, vector<32x128xf32> -> vector<32x128xf32>
    %c0_30 = arith.constant 0 : index
    %c0_31 = arith.constant 0 : index
    %c0_32 = arith.constant 0 : index
    %51 = vector.load %arg9[%c0_30, %c0_31, %c0_32] : memref<1x1x128xf32, #tpu.memory_space<vmem>>, vector<1x1x128xf32>
    %52 = vector.shape_cast %51 : vector<1x1x128xf32> to vector<1x128xf32>
    %53 = vector.broadcast %52 : vector<1x128xf32> to vector<32x128xf32>
    %54 = arith.addf %50, %53 : vector<32x128xf32>
    %55 = vector.extract_strided_slice %40 {offsets = [0, 0], sizes = [32, 64], strides = [1, 1]} : vector<32x128xf32> to vector<32x64xf32>
    %56 = vector.shape_cast %55 : vector<32x64xf32> to vector<2x16x64xf32>
    %57 = vector.extract_strided_slice %47 {offsets = [0, 0], sizes = [32, 64], strides = [1, 1]} : vector<32x128xf32> to vector<32x64xf32>
    %58 = vector.shape_cast %57 : vector<32x64xf32> to vector<2x16x64xf32>
    %59 = vector.extract_strided_slice %54 {offsets = [0, 0], sizes = [32, 64], strides = [1, 1]} : vector<32x128xf32> to vector<32x64xf32>
    %60 = vector.shape_cast %59 : vector<32x64xf32> to vector<2x16x64xf32>
    "tpu.trace_start"() <{level = 10 : i32, message = "bqd,bkd->bqk"}> : () -> ()
    %cst_33 = arith.constant dense<0.000000e+00> : vector<2x16x16xf32>
    %61 = tpu.matmul %56, %58, %cst_33 {dimension_numbers = #tpu.dot_dimension_numbers<[2], [2], [1], [1], [0, 0, 0, 1, 1, 1], [0], [0]>} : vector<2x16x64xf32>, vector<2x16x64xf32>, vector<2x16x16xf32> -> vector<2x16x16xf32>
    "tpu.trace_stop"() : () -> ()
    %cst_34 = arith.constant 1.250000e-01 : f32
    %62 = vector.broadcast %cst_34 : f32 to vector<2x16x16xf32>
    %63 = arith.mulf %61, %62 : vector<2x16x16xf32>
    %cst_35 = arith.constant -1.000000e+09 : f32
    %64 = vector.broadcast %cst_35 : f32 to vector<2x16x16xf32>
    %65 = arith.select %6, %63, %64 : vector<2x16x16xi1>, vector<2x16x16xf32>
    %cst_36 = arith.constant dense<0xFF800000> : vector<2x16xf32>
    %66 = vector.multi_reduction <maximumf>, %65, %cst_36 [2] : vector<2x16x16xf32> to vector<2x16xf32>
    %67 = vector.shape_cast %66 : vector<2x16xf32> to vector<2x16x1xf32>
    %68 = vector.broadcast %67 : vector<2x16x1xf32> to vector<2x16x16xf32>
    %69 = arith.subf %65, %68 : vector<2x16x16xf32>
    %70 = math.exp %69 : vector<2x16x16xf32>
    %cst_37 = arith.constant dense<0.000000e+00> : vector<2x16xf32>
    %71 = vector.multi_reduction <add>, %70, %cst_37 [2] : vector<2x16x16xf32> to vector<2x16xf32>
    %72 = vector.shape_cast %71 : vector<2x16xf32> to vector<2x16x1xf32>
    %73 = tpu.reciprocal %72 {approx = true} : vector<2x16x1xf32> -> vector<2x16x1xf32>
    %74 = vector.broadcast %73 : vector<2x16x1xf32> to vector<2x16x16xf32>
    %75 = arith.mulf %70, %74 : vector<2x16x16xf32>
    "tpu.trace_start"() <{level = 10 : i32, message = "bqk,bkd->bqd"}> : () -> ()
    %cst_38 = arith.constant dense<0.000000e+00> : vector<2x16x64xf32>
    %76 = tpu.matmul %75, %60, %cst_38 {dimension_numbers = #tpu.dot_dimension_numbers<[2], [1], [1], [2], [0, 0, 0, 1, 1, 2], [0], [0]>} : vector<2x16x16xf32>, vector<2x16x64xf32>, vector<2x16x64xf32> -> vector<2x16x64xf32>
    "tpu.trace_stop"() : () -> ()
    %77 = vector.shape_cast %76 : vector<2x16x64xf32> to vector<32x64xf32>
    %c0_39 = arith.constant 0 : index
    %c0_40 = arith.constant 0 : index
    %78 = vector.load %arg22[%c0_39, %c0_40] : memref<32x128xf32, #tpu.memory_space<vmem>>, vector<32x64xf32>
    tpu.vector_store %arg22[%c0_39, %c0_40], %77 {strides = array<i32>} : memref<32x128xf32, #tpu.memory_space<vmem>>, vector<32x64xf32>,
    %79 = vector.extract_strided_slice %40 {offsets = [0, 64], sizes = [32, 64], strides = [1, 1]} : vector<32x128xf32> to vector<32x64xf32>
    %80 = vector.shape_cast %79 : vector<32x64xf32> to vector<2x16x64xf32>
    %81 = vector.extract_strided_slice %47 {offsets = [0, 64], sizes = [32, 64], strides = [1, 1]} : vector<32x128xf32> to vector<32x64xf32>
    %82 = vector.shape_cast %81 : vector<32x64xf32> to vector<2x16x64xf32>
    %83 = vector.extract_strided_slice %54 {offsets = [0, 64], sizes = [32, 64], strides = [1, 1]} : vector<32x128xf32> to vector<32x64xf32>
    %84 = vector.shape_cast %83 : vector<32x64xf32> to vector<2x16x64xf32>
    "tpu.trace_start"() <{level = 10 : i32, message = "bqd,bkd->bqk"}> : () -> ()
    %cst_41 = arith.constant dense<0.000000e+00> : vector<2x16x16xf32>
    %85 = tpu.matmul %80, %82, %cst_41 {dimension_numbers = #tpu.dot_dimension_numbers<[2], [2], [1], [1], [0, 0, 0, 1, 1, 1], [0], [0]>} : vector<2x16x64xf32>, vector<2x16x64xf32>, vector<2x16x16xf32> -> vector<2x16x16xf32>
    "tpu.trace_stop"() : () -> ()
    %cst_42 = arith.constant 1.250000e-01 : f32
    %86 = vector.broadcast %cst_42 : f32 to vector<2x16x16xf32>
    %87 = arith.mulf %85, %86 : vector<2x16x16xf32>
    %cst_43 = arith.constant -1.000000e+09 : f32
    %88 = vector.broadcast %cst_43 : f32 to vector<2x16x16xf32>
    %89 = arith.select %6, %87, %88 : vector<2x16x16xi1>, vector<2x16x16xf32>
    %cst_44 = arith.constant dense<0xFF800000> : vector<2x16xf32>
    %90 = vector.multi_reduction <maximumf>, %89, %cst_44 [2] : vector<2x16x16xf32> to vector<2x16xf32>
    %91 = vector.shape_cast %90 : vector<2x16xf32> to vector<2x16x1xf32>
    %92 = vector.broadcast %91 : vector<2x16x1xf32> to vector<2x16x16xf32>
    %93 = arith.subf %89, %92 : vector<2x16x16xf32>
    %94 = math.exp %93 : vector<2x16x16xf32>
    %cst_45 = arith.constant dense<0.000000e+00> : vector<2x16xf32>
    %95 = vector.multi_reduction <add>, %94, %cst_45 [2] : vector<2x16x16xf32> to vector<2x16xf32>
    %96 = vector.shape_cast %95 : vector<2x16xf32> to vector<2x16x1xf32>
    %97 = tpu.reciprocal %96 {approx = true} : vector<2x16x1xf32> -> vector<2x16x1xf32>
    %98 = vector.broadcast %97 : vector<2x16x1xf32> to vector<2x16x16xf32>
    %99 = arith.mulf %94, %98 : vector<2x16x16xf32>
    "tpu.trace_start"() <{level = 10 : i32, message = "bqk,bkd->bqd"}> : () -> ()
    %cst_46 = arith.constant dense<0.000000e+00> : vector<2x16x64xf32>
    %100 = tpu.matmul %99, %84, %cst_46 {dimension_numbers = #tpu.dot_dimension_numbers<[2], [1], [1], [2], [0, 0, 0, 1, 1, 2], [0], [0]>} : vector<2x16x16xf32>, vector<2x16x64xf32>, vector<2x16x64xf32> -> vector<2x16x64xf32>
    "tpu.trace_stop"() : () -> ()
    %101 = vector.shape_cast %100 : vector<2x16x64xf32> to vector<32x64xf32>
    %c0_47 = arith.constant 0 : index
    %c64 = arith.constant 64 : index
    %102 = vector.load %arg22[%c0_47, %c64] : memref<32x128xf32, #tpu.memory_space<vmem>>, vector<32x64xf32>
    tpu.vector_store %arg22[%c0_47, %c64], %101 {strides = array<i32>} : memref<32x128xf32, #tpu.memory_space<vmem>>, vector<32x64xf32>,
    %c0_48 = arith.constant 0 : index
    %c0_49 = arith.constant 0 : index
    %103 = vector.load %arg22[%c0_48, %c0_49] : memref<32x128xf32, #tpu.memory_space<vmem>>, vector<32x128xf32>
    %104 = arith.truncf %103 : vector<32x128xf32> to vector<32x128xbf16>
    %c0_50 = arith.constant 0 : index
    %c0_51 = arith.constant 0 : index
    %c0_52 = arith.constant 0 : index
    %105 = vector.load %arg10[%c0_50, %c0_51, %c0_52] : memref<1x128x128xbf16, #tpu.memory_space<vmem>>, vector<1x128x128xbf16>
    %106 = vector.shape_cast %105 : vector<1x128x128xbf16> to vector<128x128xbf16>
    %cst_53 = arith.constant dense<0.000000e+00> : vector<32x128xf32>
    %107 = tpu.matmul %104, %106, %cst_53 {dimension_numbers = #tpu.dot_dimension_numbers<[1], [0], [0], [1], [0, 0, 1, 1], [], []>} : vector<32x128xbf16>, vector<128x128xbf16>, vector<32x128xf32> -> vector<32x128xf32>
    %c0_54 = arith.constant 0 : index
    %c0_55 = arith.constant 0 : index
    %c0_56 = arith.constant 0 : index
    %108 = vector.load %arg11[%c0_54, %c0_55, %c0_56] : memref<1x1x128xf32, #tpu.memory_space<vmem>>, vector<1x1x128xf32>
    %109 = vector.shape_cast %108 : vector<1x1x128xf32> to vector<1x128xf32>
    %110 = vector.broadcast %109 : vector<1x128xf32> to vector<32x128xf32>
    %111 = arith.addf %107, %110 : vector<32x128xf32>
    %112 = arith.addf %3, %111 : vector<32x128xf32>
    %c0_57 = arith.constant 0 : index
    %c0_58 = arith.constant 0 : index
    %c0_59 = arith.constant 0 : index
    %113 = vector.load %arg12[%c0_57, %c0_58, %c0_59] : memref<1x1x128xf32, #tpu.memory_space<vmem>>, vector<1x1x128xf32>
    %114 = vector.shape_cast %113 : vector<1x1x128xf32> to vector<1x128xf32>
    %c0_60 = arith.constant 0 : index
    %c0_61 = arith.constant 0 : index
    %c0_62 = arith.constant 0 : index
    %115 = vector.load %arg13[%c0_60, %c0_61, %c0_62] : memref<1x1x128xf32, #tpu.memory_space<vmem>>, vector<1x1x128xf32>
    %116 = vector.shape_cast %115 : vector<1x1x128xf32> to vector<1x128xf32>
    %cst_63 = arith.constant dense<0.000000e+00> : vector<32xf32>
    %117 = vector.multi_reduction <add>, %112, %cst_63 [1] : vector<32x128xf32> to vector<32xf32>
    %118 = vector.shape_cast %117 : vector<32xf32> to vector<32x1xf32>
    %cst_64 = arith.constant 1.280000e+02 : f32
    %119 = vector.broadcast %cst_64 : f32 to vector<32x1xf32>
    %120 = arith.divf %118, %119 : vector<32x1xf32>
    %121 = vector.broadcast %120 : vector<32x1xf32> to vector<32x128xf32>
    %122 = arith.subf %112, %121 : vector<32x128xf32>
    %123 = arith.mulf %122, %122 : vector<32x128xf32>
    %cst_65 = arith.constant dense<0.000000e+00> : vector<32xf32>
    %124 = vector.multi_reduction <add>, %123, %cst_65 [1] : vector<32x128xf32> to vector<32xf32>
    %125 = vector.shape_cast %124 : vector<32xf32> to vector<32x1xf32>
    %cst_66 = arith.constant 1.280000e+02 : f32
    %126 = vector.broadcast %cst_66 : f32 to vector<32x1xf32>
    %127 = arith.divf %125, %126 : vector<32x1xf32>
    %128 = vector.broadcast %120 : vector<32x1xf32> to vector<32x128xf32>
    %129 = arith.subf %112, %128 : vector<32x128xf32>
    %cst_67 = arith.constant 9.99999974E-6 : f32
    %130 = vector.broadcast %cst_67 : f32 to vector<32x1xf32>
    %131 = arith.addf %127, %130 : vector<32x1xf32>
    %132 = math.rsqrt %131 : vector<32x1xf32>
    %133 = vector.broadcast %132 : vector<32x1xf32> to vector<32x128xf32>
    %134 = arith.mulf %129, %133 : vector<32x128xf32>
    %135 = vector.broadcast %114 : vector<1x128xf32> to vector<32x128xf32>
    %136 = arith.mulf %134, %135 : vector<32x128xf32>
    %137 = vector.broadcast %116 : vector<1x128xf32> to vector<32x128xf32>
    %138 = arith.addf %136, %137 : vector<32x128xf32>
    %139 = arith.truncf %138 : vector<32x128xf32> to vector<32x128xbf16>
    %c0_68 = arith.constant 0 : index
    %c0_69 = arith.constant 0 : index
    %c0_70 = arith.constant 0 : index
    %140 = vector.load %arg14[%c0_68, %c0_69, %c0_70] : memref<1x128x512xbf16, #tpu.memory_space<vmem>>, vector<1x128x512xbf16>
    %141 = vector.shape_cast %140 : vector<1x128x512xbf16> to vector<128x512xbf16>
    %cst_71 = arith.constant dense<0.000000e+00> : vector<32x512xf32>
    %142 = tpu.matmul %139, %141, %cst_71 {dimension_numbers = #tpu.dot_dimension_numbers<[1], [0], [0], [1], [0, 0, 1, 1], [], []>} : vector<32x128xbf16>, vector<128x512xbf16>, vector<32x512xf32> -> vector<32x512xf32>
    %c0_72 = arith.constant 0 : index
    %c0_73 = arith.constant 0 : index
    %c0_74 = arith.constant 0 : index
    %143 = vector.load %arg15[%c0_72, %c0_73, %c0_74] : memref<1x1x512xf32, #tpu.memory_space<vmem>>, vector<1x1x512xf32>
    %144 = vector.shape_cast %143 : vector<1x1x512xf32> to vector<1x512xf32>
    %145 = vector.broadcast %144 : vector<1x512xf32> to vector<32x512xf32>
    %146 = arith.addf %142, %145 : vector<32x512xf32>
    %cst_75 = arith.constant 1.702000e+00 : f32
    %147 = vector.broadcast %cst_75 : f32 to vector<32x512xf32>
    %148 = arith.mulf %147, %146 : vector<32x512xf32>
    %149 = arith.negf %148 : vector<32x512xf32>
    %150 = math.exp %149 : vector<32x512xf32>
    %cst_76 = arith.constant 1.000000e+00 : f32
    %151 = vector.broadcast %cst_76 : f32 to vector<32x512xf32>
    %152 = arith.addf %151, %150 : vector<32x512xf32>
    %153 = arith.divf %151, %152 : vector<32x512xf32>
    %154 = arith.mulf %146, %153 : vector<32x512xf32>
    %155 = arith.truncf %154 : vector<32x512xf32> to vector<32x512xbf16>
    %c0_77 = arith.constant 0 : index
    %c0_78 = arith.constant 0 : index
    %c0_79 = arith.constant 0 : index
    %156 = vector.load %arg16[%c0_77, %c0_78, %c0_79] : memref<1x512x128xbf16, #tpu.memory_space<vmem>>, vector<1x512x128xbf16>
    %157 = vector.shape_cast %156 : vector<1x512x128xbf16> to vector<512x128xbf16>
    %cst_80 = arith.constant dense<0.000000e+00> : vector<32x128xf32>
    %158 = tpu.matmul %155, %157, %cst_80 {dimension_numbers = #tpu.dot_dimension_numbers<[1], [0], [0], [1], [0, 0, 1, 1], [], []>} : vector<32x512xbf16>, vector<512x128xbf16>, vector<32x128xf32> -> vector<32x128xf32>
    %159 = arith.addf %112, %158 : vector<32x128xf32>
    %c0_81 = arith.constant 0 : index
    %c0_82 = arith.constant 0 : index
    %c0_83 = arith.constant 0 : index
    %160 = vector.load %arg17[%c0_81, %c0_82, %c0_83] : memref<1x1x128xf32, #tpu.memory_space<vmem>>, vector<1x1x128xf32>
    %161 = vector.shape_cast %160 : vector<1x1x128xf32> to vector<1x128xf32>
    %162 = vector.broadcast %161 : vector<1x128xf32> to vector<32x128xf32>
    %163 = arith.addf %159, %162 : vector<32x128xf32>
    %c0_84 = arith.constant 0 : index
    %c0_85 = arith.constant 0 : index
    %164 = vector.load %arg21[%c0_84, %c0_85] : memref<32x128xf32, #tpu.memory_space<vmem>>, vector<32x128xf32>
    tpu.vector_store %arg21[%c0_84, %c0_85], %163 {strides = array<i32>} : memref<32x128xf32, #tpu.memory_space<vmem>>, vector<32x128xf32>,
    %c1_i32 = arith.constant 1 : i32
    %165 = arith.cmpi eq, %arg0, %c1_i32 : i32
    %166 = arith.extui %165 : i1 to i32
    %c0_i32_86 = arith.constant 0 : i32
    %167 = arith.cmpi ne, %166, %c0_i32_86 : i32
    scf.if %167 {
      %c0_87 = arith.constant 0 : index
      %c0_88 = arith.constant 0 : index
      %c0_89 = arith.constant 0 : index
      %168 = vector.load %arg18[%c0_87, %c0_88, %c0_89] : memref<1x1x128xf32, #tpu.memory_space<vmem>>, vector<1x1x128xf32>
      %169 = vector.shape_cast %168 : vector<1x1x128xf32> to vector<1x128xf32>
      %c0_90 = arith.constant 0 : index
      %c0_91 = arith.constant 0 : index
      %c0_92 = arith.constant 0 : index
      %170 = vector.load %arg19[%c0_90, %c0_91, %c0_92] : memref<1x1x128xf32, #tpu.memory_space<vmem>>, vector<1x1x128xf32>
      %171 = vector.shape_cast %170 : vector<1x1x128xf32> to vector<1x128xf32>
      %cst_93 = arith.constant dense<0.000000e+00> : vector<32xf32>
      %172 = vector.multi_reduction <add>, %163, %cst_93 [1] : vector<32x128xf32> to vector<32xf32>
      %173 = vector.shape_cast %172 : vector<32xf32> to vector<32x1xf32>
      %cst_94 = arith.constant 1.280000e+02 : f32
      %174 = vector.broadcast %cst_94 : f32 to vector<32x1xf32>
      %175 = arith.divf %173, %174 : vector<32x1xf32>
      %176 = vector.broadcast %175 : vector<32x1xf32> to vector<32x128xf32>
      %177 = arith.subf %163, %176 : vector<32x128xf32>
      %178 = arith.mulf %177, %177 : vector<32x128xf32>
      %cst_95 = arith.constant dense<0.000000e+00> : vector<32xf32>
      %179 = vector.multi_reduction <add>, %178, %cst_95 [1] : vector<32x128xf32> to vector<32xf32>
      %180 = vector.shape_cast %179 : vector<32xf32> to vector<32x1xf32>
      %cst_96 = arith.constant 1.280000e+02 : f32
      %181 = vector.broadcast %cst_96 : f32 to vector<32x1xf32>
      %182 = arith.divf %180, %181 : vector<32x1xf32>
      %183 = vector.broadcast %175 : vector<32x1xf32> to vector<32x128xf32>
      %184 = arith.subf %163, %183 : vector<32x128xf32>
      %cst_97 = arith.constant 9.99999974E-6 : f32
      %185 = vector.broadcast %cst_97 : f32 to vector<32x1xf32>
      %186 = arith.addf %182, %185 : vector<32x1xf32>
      %187 = math.rsqrt %186 : vector<32x1xf32>
      %188 = vector.broadcast %187 : vector<32x1xf32> to vector<32x128xf32>
      %189 = arith.mulf %184, %188 : vector<32x128xf32>
      %190 = vector.broadcast %169 : vector<1x128xf32> to vector<32x128xf32>
      %191 = arith.mulf %189, %190 : vector<32x128xf32>
      %192 = vector.broadcast %171 : vector<1x128xf32> to vector<32x128xf32>
      %193 = arith.addf %191, %192 : vector<32x128xf32>
      %c0_98 = arith.constant 0 : index
      %c0_99 = arith.constant 0 : index
      %194 = vector.load %arg20[%c0_98, %c0_99] : memref<32x128xf32, #tpu.memory_space<vmem>>, vector<32x128xf32>
      tpu.vector_store %arg20[%c0_98, %c0_99], %193 {strides = array<i32>} : memref<32x128xf32, #tpu.memory_space<vmem>>, vector<32x128xf32>,
    } else {
    }
    return
  }
  func.func @transform_0(%arg0: i32) -> (i32, i32) {
    %c0_i32 = arith.constant 0 : i32
    %c0_i32_0 = arith.constant 0 : i32
    %c0_i32_1 = arith.constant 0 : i32
    return %c0_i32, %c0_i32_0 : i32, i32
  }
  func.func @transform_1(%arg0: i32) -> (i32, i32, i32) {
    %c0_i32 = arith.constant 0 : i32
    %c0_i32_0 = arith.constant 0 : i32
    %c0_i32_1 = arith.constant 0 : i32
    return %arg0, %c0_i32, %c0_i32_0 : i32, i32, i32
  }
  func.func @transform_2(%arg0: i32) -> (i32, i32, i32) {
    %c0_i32 = arith.constant 0 : i32
    %c0_i32_0 = arith.constant 0 : i32
    %c0_i32_1 = arith.constant 0 : i32
    return %arg0, %c0_i32, %c0_i32_0 : i32, i32, i32
  }
  func.func @transform_3(%arg0: i32) -> (i32, i32, i32) {
    %c0_i32 = arith.constant 0 : i32
    %c0_i32_0 = arith.constant 0 : i32
    %c0_i32_1 = arith.constant 0 : i32
    return %arg0, %c0_i32, %c0_i32_0 : i32, i32, i32
  }
  func.func @transform_4(%arg0: i32) -> (i32, i32, i32) {
    %c0_i32 = arith.constant 0 : i32
    %c0_i32_0 = arith.constant 0 : i32
    %c0_i32_1 = arith.constant 0 : i32
    return %arg0, %c0_i32, %c0_i32_0 : i32, i32, i32
  }
  func.func @transform_5(%arg0: i32) -> (i32, i32, i32) {
    %c0_i32 = arith.constant 0 : i32
    %c0_i32_0 = arith.constant 0 : i32
    %c0_i32_1 = arith.constant 0 : i32
    return %arg0, %c0_i32, %c0_i32_0 : i32, i32, i32
  }
  func.func @transform_6(%arg0: i32) -> (i32, i32, i32) {
    %c0_i32 = arith.constant 0 : i32
    %c0_i32_0 = arith.constant 0 : i32
    %c0_i32_1 = arith.constant 0 : i32
    return %arg0, %c0_i32, %c0_i32_0 : i32, i32, i32
  }
  func.func @transform_7(%arg0: i32) -> (i32, i32, i32) {
    %c0_i32 = arith.constant 0 : i32
    %c0_i32_0 = arith.constant 0 : i32
    %c0_i32_1 = arith.constant 0 : i32
    return %arg0, %c0_i32, %c0_i32_0 : i32, i32, i32
  }
  func.func @transform_8(%arg0: i32) -> (i32, i32, i32) {
    %c0_i32 = arith.constant 0 : i32
    %c0_i32_0 = arith.constant 0 : i32
    %c0_i32_1 = arith.constant 0 : i32
    return %arg0, %c0_i32, %c0_i32_0 : i32, i32, i32
  }
  func.func @transform_9(%arg0: i32) -> (i32, i32, i32) {
    %c0_i32 = arith.constant 0 : i32
    %c0_i32_0 = arith.constant 0 : i32
    %c0_i32_1 = arith.constant 0 : i32
    return %arg0, %c0_i32, %c0_i32_0 : i32, i32, i32
  }
  func.func @transform_10(%arg0: i32) -> (i32, i32, i32) {
    %c0_i32 = arith.constant 0 : i32
    %c0_i32_0 = arith.constant 0 : i32
    %c0_i32_1 = arith.constant 0 : i32
    return %arg0, %c0_i32, %c0_i32_0 : i32, i32, i32
  }
  func.func @transform_11(%arg0: i32) -> (i32, i32, i32) {
    %c0_i32 = arith.constant 0 : i32
    %c0_i32_0 = arith.constant 0 : i32
    %c0_i32_1 = arith.constant 0 : i32
    return %arg0, %c0_i32, %c0_i32_0 : i32, i32, i32
  }
  func.func @transform_12(%arg0: i32) -> (i32, i32, i32) {
    %c0_i32 = arith.constant 0 : i32
    %c0_i32_0 = arith.constant 0 : i32
    %c0_i32_1 = arith.constant 0 : i32
    return %arg0, %c0_i32, %c0_i32_0 : i32, i32, i32
  }
  func.func @transform_13(%arg0: i32) -> (i32, i32, i32) {
    %c0_i32 = arith.constant 0 : i32
    %c0_i32_0 = arith.constant 0 : i32
    %c0_i32_1 = arith.constant 0 : i32
    return %arg0, %c0_i32, %c0_i32_0 : i32, i32, i32
  }
  func.func @transform_14(%arg0: i32) -> (i32, i32, i32) {
    %c0_i32 = arith.constant 0 : i32
    %c0_i32_0 = arith.constant 0 : i32
    %c0_i32_1 = arith.constant 0 : i32
    return %arg0, %c0_i32, %c0_i32_0 : i32, i32, i32
  }
  func.func @transform_15(%arg0: i32) -> (i32, i32, i32) {
    %c0_i32 = arith.constant 0 : i32
    %c0_i32_0 = arith.constant 0 : i32
    %c0_i32_1 = arith.constant 0 : i32
    return %arg0, %c0_i32, %c0_i32_0 : i32, i32, i32
  }
  func.func @transform_16(%arg0: i32) -> (i32, i32, i32) {
    %c0_i32 = arith.constant 0 : i32
    %c0_i32_0 = arith.constant 0 : i32
    %c0_i32_1 = arith.constant 0 : i32
    return %arg0, %c0_i32, %c0_i32_0 : i32, i32, i32
  }
  func.func @transform_17(%arg0: i32) -> (i32, i32, i32) {
    %c0_i32 = arith.constant 0 : i32
    %c0_i32_0 = arith.constant 0 : i32
    %c0_i32_1 = arith.constant 0 : i32
    %c0_i32_2 = arith.constant 0 : i32
    return %c0_i32, %c0_i32_0, %c0_i32_1 : i32, i32, i32
  }
  func.func @transform_18(%arg0: i32) -> (i32, i32, i32) {
    %c0_i32 = arith.constant 0 : i32
    %c0_i32_0 = arith.constant 0 : i32
    %c0_i32_1 = arith.constant 0 : i32
    %c0_i32_2 = arith.constant 0 : i32
    return %c0_i32, %c0_i32_0, %c0_i32_1 : i32, i32, i32
  }
  func.func @transform_19(%arg0: i32) -> (i32, i32) {
    %c0_i32 = arith.constant 0 : i32
    %c0_i32_0 = arith.constant 0 : i32
    %c0_i32_1 = arith.constant 0 : i32
    return %c0_i32, %c0_i32_0 : i32, i32
  }
}

</mosaic_0001>

<llo_original>
// kernel: tpu_custom_call.1
$region0: #{tpu_custom_call.1}
  #allocation0 [shape = 'u32[]', space=smem, size = 0x4, offset = 0x4, fixed_abs, tag = 'smem constant byte address 0x4 - core index']
  #allocation1 [shape = 'u32[72,128]{1,0:T(1,128)}', space=vmem, size = 0x9000, scoped, tag = 'internal scratch']
  #allocation2 [shape = 'f32[32,128]{1,0:T(8,128)}', space=vmem, size = 0x4000, scoped, tag = 'scratch operand']
  #allocation3 [shape = 'f32[32,128]{1,0:T(8,128)}', space=vmem, size = 0x4000, scoped, tag = 'scratch operand']
  %s0 = inlined_call_operand.hbm [shape: f32[32,128], index: 0, kind: input, shape index: {}]
  %s1 = inlined_call_operand.hbm [shape: f32[2,1,128], index: 1, kind: input, shape index: {}]
  %s2 = inlined_call_operand.hbm [shape: f32[2,1,128], index: 2, kind: input, shape index: {}]
  %s3 = inlined_call_operand.hbm [shape: bf16[2,128,128], index: 3, kind: input, shape index: {}]
  %s4 = inlined_call_operand.vmem [shape: f32[2,1,128], index: 4, kind: input, shape index: {}]
  %s5 = inlined_call_operand.hbm [shape: bf16[2,128,128], index: 5, kind: input, shape index: {}]
  %s6 = inlined_call_operand.vmem [shape: f32[2,1,128], index: 6, kind: input, shape index: {}]
  %s7 = inlined_call_operand.hbm [shape: bf16[2,128,128], index: 7, kind: input, shape index: {}]
  %s8 = inlined_call_operand.hbm [shape: f32[2,1,128], index: 8, kind: input, shape index: {}]
  %s9 = inlined_call_operand.hbm [shape: bf16[2,128,128], index: 9, kind: input, shape index: {}]
  %s10 = inlined_call_operand.hbm [shape: f32[2,1,128], index: 10, kind: input, shape index: {}]
  %s11 = inlined_call_operand.hbm [shape: f32[2,1,128], index: 11, kind: input, shape index: {}]
  %s12 = inlined_call_operand.hbm [shape: f32[2,1,128], index: 12, kind: input, shape index: {}]
  %s13 = inlined_call_operand.hbm [shape: bf16[2,128,512], index: 13, kind: input, shape index: {}]
  %s14 = inlined_call_operand.vmem [shape: f32[2,1,512], index: 14, kind: input, shape index: {}]
  %s15 = inlined_call_operand.hbm [shape: bf16[2,512,128], index: 15, kind: input, shape index: {}]
  %s16 = inlined_call_operand.vmem [shape: f32[2,1,128], index: 16, kind: input, shape index: {}]
  %s17 = inlined_call_operand.vmem [shape: f32[1,1,128], index: 17, kind: input, shape index: {}]
  %s18 = inlined_call_operand.vmem [shape: f32[1,1,128], index: 18, kind: input, shape index: {}]
  %s19 = inlined_call_operand.hbm [shape: f32[32,128], index: 19, kind: output, shape index: {}]
  %s20 = sld [smem:[#allocation0]]
  $region169: #{tpu_custom_call.1} parent=0
    _
  %s22 = ssub.s32 1, %s20
  %s23 = scalar_select 0, %s22, %s20
  $region1: #{tpu_custom_call.1} parent=0
    #allocation4 [shape = 'u8[16384]{0}', space=vmem, size = 0x4000, scoped, tag = 'input window, operand 0, single buffered']
    #allocation5 [shape = 's32[2]{0}', space=sflag, size = 0x8, scoped, tag = 'scoped memory for tpu_custom_call.1']
    #allocation6 [shape = 's32[2]{0}', space=sflag, size = 0x8, scoped, tag = 'scoped memory for tpu_custom_call.1']
    #allocation7 [shape = 'u8[1024]{0}', space=vmem, size = 0x400, scoped, tag = 'input window, operand 1']
    #allocation8 [shape = 's32[2]{0}', space=sflag, size = 0x8, scoped, tag = 'scoped memory for tpu_custom_call.1']
    #allocation9 [shape = 'u8[1024]{0}', space=vmem, size = 0x400, scoped, tag = 'input window, operand 2']
    #allocation10 [shape = 'u8[65536]{0}', space=vmem, size = 0x10000, scoped, tag = 'input window, operand 3']
    #allocation11 [shape = 's32[2]{0}', space=sflag, size = 0x8, scoped, tag = 'scoped memory for tpu_custom_call.1']
    #allocation12 [shape = 'u8[65536]{0}', space=vmem, size = 0x10000, scoped, tag = 'input window, operand 5']
    #allocation13 [shape = 'u8[65536]{0}', space=vmem, size = 0x10000, scoped, tag = 'input window, operand 7']
    #allocation14 [shape = 's32[2]{0}', space=sflag, size = 0x8, scoped, tag = 'scoped memory for tpu_custom_call.1']
    #allocation15 [shape = 'u8[1024]{0}', space=vmem, size = 0x400, scoped, tag = 'input window, operand 8']
    #allocation16 [shape = 'u8[65536]{0}', space=vmem, size = 0x10000, scoped, tag = 'input window, operand 9']
    #allocation17 [shape = 's32[2]{0}', space=sflag, size = 0x8, scoped, tag = 'scoped memory for tpu_custom_call.1']
    #allocation18 [shape = 'u8[1024]{0}', space=vmem, size = 0x400, scoped, tag = 'input window, operand 10']
    #allocation19 [shape = 'u8[1024]{0}', space=vmem, size = 0x400, scoped, tag = 'input window, operand 11']
    #allocation20 [shape = 's32[2]{0}', space=sflag, size = 0x8, scoped, tag = 'scoped memory for tpu_custom_call.1']
    #allocation21 [shape = 'u8[1024]{0}', space=vmem, size = 0x400, scoped, tag = 'input window, operand 12']
    #allocation22 [shape = 'u8[262144]{0}', space=vmem, size = 0x40000, scoped, tag = 'input window, operand 13']
    #allocation23 [shape = 's32[2]{0}', space=sflag, size = 0x8, scoped, tag = 'scoped memory for tpu_custom_call.1']
    #allocation24 [shape = 'u8[262144]{0}', space=vmem, size = 0x40000, scoped, tag = 'input window, operand 15']
    #allocation25 [shape = 'u8[16384]{0}', space=vmem, size = 0x4000, scoped, tag = 'output window, operand 0, single buffered']
    %24 = vsyncpa [#allocation5], 0
    %25 = vsyncpa [#allocation8], 0
    %s26 = scalar_lea.sflag [#allocation8], 1
    %27 = vsyncpa %s26, 0
    %28 = vsyncpa [#allocation11], 0
    %s29 = scalar_lea.sflag [#allocation11], 1
    %30 = vsyncpa %s29, 0
    %31 = vsyncpa [#allocation14], 0
    %s32 = scalar_lea.sflag [#allocation14], 1
    %33 = vsyncpa %s32, 0
    %34 = vsyncpa [#allocation17], 0
    %s35 = scalar_lea.sflag [#allocation17], 1
    %36 = vsyncpa %s35, 0
    %37 = vsyncpa [#allocation20], 0
    %s38 = scalar_lea.sflag [#allocation20], 1
    %39 = vsyncpa %s38, 0
    %40 = vsyncpa [#allocation23], 0
    %s41 = scalar_lea.sflag [#allocation23], 1
    %42 = vsyncpa %s41, 0
    %43 = vsyncpa [#allocation6], 0
    loop: start=0, step=1, limit=4
    $region2: #{tpu_custom_call.1} parent=1 // loop_pre_header
      _
    $region3: #{tpu_custom_call.1} parent=1 // loop_header
      %s45 = sphi 0, %s49
      %p46 = scmp.ge.s32.totalorder %s45, 4
      %s53 = sphi 0, %s53
      %s55 = sphi 0, %s53
      %s56 = sphi 0, %s55
      %s70 = sphi 0, %s56
      %s76 = sphi 0, %s78
      %s79 = sphi 0, %s76
      %s80 = sphi 0, %s79
      %s96 = sphi 0, %s80
      %s102 = sphi 0, %s104
      %s105 = sphi 0, %s102
      %s106 = sphi 0, %s105
      %s122 = sphi 0, %s106
      %s128 = sphi 0, %s130
      %s131 = sphi 0, %s128
      %s132 = sphi 0, %s131
      %s148 = sphi 0, %s132
      %s154 = sphi 0, %s156
      %s157 = sphi 0, %s154
      %s158 = sphi 0, %s157
      %s174 = sphi 0, %s158
      %s180 = sphi 0, %s182
      %s183 = sphi 0, %s180
      %s184 = sphi 0, %s183
      %s200 = sphi 0, %s184
      %s206 = sphi 0, %s208
      %s209 = sphi 0, %s206
      %s210 = sphi 0, %s209
      %s226 = sphi 0, %s210
      %s232 = sphi 0, %s234
      %s235 = sphi 0, %s232
      %s236 = sphi 0, %s235
      %s252 = sphi 0, %s236
      %s258 = sphi 0, %s260
      %s261 = sphi 0, %s258
      %s262 = sphi 0, %s261
      %s278 = sphi 0, %s262
      %s284 = sphi 0, %s286
      %s287 = sphi 0, %s284
      %s288 = sphi 0, %s287
      %s304 = sphi 0, %s288
      %s310 = sphi 0, %s312
      %s313 = sphi 0, %s310
      %s314 = sphi 0, %s313
      %s330 = sphi 0, %s314
      %s336 = sphi 0, %s338
      %s339 = sphi 0, %s336
      %s340 = sphi 0, %s339
      %s356 = sphi 0, %s340
      %s362 = sphi 0, %s364
      %s365 = sphi 0, %s362
      %s366 = sphi 0, %s365
      %s382 = sphi 0, %s366
      %s388 = sphi 0, %s390
      %s391 = sphi 0, %s388
      %s392 = sphi 0, %s391
      %s408 = sphi 0, %s392
      %s414 = sphi 0, %s416
      %s417 = sphi 0, %s414
      %s418 = sphi 0, %s417
      %s434 = sphi 0, %s418
      %s440 = sphi 0, %s442
      %s443 = sphi 0, %s440
      %s444 = sphi 0, %s443
      %s460 = sphi 0, %s444
      %s466 = sphi 0, %s468
      %s469 = sphi 0, %s466
      %s470 = sphi 0, %s469
      %s486 = sphi 0, %s470
      %s490 = sphi 0, %s490
      %s492 = sphi 0, %s490
      %s493 = sphi 0, %s492
      %s507 = sphi 0, %s493
      %s511 = sphi 0, %s511
      %s513 = sphi 0, %s511
      %s514 = sphi 0, %s513
      %s528 = sphi 0, %s514
      %s532 = sphi 0, %s532
      %s534 = sphi 0, %s532
      %s535 = sphi 0, %s534
      %s549 = sphi 0, %s535
    $region4: #{tpu_custom_call.1} parent=1 // loop_header_branch
      %48 = sbr.rel (%p46) target = $region8
    $region5: #{tpu_custom_call.1} parent=1 // loop_body
      %s50 = ssub.s32 %s45, 1
      %s51 = ssub.s32 %s45, 2
      %s52 = sadd.s32 %s45, 1
      %s54 = sadd.s32 %s53, 1
      %p57 = scmp.eq.s32.totalorder %s45, 1
      %p58 = scmp.ne.s32.totalorder %s53, %s55
      %p59 = scmp.eq.s32.totalorder %s45, 0
      %p60 = por %p58, %p59
      %p61 = scmp.ne.s32.totalorder %s53, %s55
      %p62 = scmp.eq.s32.totalorder %s50, 1
      %p63 = por %p61, %p62
      %p64 = scmp.ne.s32.totalorder %s55, %s56
      %p65 = scmp.eq.s32.totalorder %s50, 0
      %p66 = por %p64, %p65
      %p67 = scmp.ne.s32.totalorder %s55, %s56
      %p68 = scmp.eq.s32.totalorder %s51, 1
      %p69 = por %p67, %p68
      %p71 = scmp.ne.s32.totalorder %s56, %s70
      %p72 = scmp.eq.s32.totalorder %s51, 0
      %p73 = por %p71, %p72
      %s74 = ssub.s32 %s45, %s52
      %p75 = scmp.eq.s32.totalorder %s74, 0
      %s77 = sadd.s32 %s76, 1
      %s78 = scalar_select %p75, %s76, %s77
      %p81 = pneg %p75
      %p82 = scmp.eq.s32.totalorder %s45, 1
      %p83 = por %p81, %p82
      %p84 = scmp.ne.s32.totalorder %s76, %s79
      %p85 = scmp.eq.s32.totalorder %s45, 0
      %p86 = por %p84, %p85
      %p87 = scmp.ne.s32.totalorder %s76, %s79
      %p88 = scmp.eq.s32.totalorder %s50, 1
      %p89 = por %p87, %p88
      %p90 = scmp.ne.s32.totalorder %s79, %s80
      %p91 = scmp.eq.s32.totalorder %s50, 0
      %p92 = por %p90, %p91
      %p93 = scmp.ne.s32.totalorder %s79, %s80
      %p94 = scmp.eq.s32.totalorder %s51, 1
      %p95 = por %p93, %p94
      %p97 = scmp.ne.s32.totalorder %s80, %s96
      %p98 = scmp.eq.s32.totalorder %s51, 0
      %p99 = por %p97, %p98
      %s100 = ssub.s32 %s45, %s52
      %p101 = scmp.eq.s32.totalorder %s100, 0
      %s103 = sadd.s32 %s102, 1
      %s104 = scalar_select %p101, %s102, %s103
      %p107 = pneg %p101
      %p108 = scmp.eq.s32.totalorder %s45, 1
      %p109 = por %p107, %p108
      %p110 = scmp.ne.s32.totalorder %s102, %s105
      %p111 = scmp.eq.s32.totalorder %s45, 0
      %p112 = por %p110, %p111
      %p113 = scmp.ne.s32.totalorder %s102, %s105
      %p114 = scmp.eq.s32.totalorder %s50, 1
      %p115 = por %p113, %p114
      %p116 = scmp.ne.s32.totalorder %s105, %s106
      %p117 = scmp.eq.s32.totalorder %s50, 0
      %p118 = por %p116, %p117
      %p119 = scmp.ne.s32.totalorder %s105, %s106
      %p120 = scmp.eq.s32.totalorder %s51, 1
      %p121 = por %p119, %p120
      %p123 = scmp.ne.s32.totalorder %s106, %s122
      %p124 = scmp.eq.s32.totalorder %s51, 0
      %p125 = por %p123, %p124
      %s126 = ssub.s32 %s45, %s52
      %p127 = scmp.eq.s32.totalorder %s126, 0
      %s129 = sadd.s32 %s128, 1
      %s130 = scalar_select %p127, %s128, %s129
      %p133 = pneg %p127
      %p134 = scmp.eq.s32.totalorder %s45, 1
      %p135 = por %p133, %p134
      %p136 = scmp.ne.s32.totalorder %s128, %s131
      %p137 = scmp.eq.s32.totalorder %s45, 0
      %p138 = por %p136, %p137
      %p139 = scmp.ne.s32.totalorder %s128, %s131
      %p140 = scmp.eq.s32.totalorder %s50, 1
      %p141 = por %p139, %p140
      %p142 = scmp.ne.s32.totalorder %s131, %s132
      %p143 = scmp.eq.s32.totalorder %s50, 0
      %p144 = por %p142, %p143
      %p145 = scmp.ne.s32.totalorder %s131, %s132
      %p146 = scmp.eq.s32.totalorder %s51, 1
      %p147 = por %p145, %p146
      %p149 = scmp.ne.s32.totalorder %s132, %s148
      %p150 = scmp.eq.s32.totalorder %s51, 0
      %p151 = por %p149, %p150
      %s152 = ssub.s32 %s45, %s52
      %p153 = scmp.eq.s32.totalorder %s152, 0
      %s155 = sadd.s32 %s154, 1
      %s156 = scalar_select %p153, %s154, %s155
      %p159 = pneg %p153
      %p160 = scmp.eq.s32.totalorder %s45, 1
      %p161 = por %p159, %p160
      %p162 = scmp.ne.s32.totalorder %s154, %s157
      %p163 = scmp.eq.s32.totalorder %s45, 0
      %p164 = por %p162, %p163
      %p165 = scmp.ne.s32.totalorder %s154, %s157
      %p166 = scmp.eq.s32.totalorder %s50, 1
      %p167 = por %p165, %p166
      %p168 = scmp.ne.s32.totalorder %s157, %s158
      %p169 = scmp.eq.s32.totalorder %s50, 0
      %p170 = por %p168, %p169
      %p171 = scmp.ne.s32.totalorder %s157, %s158
      %p172 = scmp.eq.s32.totalorder %s51, 1
      %p173 = por %p171, %p172
      %p175 = scmp.ne.s32.totalorder %s158, %s174
      %p176 = scmp.eq.s32.totalorder %s51, 0
      %p177 = por %p175, %p176
      %s178 = ssub.s32 %s45, %s52
      %p179 = scmp.eq.s32.totalorder %s178, 0
      %s181 = sadd.s32 %s180, 1
      %s182 = scalar_select %p179, %s180, %s181
      %p185 = pneg %p179
      %p186 = scmp.eq.s32.totalorder %s45, 1
      %p187 = por %p185, %p186
      %p188 = scmp.ne.s32.totalorder %s180, %s183
      %p189 = scmp.eq.s32.totalorder %s45, 0
      %p190 = por %p188, %p189
      %p191 = scmp.ne.s32.totalorder %s180, %s183
      %p192 = scmp.eq.s32.totalorder %s50, 1
      %p193 = por %p191, %p192
      %p194 = scmp.ne.s32.totalorder %s183, %s184
      %p195 = scmp.eq.s32.totalorder %s50, 0
      %p196 = por %p194, %p195
      %p197 = scmp.ne.s32.totalorder %s183, %s184
      %p198 = scmp.eq.s32.totalorder %s51, 1
      %p199 = por %p197, %p198
      %p201 = scmp.ne.s32.totalorder %s184, %s200
      %p202 = scmp.eq.s32.totalorder %s51, 0
      %p203 = por %p201, %p202
      %s204 = ssub.s32 %s45, %s52
      %p205 = scmp.eq.s32.totalorder %s204, 0
      %s207 = sadd.s32 %s206, 1
      %s208 = scalar_select %p205, %s206, %s207
      %p211 = pneg %p205
      %p212 = scmp.eq.s32.totalorder %s45, 1
      %p213 = por %p211, %p212
      %p214 = scmp.ne.s32.totalorder %s206, %s209
      %p215 = scmp.eq.s32.totalorder %s45, 0
      %p216 = por %p214, %p215
      %p217 = scmp.ne.s32.totalorder %s206, %s209
      %p218 = scmp.eq.s32.totalorder %s50, 1
      %p219 = por %p217, %p218
      %p220 = scmp.ne.s32.totalorder %s209, %s210
      %p221 = scmp.eq.s32.totalorder %s50, 0
      %p222 = por %p220, %p221
      %p223 = scmp.ne.s32.totalorder %s209, %s210
      %p224 = scmp.eq.s32.totalorder %s51, 1
      %p225 = por %p223, %p224
      %p227 = scmp.ne.s32.totalorder %s210, %s226
      %p228 = scmp.eq.s32.totalorder %s51, 0
      %p229 = por %p227, %p228
      %s230 = ssub.s32 %s45, %s52
      %p231 = scmp.eq.s32.totalorder %s230, 0
      %s233 = sadd.s32 %s232, 1
      %s234 = scalar_select %p231, %s232, %s233
      %p237 = pneg %p231
      %p238 = scmp.eq.s32.totalorder %s45, 1
      %p239 = por %p237, %p238
      %p240 = scmp.ne.s32.totalorder %s232, %s235
      %p241 = scmp.eq.s32.totalorder %s45, 0
      %p242 = por %p240, %p241
      %p243 = scmp.ne.s32.totalorder %s232, %s235
      %p244 = scmp.eq.s32.totalorder %s50, 1
      %p245 = por %p243, %p244
      %p246 = scmp.ne.s32.totalorder %s235, %s236
      %p247 = scmp.eq.s32.totalorder %s50, 0
      %p248 = por %p246, %p247
      %p249 = scmp.ne.s32.totalorder %s235, %s236
      %p250 = scmp.eq.s32.totalorder %s51, 1
      %p251 = por %p249, %p250
      %p253 = scmp.ne.s32.totalorder %s236, %s252
      %p254 = scmp.eq.s32.totalorder %s51, 0
      %p255 = por %p253, %p254
      %s256 = ssub.s32 %s45, %s52
      %p257 = scmp.eq.s32.totalorder %s256, 0
      %s259 = sadd.s32 %s258, 1
      %s260 = scalar_select %p257, %s258, %s259
      %p263 = pneg %p257
      %p264 = scmp.eq.s32.totalorder %s45, 1
      %p265 = por %p263, %p264
      %p266 = scmp.ne.s32.totalorder %s258, %s261
      %p267 = scmp.eq.s32.totalorder %s45, 0
      %p268 = por %p266, %p267
      %p269 = scmp.ne.s32.totalorder %s258, %s261
      %p270 = scmp.eq.s32.totalorder %s50, 1
      %p271 = por %p269, %p270
      %p272 = scmp.ne.s32.totalorder %s261, %s262
      %p273 = scmp.eq.s32.totalorder %s50, 0
      %p274 = por %p272, %p273
      %p275 = scmp.ne.s32.totalorder %s261, %s262
      %p276 = scmp.eq.s32.totalorder %s51, 1
      %p277 = por %p275, %p276
      %p279 = scmp.ne.s32.totalorder %s262, %s278
      %p280 = scmp.eq.s32.totalorder %s51, 0
      %p281 = por %p279, %p280
      %s282 = ssub.s32 %s45, %s52
      %p283 = scmp.eq.s32.totalorder %s282, 0
      %s285 = sadd.s32 %s284, 1
      %s286 = scalar_select %p283, %s284, %s285
      %p289 = pneg %p283
      %p290 = scmp.eq.s32.totalorder %s45, 1
      %p291 = por %p289, %p290
      %p292 = scmp.ne.s32.totalorder %s284, %s287
      %p293 = scmp.eq.s32.totalorder %s45, 0
      %p294 = por %p292, %p293
      %p295 = scmp.ne.s32.totalorder %s284, %s287
      %p296 = scmp.eq.s32.totalorder %s50, 1
      %p297 = por %p295, %p296
      %p298 = scmp.ne.s32.totalorder %s287, %s288
      %p299 = scmp.eq.s32.totalorder %s50, 0
      %p300 = por %p298, %p299
      %p301 = scmp.ne.s32.totalorder %s287, %s288
      %p302 = scmp.eq.s32.totalorder %s51, 1
      %p303 = por %p301, %p302
      %p305 = scmp.ne.s32.totalorder %s288, %s304
      %p306 = scmp.eq.s32.totalorder %s51, 0
      %p307 = por %p305, %p306
      %s308 = ssub.s32 %s45, %s52
      %p309 = scmp.eq.s32.totalorder %s308, 0
      %s311 = sadd.s32 %s310, 1
      %s312 = scalar_select %p309, %s310, %s311
      %p315 = pneg %p309
      %p316 = scmp.eq.s32.totalorder %s45, 1
      %p317 = por %p315, %p316
      %p318 = scmp.ne.s32.totalorder %s310, %s313
      %p319 = scmp.eq.s32.totalorder %s45, 0
      %p320 = por %p318, %p319
      %p321 = scmp.ne.s32.totalorder %s310, %s313
      %p322 = scmp.eq.s32.totalorder %s50, 1
      %p323 = por %p321, %p322
      %p324 = scmp.ne.s32.totalorder %s313, %s314
      %p325 = scmp.eq.s32.totalorder %s50, 0
      %p326 = por %p324, %p325
      %p327 = scmp.ne.s32.totalorder %s313, %s314
      %p328 = scmp.eq.s32.totalorder %s51, 1
      %p329 = por %p327, %p328
      %p331 = scmp.ne.s32.totalorder %s314, %s330
      %p332 = scmp.eq.s32.totalorder %s51, 0
      %p333 = por %p331, %p332
      %s334 = ssub.s32 %s45, %s52
      %p335 = scmp.eq.s32.totalorder %s334, 0
      %s337 = sadd.s32 %s336, 1
      %s338 = scalar_select %p335, %s336, %s337
      %p341 = pneg %p335
      %p342 = scmp.eq.s32.totalorder %s45, 1
      %p343 = por %p341, %p342
      %p344 = scmp.ne.s32.totalorder %s336, %s339
      %p345 = scmp.eq.s32.totalorder %s45, 0
      %p346 = por %p344, %p345
      %p347 = scmp.ne.s32.totalorder %s336, %s339
      %p348 = scmp.eq.s32.totalorder %s50, 1
      %p349 = por %p347, %p348
      %p350 = scmp.ne.s32.totalorder %s339, %s340
      %p351 = scmp.eq.s32.totalorder %s50, 0
      %p352 = por %p350, %p351
      %p353 = scmp.ne.s32.totalorder %s339, %s340
      %p354 = scmp.eq.s32.totalorder %s51, 1
      %p355 = por %p353, %p354
      %p357 = scmp.ne.s32.totalorder %s340, %s356
      %p358 = scmp.eq.s32.totalorder %s51, 0
      %p359 = por %p357, %p358
      %s360 = ssub.s32 %s45, %s52
      %p361 = scmp.eq.s32.totalorder %s360, 0
      %s363 = sadd.s32 %s362, 1
      %s364 = scalar_select %p361, %s362, %s363
      %p367 = pneg %p361
      %p368 = scmp.eq.s32.totalorder %s45, 1
      %p369 = por %p367, %p368
      %p370 = scmp.ne.s32.totalorder %s362, %s365
      %p371 = scmp.eq.s32.totalorder %s45, 0
      %p372 = por %p370, %p371
      %p373 = scmp.ne.s32.totalorder %s362, %s365
      %p374 = scmp.eq.s32.totalorder %s50, 1
      %p375 = por %p373, %p374
      %p376 = scmp.ne.s32.totalorder %s365, %s366
      %p377 = scmp.eq.s32.totalorder %s50, 0
      %p378 = por %p376, %p377
      %p379 = scmp.ne.s32.totalorder %s365, %s366
      %p380 = scmp.eq.s32.totalorder %s51, 1
      %p381 = por %p379, %p380
      %p383 = scmp.ne.s32.totalorder %s366, %s382
      %p384 = scmp.eq.s32.totalorder %s51, 0
      %p385 = por %p383, %p384
      %s386 = ssub.s32 %s45, %s52
      %p387 = scmp.eq.s32.totalorder %s386, 0
      %s389 = sadd.s32 %s388, 1
      %s390 = scalar_select %p387, %s388, %s389
      %p393 = pneg %p387
      %p394 = scmp.eq.s32.totalorder %s45, 1
      %p395 = por %p393, %p394
      %p396 = scmp.ne.s32.totalorder %s388, %s391
      %p397 = scmp.eq.s32.totalorder %s45, 0
      %p398 = por %p396, %p397
      %p399 = scmp.ne.s32.totalorder %s388, %s391
      %p400 = scmp.eq.s32.totalorder %s50, 1
      %p401 = por %p399, %p400
      %p402 = scmp.ne.s32.totalorder %s391, %s392
      %p403 = scmp.eq.s32.totalorder %s50, 0
      %p404 = por %p402, %p403
      %p405 = scmp.ne.s32.totalorder %s391, %s392
      %p406 = scmp.eq.s32.totalorder %s51, 1
      %p407 = por %p405, %p406
      %p409 = scmp.ne.s32.totalorder %s392, %s408
      %p410 = scmp.eq.s32.totalorder %s51, 0
      %p411 = por %p409, %p410
      %s412 = ssub.s32 %s45, %s52
      %p413 = scmp.eq.s32.totalorder %s412, 0
      %s415 = sadd.s32 %s414, 1
      %s416 = scalar_select %p413, %s414, %s415
      %p419 = pneg %p413
      %p420 = scmp.eq.s32.totalorder %s45, 1
      %p421 = por %p419, %p420
      %p422 = scmp.ne.s32.totalorder %s414, %s417
      %p423 = scmp.eq.s32.totalorder %s45, 0
      %p424 = por %p422, %p423
      %p425 = scmp.ne.s32.totalorder %s414, %s417
      %p426 = scmp.eq.s32.totalorder %s50, 1
      %p427 = por %p425, %p426
      %p428 = scmp.ne.s32.totalorder %s417, %s418
      %p429 = scmp.eq.s32.totalorder %s50, 0
      %p430 = por %p428, %p429
      %p431 = scmp.ne.s32.totalorder %s417, %s418
      %p432 = scmp.eq.s32.totalorder %s51, 1
      %p433 = por %p431, %p432
      %p435 = scmp.ne.s32.totalorder %s418, %s434
      %p436 = scmp.eq.s32.totalorder %s51, 0
      %p437 = por %p435, %p436
      %s438 = ssub.s32 %s45, %s52
      %p439 = scmp.eq.s32.totalorder %s438, 0
      %s441 = sadd.s32 %s440, 1
      %s442 = scalar_select %p439, %s440, %s441
      %p445 = pneg %p439
      %p446 = scmp.eq.s32.totalorder %s45, 1
      %p447 = por %p445, %p446
      %p448 = scmp.ne.s32.totalorder %s440, %s443
      %p449 = scmp.eq.s32.totalorder %s45, 0
      %p450 = por %p448, %p449
      %p451 = scmp.ne.s32.totalorder %s440, %s443
      %p452 = scmp.eq.s32.totalorder %s50, 1
      %p453 = por %p451, %p452
      %p454 = scmp.ne.s32.totalorder %s443, %s444
      %p455 = scmp.eq.s32.totalorder %s50, 0
      %p456 = por %p454, %p455
      %p457 = scmp.ne.s32.totalorder %s443, %s444
      %p458 = scmp.eq.s32.totalorder %s51, 1
      %p459 = por %p457, %p458
      %p461 = scmp.ne.s32.totalorder %s444, %s460
      %p462 = scmp.eq.s32.totalorder %s51, 0
      %p463 = por %p461, %p462
      %s464 = ssub.s32 %s45, %s52
      %p465 = scmp.eq.s32.totalorder %s464, 0
      %s467 = sadd.s32 %s466, 1
      %s468 = scalar_select %p465, %s466, %s467
      %p471 = pneg %p465
      %p472 = scmp.eq.s32.totalorder %s45, 1
      %p473 = por %p471, %p472
      %p474 = scmp.ne.s32.totalorder %s466, %s469
      %p475 = scmp.eq.s32.totalorder %s45, 0
      %p476 = por %p474, %p475
      %p477 = scmp.ne.s32.totalorder %s466, %s469
      %p478 = scmp.eq.s32.totalorder %s50, 1
      %p479 = por %p477, %p478
      %p480 = scmp.ne.s32.totalorder %s469, %s470
      %p481 = scmp.eq.s32.totalorder %s50, 0
      %p482 = por %p480, %p481
      %p483 = scmp.ne.s32.totalorder %s469, %s470
      %p484 = scmp.eq.s32.totalorder %s51, 1
      %p485 = por %p483, %p484
      %p487 = scmp.ne.s32.totalorder %s470, %s486
      %p488 = scmp.eq.s32.totalorder %s51, 0
      %p489 = por %p487, %p488
      %s491 = sadd.s32 %s490, 1
      %p494 = scmp.eq.s32.totalorder %s45, 1
      %p495 = scmp.ne.s32.totalorder %s490, %s492
      %p496 = scmp.eq.s32.totalorder %s45, 0
      %p497 = por %p495, %p496
      %p498 = scmp.ne.s32.totalorder %s490, %s492
      %p499 = scmp.eq.s32.totalorder %s50, 1
      %p500 = por %p498, %p499
      %p501 = scmp.ne.s32.totalorder %s492, %s493
      %p502 = scmp.eq.s32.totalorder %s50, 0
      %p503 = por %p501, %p502
      %p504 = scmp.ne.s32.totalorder %s492, %s493
      %p505 = scmp.eq.s32.totalorder %s51, 1
      %p506 = por %p504, %p505
      %p508 = scmp.ne.s32.totalorder %s493, %s507
      %p509 = scmp.eq.s32.totalorder %s51, 0
      %p510 = por %p508, %p509
      %s512 = sadd.s32 %s511, 1
      %p515 = scmp.eq.s32.totalorder %s45, 1
      %p516 = scmp.ne.s32.totalorder %s511, %s513
      %p517 = scmp.eq.s32.totalorder %s45, 0
      %p518 = por %p516, %p517
      %p519 = scmp.ne.s32.totalorder %s511, %s513
      %p520 = scmp.eq.s32.totalorder %s50, 1
      %p521 = por %p519, %p520
      %p522 = scmp.ne.s32.totalorder %s513, %s514
      %p523 = scmp.eq.s32.totalorder %s50, 0
      %p524 = por %p522, %p523
      %p525 = scmp.ne.s32.totalorder %s513, %s514
      %p526 = scmp.eq.s32.totalorder %s51, 1
      %p527 = por %p525, %p526
      %p529 = scmp.ne.s32.totalorder %s514, %s528
      %p530 = scmp.eq.s32.totalorder %s51, 0
      %p531 = por %p529, %p530
      %s533 = sadd.s32 %s532, 1
      %p536 = scmp.eq.s32.totalorder %s45, 1
      %p537 = scmp.ne.s32.totalorder %s532, %s534
      %p538 = scmp.eq.s32.totalorder %s45, 0
      %p539 = por %p537, %p538
      %p540 = scmp.ne.s32.totalorder %s532, %s534
      %p541 = scmp.eq.s32.totalorder %s50, 1
      %p542 = por %p540, %p541
      %p543 = scmp.ne.s32.totalorder %s534, %s535
      %p544 = scmp.eq.s32.totalorder %s50, 0
      %p545 = por %p543, %p544
      %p546 = scmp.ne.s32.totalorder %s534, %s535
      %p547 = scmp.eq.s32.totalorder %s51, 1
      %p548 = por %p546, %p547
      %p550 = scmp.ne.s32.totalorder %s535, %s549
      %p551 = scmp.eq.s32.totalorder %s51, 0
      %p552 = por %p550, %p551
      %p553 = scmp.le.s32.totalorder 1, %s45
      %p554 = scmp.lt.s32.totalorder %s45, 3
      %p555 = pnand %p553, %p554
      %p556 = pneg %p555
      // Predicated region
      $region9: #{tpu_custom_call.1} parent=5 // pred_check
        _
      $region10: #{tpu_custom_call.1} parent=5 // pred_check_branch
        %558 = sbr.rel (%p555) target = $region12
      $region11: #{tpu_custom_call.1} parent=5 // pred_region
        %s559 = ssub.s32 %s45, 1
        // Predicated region
        $region13: #{tpu_custom_call.1} parent=11 // pred_check
          %p560 = pneg %p66
        $region14: #{tpu_custom_call.1} parent=11 // pred_check_branch
          %562 = sbr.rel (%p560) target = $region16
        $region15: #{tpu_custom_call.1} parent=11 // pred_region
          %564 = vsyncadd [#allocation5], 0
          %s565 = sshll.u32 %s0, 4
          %s566 = int_to_ptr.hbm [resolvable:$true] %s565
          %s567 = sshll.u32 [#allocation4], 4
          %s568 = int_to_ptr.vmem [resolvable:$true] %s567
          %573 = dma.hbm_to_vmem [thread:$0]  %s566, 512, %s568, [#allocation5], 128, 128, 8
        $region16: #{tpu_custom_call.1} parent=11 // pred_fallthru
          _
        // Predicated region
        $region17: #{tpu_custom_call.1} parent=11 // pred_check
          %p574 = pneg %p503
        $region18: #{tpu_custom_call.1} parent=11 // pred_check_branch
          %576 = sbr.rel (%p574) target = $region20
        $region19: #{tpu_custom_call.1} parent=11 // pred_region
          _
        $region20: #{tpu_custom_call.1} parent=11 // pred_fallthru
          _
        // Predicated region
        $region21: #{tpu_custom_call.1} parent=11 // pred_check
          %p577 = pneg %p524
        $region22: #{tpu_custom_call.1} parent=11 // pred_check_branch
          %579 = sbr.rel (%p577) target = $region24
        $region23: #{tpu_custom_call.1} parent=11 // pred_region
          _
        $region24: #{tpu_custom_call.1} parent=11 // pred_fallthru
          _
      $region12: #{tpu_custom_call.1} parent=5 // pred_fallthru
        _
      %p580 = scmp.lt.s32.totalorder %s45, 2
      // Predicated region
      $region25: #{tpu_custom_call.1} parent=5 // pred_check
        %p581 = pneg %p580
      $region26: #{tpu_custom_call.1} parent=5 // pred_check_branch
        %583 = sbr.rel (%p581) target = $region28
      $region27: #{tpu_custom_call.1} parent=5 // pred_region
        // Predicated region
        $region29: #{tpu_custom_call.1} parent=27 // pred_check
          %p584 = pneg %p86
        $region30: #{tpu_custom_call.1} parent=27 // pred_check_branch
          %586 = sbr.rel (%p584) target = $region32
        $region31: #{tpu_custom_call.1} parent=27 // pred_region
          %s587 = sand.u32 %s45, 1
          %s588 = scalar_lea.sflag [#allocation8], %s587
          %s589 = sand.u32 %s76, 1
          %s590 = scalar_lea.vmem [#allocation7], %s589
          %592 = vsyncadd %s588, 0
          %s593 = scalar_lea.hbm %s1, %s45
          %s595 = sshll.u32 %s593, 4
          %s596 = int_to_ptr.hbm [resolvable:$true] %s595
          %s597 = sshll.u32 %s590, 4
          %s598 = int_to_ptr.vmem [resolvable:$true] %s597
          %600 = dma.hbm_to_vmem [thread:$0]  %s596, 16, %s598, %s588
        $region32: #{tpu_custom_call.1} parent=27 // pred_fallthru
          _
        // Predicated region
        $region33: #{tpu_custom_call.1} parent=27 // pred_check
          %p601 = pneg %p112
        $region34: #{tpu_custom_call.1} parent=27 // pred_check_branch
          %603 = sbr.rel (%p601) target = $region36
        $region35: #{tpu_custom_call.1} parent=27 // pred_region
          %s604 = sand.u32 %s45, 1
          %s605 = scalar_lea.sflag [#allocation8], %s604
          %s606 = sand.u32 %s102, 1
          %s607 = scalar_lea.vmem [#allocation9], %s606
          %609 = vsyncadd %s605, 0
          %s610 = scalar_lea.hbm %s2, %s45
          %s612 = sshll.u32 %s610, 4
          %s613 = int_to_ptr.hbm [resolvable:$true] %s612
          %s614 = sshll.u32 %s607, 4
          %s615 = int_to_ptr.vmem [resolvable:$true] %s614
          %617 = dma.hbm_to_vmem [thread:$0]  %s613, 16, %s615, %s605
        $region36: #{tpu_custom_call.1} parent=27 // pred_fallthru
          _
        // Predicated region
        $region37: #{tpu_custom_call.1} parent=27 // pred_check
          %p618 = pneg %p138
        $region38: #{tpu_custom_call.1} parent=27 // pred_check_branch
          %620 = sbr.rel (%p618) target = $region40
        $region39: #{tpu_custom_call.1} parent=27 // pred_region
          %s621 = sand.u32 %s45, 1
          %s622 = scalar_lea.sflag [#allocation11], %s621
          %s623 = sand.u32 %s128, 1
          %s624 = smul.addr %s623, 64
          %s625 = scalar_lea.vmem [#allocation10], %s624
          %627 = vsyncadd %s622, 0
          %s628 = smul.addr %s45, 16
          %s629 = smul.addr %s628, 4
          %s630 = scalar_lea.hbm %s3, %s629
          %s631 = sshll.u32 %s630, 4
          %s632 = int_to_ptr.hbm [resolvable:$true] %s631
          %s633 = sshll.u32 %s625, 4
          %s634 = int_to_ptr.vmem [resolvable:$true] %s633
          %639 = dma.hbm_to_vmem [thread:$0]  %s632, 1024, %s634, %s622, 64, 64, 4
        $region40: #{tpu_custom_call.1} parent=27 // pred_fallthru
          _
        // Predicated region
        $region41: #{tpu_custom_call.1} parent=27 // pred_check
          %p640 = pneg %p164
        $region42: #{tpu_custom_call.1} parent=27 // pred_check_branch
          %642 = sbr.rel (%p640) target = $region44
        $region43: #{tpu_custom_call.1} parent=27 // pred_region
          %p643 = scmp.lt.s32.totalorder %s45, 1
          %s644 = scalar_select %p643, %s45, 1
          %s645 = scalar_lea.vmem %s4, %s644
        $region44: #{tpu_custom_call.1} parent=27 // pred_fallthru
          _
        // Predicated region
        $region45: #{tpu_custom_call.1} parent=27 // pred_check
          %p646 = pneg %p190
        $region46: #{tpu_custom_call.1} parent=27 // pred_check_branch
          %648 = sbr.rel (%p646) target = $region48
        $region47: #{tpu_custom_call.1} parent=27 // pred_region
          %s649 = sand.u32 %s45, 1
          %s650 = scalar_lea.sflag [#allocation11], %s649
          %s651 = sand.u32 %s180, 1
          %s652 = smul.addr %s651, 64
          %s653 = scalar_lea.vmem [#allocation12], %s652
          %655 = vsyncadd %s650, 0
          %s656 = smul.addr %s45, 16
          %s657 = smul.addr %s656, 4
          %s658 = scalar_lea.hbm %s5, %s657
          %s659 = sshll.u32 %s658, 4
          %s660 = int_to_ptr.hbm [resolvable:$true] %s659
          %s661 = sshll.u32 %s653, 4
          %s662 = int_to_ptr.vmem [resolvable:$true] %s661
          %667 = dma.hbm_to_vmem [thread:$0]  %s660, 1024, %s662, %s650, 64, 64, 4
        $region48: #{tpu_custom_call.1} parent=27 // pred_fallthru
          _
        // Predicated region
        $region49: #{tpu_custom_call.1} parent=27 // pred_check
          %p668 = pneg %p216
        $region50: #{tpu_custom_call.1} parent=27 // pred_check_branch
          %670 = sbr.rel (%p668) target = $region52
        $region51: #{tpu_custom_call.1} parent=27 // pred_region
          %p671 = scmp.lt.s32.totalorder %s45, 1
          %s672 = scalar_select %p671, %s45, 1
          %s673 = scalar_lea.vmem %s6, %s672
        $region52: #{tpu_custom_call.1} parent=27 // pred_fallthru
          _
        // Predicated region
        $region53: #{tpu_custom_call.1} parent=27 // pred_check
          %p674 = pneg %p242
        $region54: #{tpu_custom_call.1} parent=27 // pred_check_branch
          %676 = sbr.rel (%p674) target = $region56
        $region55: #{tpu_custom_call.1} parent=27 // pred_region
          %s677 = sand.u32 %s45, 1
          %s678 = scalar_lea.sflag [#allocation14], %s677
          %s679 = sand.u32 %s232, 1
          %s680 = smul.addr %s679, 64
          %s681 = scalar_lea.vmem [#allocation13], %s680
          %683 = vsyncadd %s678, 0
          %s684 = smul.addr %s45, 16
          %s685 = smul.addr %s684, 4
          %s686 = scalar_lea.hbm %s7, %s685
          %s687 = sshll.u32 %s686, 4
          %s688 = int_to_ptr.hbm [resolvable:$true] %s687
          %s689 = sshll.u32 %s681, 4
          %s690 = int_to_ptr.vmem [resolvable:$true] %s689
          %695 = dma.hbm_to_vmem [thread:$0]  %s688, 1024, %s690, %s678, 64, 64, 4
        $region56: #{tpu_custom_call.1} parent=27 // pred_fallthru
          _
        // Predicated region
        $region57: #{tpu_custom_call.1} parent=27 // pred_check
          %p696 = pneg %p268
        $region58: #{tpu_custom_call.1} parent=27 // pred_check_branch
          %698 = sbr.rel (%p696) target = $region60
        $region59: #{tpu_custom_call.1} parent=27 // pred_region
          %s699 = sand.u32 %s45, 1
          %s700 = scalar_lea.sflag [#allocation14], %s699
          %s701 = sand.u32 %s258, 1
          %s702 = scalar_lea.vmem [#allocation15], %s701
          %704 = vsyncadd %s700, 0
          %s705 = scalar_lea.hbm %s8, %s45
          %s707 = sshll.u32 %s705, 4
          %s708 = int_to_ptr.hbm [resolvable:$true] %s707
          %s709 = sshll.u32 %s702, 4
          %s710 = int_to_ptr.vmem [resolvable:$true] %s709
          %712 = dma.hbm_to_vmem [thread:$0]  %s708, 16, %s710, %s700
        $region60: #{tpu_custom_call.1} parent=27 // pred_fallthru
          _
        // Predicated region
        $region61: #{tpu_custom_call.1} parent=27 // pred_check
          %p713 = pneg %p294
        $region62: #{tpu_custom_call.1} parent=27 // pred_check_branch
          %715 = sbr.rel (%p713) target = $region64
        $region63: #{tpu_custom_call.1} parent=27 // pred_region
          %s716 = sand.u32 %s45, 1
          %s717 = scalar_lea.sflag [#allocation17], %s716
          %s718 = sand.u32 %s284, 1
          %s719 = smul.addr %s718, 64
          %s720 = scalar_lea.vmem [#allocation16], %s719
          %722 = vsyncadd %s717, 0
          %s723 = smul.addr %s45, 16
          %s724 = smul.addr %s723, 4
          %s725 = scalar_lea.hbm %s9, %s724
          %s726 = sshll.u32 %s725, 4
          %s727 = int_to_ptr.hbm [resolvable:$true] %s726
          %s728 = sshll.u32 %s720, 4
          %s729 = int_to_ptr.vmem [resolvable:$true] %s728
          %734 = dma.hbm_to_vmem [thread:$0]  %s727, 1024, %s729, %s717, 64, 64, 4
        $region64: #{tpu_custom_call.1} parent=27 // pred_fallthru
          _
        // Predicated region
        $region65: #{tpu_custom_call.1} parent=27 // pred_check
          %p735 = pneg %p320
        $region66: #{tpu_custom_call.1} parent=27 // pred_check_branch
          %737 = sbr.rel (%p735) target = $region68
        $region67: #{tpu_custom_call.1} parent=27 // pred_region
          %s738 = sand.u32 %s45, 1
          %s739 = scalar_lea.sflag [#allocation17], %s738
          %s740 = sand.u32 %s310, 1
          %s741 = scalar_lea.vmem [#allocation18], %s740
          %743 = vsyncadd %s739, 0
          %s744 = scalar_lea.hbm %s10, %s45
          %s746 = sshll.u32 %s744, 4
          %s747 = int_to_ptr.hbm [resolvable:$true] %s746
          %s748 = sshll.u32 %s741, 4
          %s749 = int_to_ptr.vmem [resolvable:$true] %s748
          %751 = dma.hbm_to_vmem [thread:$0]  %s747, 16, %s749, %s739
        $region68: #{tpu_custom_call.1} parent=27 // pred_fallthru
          _
        // Predicated region
        $region69: #{tpu_custom_call.1} parent=27 // pred_check
          %p752 = pneg %p346
        $region70: #{tpu_custom_call.1} parent=27 // pred_check_branch
          %754 = sbr.rel (%p752) target = $region72
        $region71: #{tpu_custom_call.1} parent=27 // pred_region
          %s755 = sand.u32 %s45, 1
          %s756 = scalar_lea.sflag [#allocation20], %s755
          %s757 = sand.u32 %s336, 1
          %s758 = scalar_lea.vmem [#allocation19], %s757
          %760 = vsyncadd %s756, 0
          %s761 = scalar_lea.hbm %s11, %s45
          %s763 = sshll.u32 %s761, 4
          %s764 = int_to_ptr.hbm [resolvable:$true] %s763
          %s765 = sshll.u32 %s758, 4
          %s766 = int_to_ptr.vmem [resolvable:$true] %s765
          %768 = dma.hbm_to_vmem [thread:$0]  %s764, 16, %s766, %s756
        $region72: #{tpu_custom_call.1} parent=27 // pred_fallthru
          _
        // Predicated region
        $region73: #{tpu_custom_call.1} parent=27 // pred_check
          %p769 = pneg %p372
        $region74: #{tpu_custom_call.1} parent=27 // pred_check_branch
          %771 = sbr.rel (%p769) target = $region76
        $region75: #{tpu_custom_call.1} parent=27 // pred_region
          %s772 = sand.u32 %s45, 1
          %s773 = scalar_lea.sflag [#allocation20], %s772
          %s774 = sand.u32 %s362, 1
          %s775 = scalar_lea.vmem [#allocation21], %s774
          %777 = vsyncadd %s773, 0
          %s778 = scalar_lea.hbm %s12, %s45
          %s780 = sshll.u32 %s778, 4
          %s781 = int_to_ptr.hbm [resolvable:$true] %s780
          %s782 = sshll.u32 %s775, 4
          %s783 = int_to_ptr.vmem [resolvable:$true] %s782
          %785 = dma.hbm_to_vmem [thread:$0]  %s781, 16, %s783, %s773
        $region76: #{tpu_custom_call.1} parent=27 // pred_fallthru
          _
        // Predicated region
        $region77: #{tpu_custom_call.1} parent=27 // pred_check
          %p786 = pneg %p398
        $region78: #{tpu_custom_call.1} parent=27 // pred_check_branch
          %788 = sbr.rel (%p786) target = $region80
        $region79: #{tpu_custom_call.1} parent=27 // pred_region
          %s789 = sand.u32 %s45, 1
          %s790 = scalar_lea.sflag [#allocation23], %s789
          %s791 = sand.u32 %s388, 1
          %s792 = smul.addr %s791, 256
          %s793 = scalar_lea.vmem [#allocation22], %s792
          %795 = vsyncadd %s790, 0
          %s796 = smul.addr %s45, 64
          %s797 = smul.addr %s796, 4
          %s798 = scalar_lea.hbm %s13, %s797
          %s799 = sshll.u32 %s798, 4
          %s800 = int_to_ptr.hbm [resolvable:$true] %s799
          %s801 = sshll.u32 %s793, 4
          %s802 = int_to_ptr.vmem [resolvable:$true] %s801
          %807 = dma.hbm_to_vmem [thread:$0]  %s800, 4096, %s802, %s790, 256, 256, 16
        $region80: #{tpu_custom_call.1} parent=27 // pred_fallthru
          _
        // Predicated region
        $region81: #{tpu_custom_call.1} parent=27 // pred_check
          %p808 = pneg %p424
        $region82: #{tpu_custom_call.1} parent=27 // pred_check_branch
          %810 = sbr.rel (%p808) target = $region84
        $region83: #{tpu_custom_call.1} parent=27 // pred_region
          %p811 = scmp.lt.s32.totalorder %s45, 1
          %s812 = scalar_select %p811, %s45, 1
          %s813 = smul.addr %s812, 4
          %s814 = scalar_lea.vmem %s14, %s813
        $region84: #{tpu_custom_call.1} parent=27 // pred_fallthru
          _
        // Predicated region
        $region85: #{tpu_custom_call.1} parent=27 // pred_check
          %p815 = pneg %p450
        $region86: #{tpu_custom_call.1} parent=27 // pred_check_branch
          %817 = sbr.rel (%p815) target = $region88
        $region87: #{tpu_custom_call.1} parent=27 // pred_region
          %s818 = sand.u32 %s45, 1
          %s819 = scalar_lea.sflag [#allocation23], %s818
          %s820 = sand.u32 %s440, 1
          %s821 = smul.addr %s820, 256
          %s822 = scalar_lea.vmem [#allocation24], %s821
          %824 = vsyncadd %s819, 0
          %s825 = smul.addr %s45, 64
          %s826 = smul.addr %s825, 4
          %s827 = scalar_lea.hbm %s15, %s826
          %s828 = sshll.u32 %s827, 4
          %s829 = int_to_ptr.hbm [resolvable:$true] %s828
          %s830 = sshll.u32 %s822, 4
          %s831 = int_to_ptr.vmem [resolvable:$true] %s830
          %836 = dma.hbm_to_vmem [thread:$0]  %s829, 4096, %s831, %s819, 64, 64, 4
        $region88: #{tpu_custom_call.1} parent=27 // pred_fallthru
          _
        // Predicated region
        $region89: #{tpu_custom_call.1} parent=27 // pred_check
          %p837 = pneg %p476
        $region90: #{tpu_custom_call.1} parent=27 // pred_check_branch
          %839 = sbr.rel (%p837) target = $region92
        $region91: #{tpu_custom_call.1} parent=27 // pred_region
          %p840 = scmp.lt.s32.totalorder %s45, 1
          %s841 = scalar_select %p840, %s45, 1
          %s842 = scalar_lea.vmem %s16, %s841
        $region92: #{tpu_custom_call.1} parent=27 // pred_fallthru
          _
      $region28: #{tpu_custom_call.1} parent=5 // pred_fallthru
        _
      %p843 = scmp.le.s32.totalorder 1, %s45
      %p844 = scmp.lt.s32.totalorder %s45, 3
      %p845 = pnand %p843, %p844
      %p846 = pneg %p845
      // Predicated region
      $region93: #{tpu_custom_call.1} parent=5 // pred_check
        _
      $region94: #{tpu_custom_call.1} parent=5 // pred_check_branch
        %848 = sbr.rel (%p845) target = $region96
      $region95: #{tpu_custom_call.1} parent=5 // pred_region
        %s849 = ssub.s32 %s45, 1
        // Predicated region
        $region97: #{tpu_custom_call.1} parent=95 // pred_check
          %p850 = pneg %p66
        $region98: #{tpu_custom_call.1} parent=95 // pred_check_branch
          %852 = sbr.rel (%p850) target = $region100
        $region99: #{tpu_custom_call.1} parent=95 // pred_region
          %854 = dma.done [#allocation5], 512
        $region100: #{tpu_custom_call.1} parent=95 // pred_fallthru
          _
        %s855 = sand.u32 %s50, 1
        %s856 = scalar_lea.sflag [#allocation8], %s855
        %s857 = sand.u32 %s79, 1
        %s858 = scalar_lea.vmem [#allocation7], %s857
        // Predicated region
        $region101: #{tpu_custom_call.1} parent=95 // pred_check
          %p859 = pneg %p92
        $region102: #{tpu_custom_call.1} parent=95 // pred_check_branch
          %861 = sbr.rel (%p859) target = $region104
        $region103: #{tpu_custom_call.1} parent=95 // pred_region
          %863 = dma.done %s856, 16
        $region104: #{tpu_custom_call.1} parent=95 // pred_fallthru
          _
        %s864 = sand.u32 %s50, 1
        %s865 = scalar_lea.sflag [#allocation8], %s864
        %s866 = sand.u32 %s105, 1
        %s867 = scalar_lea.vmem [#allocation9], %s866
        // Predicated region
        $region105: #{tpu_custom_call.1} parent=95 // pred_check
          %p868 = pneg %p118
        $region106: #{tpu_custom_call.1} parent=95 // pred_check_branch
          %870 = sbr.rel (%p868) target = $region108
        $region107: #{tpu_custom_call.1} parent=95 // pred_region
          %872 = dma.done %s865, 16
        $region108: #{tpu_custom_call.1} parent=95 // pred_fallthru
          _
        %s873 = sand.u32 %s50, 1
        %s874 = scalar_lea.sflag [#allocation11], %s873
        %s875 = sand.u32 %s131, 1
        %s876 = smul.addr %s875, 64
        %s877 = scalar_lea.vmem [#allocation10], %s876
        // Predicated region
        $region109: #{tpu_custom_call.1} parent=95 // pred_check
          %p878 = pneg %p144
        $region110: #{tpu_custom_call.1} parent=95 // pred_check_branch
          %880 = sbr.rel (%p878) target = $region112
        $region111: #{tpu_custom_call.1} parent=95 // pred_region
          %882 = dma.done %s874, 1024
        $region112: #{tpu_custom_call.1} parent=95 // pred_fallthru
          _
        %s883 = sand.u32 %s50, 1
        %s884 = scalar_lea.sflag [#allocation11], %s883
        %s885 = sand.u32 %s183, 1
        %s886 = smul.addr %s885, 64
        %s887 = scalar_lea.vmem [#allocation12], %s886
        // Predicated region
        $region113: #{tpu_custom_call.1} parent=95 // pred_check
          %p888 = pneg %p196
        $region114: #{tpu_custom_call.1} parent=95 // pred_check_branch
          %890 = sbr.rel (%p888) target = $region116
        $region115: #{tpu_custom_call.1} parent=95 // pred_region
          %892 = dma.done %s884, 1024
        $region116: #{tpu_custom_call.1} parent=95 // pred_fallthru
          _
        %s893 = sand.u32 %s50, 1
        %s894 = scalar_lea.sflag [#allocation14], %s893
        %s895 = sand.u32 %s235, 1
        %s896 = smul.addr %s895, 64
        %s897 = scalar_lea.vmem [#allocation13], %s896
        // Predicated region
        $region117: #{tpu_custom_call.1} parent=95 // pred_check
          %p898 = pneg %p248
        $region118: #{tpu_custom_call.1} parent=95 // pred_check_branch
          %900 = sbr.rel (%p898) target = $region120
        $region119: #{tpu_custom_call.1} parent=95 // pred_region
          %902 = dma.done %s894, 1024
        $region120: #{tpu_custom_call.1} parent=95 // pred_fallthru
          _
        %s903 = sand.u32 %s50, 1
        %s904 = scalar_lea.sflag [#allocation14], %s903
        %s905 = sand.u32 %s261, 1
        %s906 = scalar_lea.vmem [#allocation15], %s905
        // Predicated region
        $region121: #{tpu_custom_call.1} parent=95 // pred_check
          %p907 = pneg %p274
        $region122: #{tpu_custom_call.1} parent=95 // pred_check_branch
          %909 = sbr.rel (%p907) target = $region124
        $region123: #{tpu_custom_call.1} parent=95 // pred_region
          %911 = dma.done %s904, 16
        $region124: #{tpu_custom_call.1} parent=95 // pred_fallthru
          _
        %s912 = sand.u32 %s50, 1
        %s913 = scalar_lea.sflag [#allocation17], %s912
        %s914 = sand.u32 %s287, 1
        %s915 = smul.addr %s914, 64
        %s916 = scalar_lea.vmem [#allocation16], %s915
        // Predicated region
        $region125: #{tpu_custom_call.1} parent=95 // pred_check
          %p917 = pneg %p300
        $region126: #{tpu_custom_call.1} parent=95 // pred_check_branch
          %919 = sbr.rel (%p917) target = $region128
        $region127: #{tpu_custom_call.1} parent=95 // pred_region
          %921 = dma.done %s913, 1024
        $region128: #{tpu_custom_call.1} parent=95 // pred_fallthru
          _
        %s922 = sand.u32 %s50, 1
        %s923 = scalar_lea.sflag [#allocation17], %s922
        %s924 = sand.u32 %s313, 1
        %s925 = scalar_lea.vmem [#allocation18], %s924
        // Predicated region
        $region129: #{tpu_custom_call.1} parent=95 // pred_check
          %p926 = pneg %p326
        $region130: #{tpu_custom_call.1} parent=95 // pred_check_branch
          %928 = sbr.rel (%p926) target = $region132
        $region131: #{tpu_custom_call.1} parent=95 // pred_region
          %930 = dma.done %s923, 16
        $region132: #{tpu_custom_call.1} parent=95 // pred_fallthru
          _
        %s931 = sand.u32 %s50, 1
        %s932 = scalar_lea.sflag [#allocation20], %s931
        %s933 = sand.u32 %s339, 1
        %s934 = scalar_lea.vmem [#allocation19], %s933
        // Predicated region
        $region133: #{tpu_custom_call.1} parent=95 // pred_check
          %p935 = pneg %p352
        $region134: #{tpu_custom_call.1} parent=95 // pred_check_branch
          %937 = sbr.rel (%p935) target = $region136
        $region135: #{tpu_custom_call.1} parent=95 // pred_region
          %939 = dma.done %s932, 16
        $region136: #{tpu_custom_call.1} parent=95 // pred_fallthru
          _
        %s940 = sand.u32 %s50, 1
        %s941 = scalar_lea.sflag [#allocation20], %s940
        %s942 = sand.u32 %s365, 1
        %s943 = scalar_lea.vmem [#allocation21], %s942
        // Predicated region
        $region137: #{tpu_custom_call.1} parent=95 // pred_check
          %p944 = pneg %p378
        $region138: #{tpu_custom_call.1} parent=95 // pred_check_branch
          %946 = sbr.rel (%p944) target = $region140
        $region139: #{tpu_custom_call.1} parent=95 // pred_region
          %948 = dma.done %s941, 16
        $region140: #{tpu_custom_call.1} parent=95 // pred_fallthru
          _
        %s949 = sand.u32 %s50, 1
        %s950 = scalar_lea.sflag [#allocation23], %s949
        %s951 = sand.u32 %s391, 1
        %s952 = smul.addr %s951, 256
        %s953 = scalar_lea.vmem [#allocation22], %s952
        // Predicated region
        $region141: #{tpu_custom_call.1} parent=95 // pred_check
          %p954 = pneg %p404
        $region142: #{tpu_custom_call.1} parent=95 // pred_check_branch
          %956 = sbr.rel (%p954) target = $region144
        $region143: #{tpu_custom_call.1} parent=95 // pred_region
          %958 = dma.done %s950, 4096
        $region144: #{tpu_custom_call.1} parent=95 // pred_fallthru
          _
        %s959 = sand.u32 %s50, 1
        %s960 = scalar_lea.sflag [#allocation23], %s959
        %s961 = sand.u32 %s443, 1
        %s962 = smul.addr %s961, 256
        %s963 = scalar_lea.vmem [#allocation24], %s962
        // Predicated region
        $region145: #{tpu_custom_call.1} parent=95 // pred_check
          %p964 = pneg %p456
        $region146: #{tpu_custom_call.1} parent=95 // pred_check_branch
          %966 = sbr.rel (%p964) target = $region148
        $region147: #{tpu_custom_call.1} parent=95 // pred_region
          %968 = dma.done %s960, 4096
        $region148: #{tpu_custom_call.1} parent=95 // pred_fallthru
          _
        %p969 = pneg %p66
        %p970 = pneg %p63
        %s971 = sand.u32 %s50, 1
        %s972 = scalar_lea.sflag [#allocation8], %s971
        %s973 = sand.u32 %s79, 1
        %s974 = scalar_lea.vmem [#allocation7], %s973
        %p975 = pneg %p92
        %p976 = pneg %p89
        %s977 = sand.u32 %s50, 1
        %s978 = scalar_lea.sflag [#allocation8], %s977
        %s979 = sand.u32 %s105, 1
        %s980 = scalar_lea.vmem [#allocation9], %s979
        %p981 = pneg %p118
        %p982 = pneg %p115
        %s983 = sand.u32 %s50, 1
        %s984 = scalar_lea.sflag [#allocation11], %s983
        %s985 = sand.u32 %s131, 1
        %s986 = smul.addr %s985, 64
        %s987 = scalar_lea.vmem [#allocation10], %s986
        %p988 = pneg %p144
        %p989 = pneg %p141
        %p990 = scmp.lt.s32.totalorder %s50, 1
        %s991 = scalar_select %p990, %s50, 1
        %s992 = scalar_lea.vmem %s4, %s991
        %p993 = pneg %p170
        %p994 = pneg %p167
        %s995 = sand.u32 %s50, 1
        %s996 = scalar_lea.sflag [#allocation11], %s995
        %s997 = sand.u32 %s183, 1
        %s998 = smul.addr %s997, 64
        %s999 = scalar_lea.vmem [#allocation12], %s998
        %p1000 = pneg %p196
        %p1001 = pneg %p193
        %p1002 = scmp.lt.s32.totalorder %s50, 1
        %s1003 = scalar_select %p1002, %s50, 1
        %s1004 = scalar_lea.vmem %s6, %s1003
        %p1005 = pneg %p222
        %p1006 = pneg %p219
        %s1007 = sand.u32 %s50, 1
        %s1008 = scalar_lea.sflag [#allocation14], %s1007
        %s1009 = sand.u32 %s235, 1
        %s1010 = smul.addr %s1009, 64
        %s1011 = scalar_lea.vmem [#allocation13], %s1010
        %p1012 = pneg %p248
        %p1013 = pneg %p245
        %s1014 = sand.u32 %s50, 1
        %s1015 = scalar_lea.sflag [#allocation14], %s1014
        %s1016 = sand.u32 %s261, 1
        %s1017 = scalar_lea.vmem [#allocation15], %s1016
        %p1018 = pneg %p274
        %p1019 = pneg %p271
        %s1020 = sand.u32 %s50, 1
        %s1021 = scalar_lea.sflag [#allocation17], %s1020
        %s1022 = sand.u32 %s287, 1
        %s1023 = smul.addr %s1022, 64
        %s1024 = scalar_lea.vmem [#allocation16], %s1023
        %p1025 = pneg %p300
        %p1026 = pneg %p297
        %s1027 = sand.u32 %s50, 1
        %s1028 = scalar_lea.sflag [#allocation17], %s1027
        %s1029 = sand.u32 %s313, 1
        %s1030 = scalar_lea.vmem [#allocation18], %s1029
        %p1031 = pneg %p326
        %p1032 = pneg %p323
        %s1033 = sand.u32 %s50, 1
        %s1034 = scalar_lea.sflag [#allocation20], %s1033
        %s1035 = sand.u32 %s339, 1
        %s1036 = scalar_lea.vmem [#allocation19], %s1035
        %p1037 = pneg %p352
        %p1038 = pneg %p349
        %s1039 = sand.u32 %s50, 1
        %s1040 = scalar_lea.sflag [#allocation20], %s1039
        %s1041 = sand.u32 %s365, 1
        %s1042 = scalar_lea.vmem [#allocation21], %s1041
        %p1043 = pneg %p378
        %p1044 = pneg %p375
        %s1045 = sand.u32 %s50, 1
        %s1046 = scalar_lea.sflag [#allocation23], %s1045
        %s1047 = sand.u32 %s391, 1
        %s1048 = smul.addr %s1047, 256
        %s1049 = scalar_lea.vmem [#allocation22], %s1048
        %p1050 = pneg %p404
        %p1051 = pneg %p401
        %p1052 = scmp.lt.s32.totalorder %s50, 1
        %s1053 = scalar_select %p1052, %s50, 1
        %s1054 = smul.addr %s1053, 4
        %s1055 = scalar_lea.vmem %s14, %s1054
        %p1056 = pneg %p430
        %p1057 = pneg %p427
        %s1058 = sand.u32 %s50, 1
        %s1059 = scalar_lea.sflag [#allocation23], %s1058
        %s1060 = sand.u32 %s443, 1
        %s1061 = smul.addr %s1060, 256
        %s1062 = scalar_lea.vmem [#allocation24], %s1061
        %p1063 = pneg %p456
        %p1064 = pneg %p453
        %p1065 = scmp.lt.s32.totalorder %s50, 1
        %s1066 = scalar_select %p1065, %s50, 1
        %s1067 = scalar_lea.vmem %s16, %s1066
        %p1068 = pneg %p482
        %p1069 = pneg %p479
        %p1070 = pneg %p503
        %p1071 = pneg %p500
        %p1072 = pneg %p524
        %p1073 = pneg %p521
        %p1074 = pneg %p545
        %p1075 = pneg %p542
        %p1076 = scmp.lt.s32.totalorder %s50, 1
        %s1077 = scalar_select %p1076, %s50, 1
        %s1078 = scalar_lea.vmem %s4, %s1077
        %p1079 = scmp.lt.s32.totalorder %s50, 1
        %s1080 = scalar_select %p1079, %s50, 1
        %s1081 = scalar_lea.vmem %s6, %s1080
        %p1082 = scmp.lt.s32.totalorder %s50, 1
        %s1083 = scalar_select %p1082, %s50, 1
        %s1084 = smul.addr %s1083, 4
        %s1085 = scalar_lea.vmem %s14, %s1084
        %p1086 = scmp.lt.s32.totalorder %s50, 1
        %s1087 = scalar_select %p1086, %s50, 1
        %s1088 = scalar_lea.vmem %s16, %s1087
        %p1089 = scmp.eq.s32.totalorder %s50, 0
        // Predicated region
        $region149: #{tpu_custom_call.1} parent=95 // pred_check
          %p1090 = pneg %p1089
        $region150: #{tpu_custom_call.1} parent=95 // pred_check_branch
          %1092 = sbr.rel (%p1090) target = $region152
        $region151: #{tpu_custom_call.1} parent=95 // pred_region
          %v1093 = vld [vmem:[#allocation4] sm:$0xff]
          %v1094 = vld [vmem:[#allocation4 + $0x8] sm:$0xff]
          %v1095 = vld [vmem:[#allocation4 + $0x10] sm:$0xff]
          %v1096 = vld [vmem:[#allocation4 + $0x18] sm:$0xff]
          %1097 = vst [vmem:[#allocation2] sm:$0xff] %v1093
          %1098 = vst [vmem:[#allocation2 + $0x8] sm:$0xff] %v1094
          %1099 = vst [vmem:[#allocation2 + $0x10] sm:$0xff] %v1095
          %1100 = vst [vmem:[#allocation2 + $0x18] sm:$0xff] %v1096
        $region152: #{tpu_custom_call.1} parent=95 // pred_fallthru
          _
        %v1101 = vld [vmem:[#allocation2] sm:$0xff]
        %v1102 = vld [vmem:[#allocation2 + $0x8] sm:$0xff]
        %v1103 = vld [vmem:[#allocation2 + $0x10] sm:$0xff]
        %v1104 = vld [vmem:[#allocation2 + $0x18] sm:$0xff]
        %v1105 = vlaneseq
        %v1106 = vshrl.u32 %v1105, 7
        %v1107 = vadd.s32 %v1106, 8
        %v1108 = vlaneseq
        %v1109 = vand.u32 %v1108, 127
        %vm1110 = vcmp.le.s32.totalorder %v1109, %v1106
        %vm1111 = vcmp.le.s32.totalorder %v1109, %v1107
        %v1112 = vld [vmem:[%s858] sm:$0x1]
        %v1113 = vld [vmem:[%s867] sm:$0x1]
        %1114 = vadd.xlane.f32.xlu0 %v1101
        %v1115 = vpop.xlane.xlu0 %1114
        %1116 = vadd.xlane.f32.xlu0 %v1102
        %v1117 = vpop.xlane.xlu0 %1116
        %1118 = vadd.xlane.f32.xlu0 %v1103
        %v1119 = vpop.xlane.xlu0 %1118
        %1120 = vadd.xlane.f32.xlu0 %v1104
        %v1121 = vpop.xlane.xlu0 %1120
        %v1122 = vrcp.pop 128.0
        %v1123 = vmul.f32 128.0, %v1122
        %v1124 = vsub.f32 1.0, %v1123
        %v1125 = vmul.f32 %v1122, %v1124
        %v1126 = vadd.f32 %v1122, %v1125
        %vm1127 = vweird.f32 %v1122
        %v1128 = vsel %vm1127, %v1122, %v1126
        %v1129 = vmul.f32 %v1115, %v1128
        %v1130 = vmul.f32 %v1117, %v1128
        %v1131 = vmul.f32 %v1119, %v1128
        %v1132 = vmul.f32 %v1121, %v1128
        %v1133 = vsub.f32 %v1101, %v1129
        %v1134 = vsub.f32 %v1102, %v1130
        %v1135 = vsub.f32 %v1103, %v1131
        %v1136 = vsub.f32 %v1104, %v1132
        %v1137 = vmul.f32 %v1133, %v1133
        %v1138 = vmul.f32 %v1134, %v1134
        %v1139 = vmul.f32 %v1135, %v1135
        %v1140 = vmul.f32 %v1136, %v1136
        %1141 = vadd.xlane.f32.xlu0 %v1137
        %v1142 = vpop.xlane.xlu0 %1141
        %1143 = vadd.xlane.f32.xlu0 %v1138
        %v1144 = vpop.xlane.xlu0 %1143
        %1145 = vadd.xlane.f32.xlu0 %v1139
        %v1146 = vpop.xlane.xlu0 %1145
        %1147 = vadd.xlane.f32.xlu0 %v1140
        %v1148 = vpop.xlane.xlu0 %1147
        %v1149 = vmul.f32 %v1142, %v1128
        %v1150 = vmul.f32 %v1144, %v1128
        %v1151 = vmul.f32 %v1146, %v1128
        %v1152 = vmul.f32 %v1148, %v1128
        %v1153 = vadd.f32 %v1149, 1e-05
        %v1154 = vadd.f32 %v1150, 1e-05
        %v1155 = vadd.f32 %v1151, 1e-05
        %v1156 = vadd.f32 %v1152, 1e-05
        %v1157 = vrsqrt.pop %v1153
        %v1158 = vmul.f32 %v1157, %v1153
        %v1159 = vmul.f32 %v1158, %v1157
        %v1160 = vmul.f32 0.5, %v1159
        %v1161 = vsub.f32 1.5, %v1160
        %v1162 = vmul.f32 %v1157, %v1161
        %vm1163 = vweird.f32 %v1153
        %vm1164 = vweird.f32 %v1157
        %vm1165 = vmor %vm1163, %vm1164
        %v1166 = vsel %vm1165, %v1157, %v1162
        %v1167 = vrsqrt.pop %v1154
        %v1168 = vmul.f32 %v1167, %v1154
        %v1169 = vmul.f32 %v1168, %v1167
        %v1170 = vmul.f32 0.5, %v1169
        %v1171 = vsub.f32 1.5, %v1170
        %v1172 = vmul.f32 %v1167, %v1171
        %vm1173 = vweird.f32 %v1154
        %vm1174 = vweird.f32 %v1167
        %vm1175 = vmor %vm1173, %vm1174
        %v1176 = vsel %vm1175, %v1167, %v1172
        %v1177 = vrsqrt.pop %v1155
        %v1178 = vmul.f32 %v1177, %v1155
        %v1179 = vmul.f32 %v1178, %v1177
        %v1180 = vmul.f32 0.5, %v1179
        %v1181 = vsub.f32 1.5, %v1180
        %v1182 = vmul.f32 %v1177, %v1181
        %vm1183 = vweird.f32 %v1155
        %vm1184 = vweird.f32 %v1177
        %vm1185 = vmor %vm1183, %vm1184
        %v1186 = vsel %vm1185, %v1177, %v1182
        %v1187 = vrsqrt.pop %v1156
        %v1188 = vmul.f32 %v1187, %v1156
        %v1189 = vmul.f32 %v1188, %v1187
        %v1190 = vmul.f32 0.5, %v1189
        %v1191 = vsub.f32 1.5, %v1190
        %v1192 = vmul.f32 %v1187, %v1191
        %vm1193 = vweird.f32 %v1156
        %vm1194 = vweird.f32 %v1187
        %vm1195 = vmor %vm1193, %vm1194
        %v1196 = vsel %vm1195, %v1187, %v1192
        %v1197 = vmul.f32 %v1133, %v1166
        %v1198 = vmul.f32 %v1134, %v1176
        %v1199 = vmul.f32 %v1135, %v1186
        %v1200 = vmul.f32 %v1136, %v1196
        %v1202 = vperm.slane %v1112, 0
        %v1204 = vmul.f32 %v1197, %v1202
        %v1205 = vmul.f32 %v1198, %v1202
        %v1206 = vmul.f32 %v1199, %v1202
        %v1207 = vmul.f32 %v1200, %v1202
        %v1209 = vperm.slane %v1113, 0
        %v1211 = vadd.f32 %v1204, %v1209
        %v1212 = vadd.f32 %v1205, %v1209
        %v1213 = vadd.f32 %v1206, %v1209
        %v1214 = vadd.f32 %v1207, %v1209
        %v1215 = vpack.c.bf16 %v1212, %v1211
        %v1216 = vpack.c.bf16 %v1214, %v1213
        %v1217 = vld [vmem:[%s877] sm:$0xf]
        %v1218 = vld [vmem:[%s877 + $0x4] sm:$0xf]
        %v1219 = vld [vmem:[%s877 + $0x8] sm:$0xf]
        %v1220 = vld [vmem:[%s877 + $0xc] sm:$0xf]
        %v1221 = vld [vmem:[%s877 + $0x10] sm:$0xf]
        %v1222 = vld [vmem:[%s877 + $0x14] sm:$0xf]
        %v1223 = vld [vmem:[%s877 + $0x18] sm:$0xf]
        %v1224 = vld [vmem:[%s877 + $0x1c] sm:$0xf]
        %v1225 = vld [vmem:[%s877 + $0x20] sm:$0xf]
        %v1226 = vld [vmem:[%s877 + $0x24] sm:$0xf]
        %v1227 = vld [vmem:[%s877 + $0x28] sm:$0xf]
        %v1228 = vld [vmem:[%s877 + $0x2c] sm:$0xf]
        %v1229 = vld [vmem:[%s877 + $0x30] sm:$0xf]
        %v1230 = vld [vmem:[%s877 + $0x34] sm:$0xf]
        %v1231 = vld [vmem:[%s877 + $0x38] sm:$0xf]
        %v1232 = vld [vmem:[%s877 + $0x3c] sm:$0xf]
        %v1233 = vld [vmem:[%s1078] sm:$0x1]
        %v1235 = vperm.slane %v1233, 0
        %v1253 = vunpack.c.l.b16 %v1217
        %v1254 = vunpack.c.l.b16 %v1218
        %v1255 = vunpack.c.l.b16 %v1219
        %v1256 = vunpack.c.l.b16 %v1220
        %v1257 = vunpack.c.l.b16 %v1221
        %v1258 = vunpack.c.l.b16 %v1222
        %v1259 = vunpack.c.l.b16 %v1223
        %v1260 = vunpack.c.l.b16 %v1224
        %v1261 = vunpack.c.l.b16 %v1225
        %v1262 = vunpack.c.l.b16 %v1226
        %v1263 = vunpack.c.l.b16 %v1227
        %v1264 = vunpack.c.l.b16 %v1228
        %v1265 = vunpack.c.l.b16 %v1229
        %v1266 = vunpack.c.l.b16 %v1230
        %v1267 = vunpack.c.l.b16 %v1231
        %v1268 = vunpack.c.l.b16 %v1232
        %v1269 = vpack.c.b16 %v1254, %v1253
        %v1270 = vpack.c.b16 %v1256, %v1255
        %v1271 = vpack.c.b16 %v1258, %v1257
        %v1272 = vpack.c.b16 %v1260, %v1259
        %v1273 = vpack.c.b16 %v1262, %v1261
        %v1274 = vpack.c.b16 %v1264, %v1263
        %v1275 = vpack.c.b16 %v1266, %v1265
        %v1276 = vpack.c.b16 %v1268, %v1267
        %1285 = vmatpush.bf16.msra.mxu0 %v1276
        %1286 = vmatpush.bf16.msra.mxu0 %v1275
        %1287 = vmatpush.bf16.msra.mxu0 %v1274
        %1288 = vmatpush.bf16.msra.mxu0 %v1273
        %1289 = vmatpush.bf16.msra.mxu0 %v1272
        %1290 = vmatpush.bf16.msra.mxu0 %v1271
        %1291 = vmatpush.bf16.msra.mxu0 %v1270
        %1292 = vmatpush.bf16.msra.mxu0 %v1269
        %1293 = vmatmul.bf16.gmra.mxu0 %v1215
        %v1294 = vpop.f32.mrf.mxu0
        %v1295 = vadd.f32 %v1235, %v1294
        %v1296 = vpop.f32.mrf.mxu0
        %v1297 = vadd.f32 %v1235, %v1296
        %1298 = vmatmul.bf16.gmra.mxu0 %v1216
        %v1299 = vpop.f32.mrf.mxu0
        %v1300 = vadd.f32 %v1235, %v1299
        %v1301 = vpop.f32.mrf.mxu0
        %v1302 = vadd.f32 %v1235, %v1301
        %1303 = vdwg.mxu0
        %v1304 = vld [vmem:[%s887] sm:$0xf]
        %v1305 = vld [vmem:[%s887 + $0x4] sm:$0xf]
        %v1306 = vld [vmem:[%s887 + $0x8] sm:$0xf]
        %v1307 = vld [vmem:[%s887 + $0xc] sm:$0xf]
        %v1308 = vld [vmem:[%s887 + $0x10] sm:$0xf]
        %v1309 = vld [vmem:[%s887 + $0x14] sm:$0xf]
        %v1310 = vld [vmem:[%s887 + $0x18] sm:$0xf]
        %v1311 = vld [vmem:[%s887 + $0x1c] sm:$0xf]
        %v1312 = vld [vmem:[%s887 + $0x20] sm:$0xf]
        %v1313 = vld [vmem:[%s887 + $0x24] sm:$0xf]
        %v1314 = vld [vmem:[%s887 + $0x28] sm:$0xf]
        %v1315 = vld [vmem:[%s887 + $0x2c] sm:$0xf]
        %v1316 = vld [vmem:[%s887 + $0x30] sm:$0xf]
        %v1317 = vld [vmem:[%s887 + $0x34] sm:$0xf]
        %v1318 = vld [vmem:[%s887 + $0x38] sm:$0xf]
        %v1319 = vld [vmem:[%s887 + $0x3c] sm:$0xf]
        %v1320 = vld [vmem:[%s1081] sm:$0x1]
        %v1322 = vperm.slane %v1320, 0
        %v1340 = vunpack.c.l.b16 %v1304
        %v1341 = vunpack.c.l.b16 %v1305
        %v1342 = vunpack.c.l.b16 %v1306
        %v1343 = vunpack.c.l.b16 %v1307
        %v1344 = vunpack.c.l.b16 %v1308
        %v1345 = vunpack.c.l.b16 %v1309
        %v1346 = vunpack.c.l.b16 %v1310
        %v1347 = vunpack.c.l.b16 %v1311
        %v1348 = vunpack.c.l.b16 %v1312
        %v1349 = vunpack.c.l.b16 %v1313
        %v1350 = vunpack.c.l.b16 %v1314
        %v1351 = vunpack.c.l.b16 %v1315
        %v1352 = vunpack.c.l.b16 %v1316
        %v1353 = vunpack.c.l.b16 %v1317
        %v1354 = vunpack.c.l.b16 %v1318
        %v1355 = vunpack.c.l.b16 %v1319
        %v1356 = vpack.c.b16 %v1341, %v1340
        %v1357 = vpack.c.b16 %v1343, %v1342
        %v1358 = vpack.c.b16 %v1345, %v1344
        %v1359 = vpack.c.b16 %v1347, %v1346
        %v1360 = vpack.c.b16 %v1349, %v1348
        %v1361 = vpack.c.b16 %v1351, %v1350
        %v1362 = vpack.c.b16 %v1353, %v1352
        %v1363 = vpack.c.b16 %v1355, %v1354
        %1372 = vmatpush.bf16.msra.mxu0 %v1363
        %1373 = vmatpush.bf16.msra.mxu0 %v1362
        %1374 = vmatpush.bf16.msra.mxu0 %v1361
        %1375 = vmatpush.bf16.msra.mxu0 %v1360
        %1376 = vmatpush.bf16.msra.mxu0 %v1359
        %1377 = vmatpush.bf16.msra.mxu0 %v1358
        %1378 = vmatpush.bf16.msra.mxu0 %v1357
        %1379 = vmatpush.bf16.msra.mxu0 %v1356
        %1380 = vmatmul.bf16.gmra.mxu0 %v1215
        %v1381 = vpop.f32.mrf.mxu0
        %v1382 = vadd.f32 %v1322, %v1381
        %v1383 = vpop.f32.mrf.mxu0
        %v1384 = vadd.f32 %v1322, %v1383
        %1385 = vmatmul.bf16.gmra.mxu0 %v1216
        %v1386 = vpop.f32.mrf.mxu0
        %v1387 = vadd.f32 %v1322, %v1386
        %v1388 = vpop.f32.mrf.mxu0
        %v1389 = vadd.f32 %v1322, %v1388
        %1390 = vdwg.mxu0
        %v1391 = vld [vmem:[%s897] sm:$0xf]
        %v1392 = vld [vmem:[%s897 + $0x4] sm:$0xf]
        %v1393 = vld [vmem:[%s897 + $0x8] sm:$0xf]
        %v1394 = vld [vmem:[%s897 + $0xc] sm:$0xf]
        %v1395 = vld [vmem:[%s897 + $0x10] sm:$0xf]
        %v1396 = vld [vmem:[%s897 + $0x14] sm:$0xf]
        %v1397 = vld [vmem:[%s897 + $0x18] sm:$0xf]
        %v1398 = vld [vmem:[%s897 + $0x1c] sm:$0xf]
        %v1399 = vld [vmem:[%s897 + $0x20] sm:$0xf]
        %v1400 = vld [vmem:[%s897 + $0x24] sm:$0xf]
        %v1401 = vld [vmem:[%s897 + $0x28] sm:$0xf]
        %v1402 = vld [vmem:[%s897 + $0x2c] sm:$0xf]
        %v1403 = vld [vmem:[%s897 + $0x30] sm:$0xf]
        %v1404 = vld [vmem:[%s897 + $0x34] sm:$0xf]
        %v1405 = vld [vmem:[%s897 + $0x38] sm:$0xf]
        %v1406 = vld [vmem:[%s897 + $0x3c] sm:$0xf]
        %v1407 = vld [vmem:[%s906] sm:$0x1]
        %v1409 = vperm.slane %v1407, 0
        %v1427 = vunpack.c.l.b16 %v1391
        %v1428 = vunpack.c.l.b16 %v1392
        %v1429 = vunpack.c.l.b16 %v1393
        %v1430 = vunpack.c.l.b16 %v1394
        %v1431 = vunpack.c.l.b16 %v1395
        %v1432 = vunpack.c.l.b16 %v1396
        %v1433 = vunpack.c.l.b16 %v1397
        %v1434 = vunpack.c.l.b16 %v1398
        %v1435 = vunpack.c.l.b16 %v1399
        %v1436 = vunpack.c.l.b16 %v1400
        %v1437 = vunpack.c.l.b16 %v1401
        %v1438 = vunpack.c.l.b16 %v1402
        %v1439 = vunpack.c.l.b16 %v1403
        %v1440 = vunpack.c.l.b16 %v1404
        %v1441 = vunpack.c.l.b16 %v1405
        %v1442 = vunpack.c.l.b16 %v1406
        %v1443 = vpack.c.b16 %v1428, %v1427
        %v1444 = vpack.c.b16 %v1430, %v1429
        %v1445 = vpack.c.b16 %v1432, %v1431
        %v1446 = vpack.c.b16 %v1434, %v1433
        %v1447 = vpack.c.b16 %v1436, %v1435
        %v1448 = vpack.c.b16 %v1438, %v1437
        %v1449 = vpack.c.b16 %v1440, %v1439
        %v1450 = vpack.c.b16 %v1442, %v1441
        %1459 = vmatpush.bf16.msra.mxu0 %v1450
        %1460 = vmatpush.bf16.msra.mxu0 %v1449
        %1461 = vmatpush.bf16.msra.mxu0 %v1448
        %1462 = vmatpush.bf16.msra.mxu0 %v1447
        %1463 = vmatpush.bf16.msra.mxu0 %v1446
        %1464 = vmatpush.bf16.msra.mxu0 %v1445
        %1465 = vmatpush.bf16.msra.mxu0 %v1444
        %1466 = vmatpush.bf16.msra.mxu0 %v1443
        %1467 = vmatmul.bf16.gmra.mxu0 %v1215
        %v1468 = vpop.f32.mrf.mxu0
        %v1469 = vadd.f32 %v1409, %v1468
        %v1470 = vpop.f32.mrf.mxu0
        %v1471 = vadd.f32 %v1409, %v1470
        %1472 = vmatmul.bf16.gmra.mxu0 %v1216
        %v1473 = vpop.f32.mrf.mxu0
        %v1474 = vadd.f32 %v1409, %v1473
        %v1475 = vpop.f32.mrf.mxu0
        %v1476 = vadd.f32 %v1409, %v1475
        %1477 = vdwg.mxu0
        %vm1478 = vcmask 523264
        %v1480 = vsel %vm1478, %v1295, 0
        %v1483 = vsel %vm1478, %v1297, 0
        %v1486 = vsel %vm1478, %v1382, 0
        %v1489 = vsel %vm1478, %v1384, 0
        %1491 = vmatpush.xpose.msra.mxu0 0.0
        %1492 = vmatpush.xpose.msra.mxu0 0.0
        %1493 = vmatpush.xpose.msra.mxu0 0.0
        %1494 = vmatpush.xpose.msra.mxu0 0.0
        %1495 = vmatpush.xpose.msra.mxu0 0.0
        %1496 = vmatpush.xpose.msra.mxu0 0.0
        %1497 = vmatpush.xpose.msra.mxu0 0.0
        %1498 = vmatpush.xpose.msra.mxu0 0.0
        %1499 = vmatpush.xpose.msra.mxu0 0.0
        %1500 = vmatpush.xpose.msra.mxu0 0.0
        %1501 = vmatpush.xpose.msra.mxu0 0.0
        %1502 = vmatpush.xpose.msra.mxu0 0.0
        %1503 = vmatpush.xpose.msra.mxu0 0.0
        %1504 = vmatpush.xpose.msra.mxu0 0.0
        %1505 = vmatpush.xpose.msra.mxu0 %v1489
        %1506 = vmatpush.xpose.msra.mxu0 %v1486
        %1507 = vmatmul.f32.gmra.mxu0 %v1480
        %v1508 = vpop.f32.mrf.mxu0
        %v1509 = vadd.f32 0.0, %v1508
        %1510 = vmatmul.f32.gmra.mxu0 %v1483
        %v1511 = vpop.f32.mrf.mxu0
        %v1512 = vadd.f32 0.0, %v1511
        %1513 = vdwg.mxu0
        %v1515 = vsel %vm1478, %v1300, 0
        %v1518 = vsel %vm1478, %v1302, 0
        %v1521 = vsel %vm1478, %v1387, 0
        %v1524 = vsel %vm1478, %v1389, 0
        %1526 = vmatpush.xpose.msra.mxu0 0.0
        %1527 = vmatpush.xpose.msra.mxu0 0.0
        %1528 = vmatpush.xpose.msra.mxu0 0.0
        %1529 = vmatpush.xpose.msra.mxu0 0.0
        %1530 = vmatpush.xpose.msra.mxu0 0.0
        %1531 = vmatpush.xpose.msra.mxu0 0.0
        %1532 = vmatpush.xpose.msra.mxu0 0.0
        %1533 = vmatpush.xpose.msra.mxu0 0.0
        %1534 = vmatpush.xpose.msra.mxu0 0.0
        %1535 = vmatpush.xpose.msra.mxu0 0.0
        %1536 = vmatpush.xpose.msra.mxu0 0.0
        %1537 = vmatpush.xpose.msra.mxu0 0.0
        %1538 = vmatpush.xpose.msra.mxu0 0.0
        %1539 = vmatpush.xpose.msra.mxu0 0.0
        %1540 = vmatpush.xpose.msra.mxu0 %v1524
        %1541 = vmatpush.xpose.msra.mxu0 %v1521
        %1542 = vmatmul.f32.gmra.mxu0 %v1515
        %v1543 = vpop.f32.mrf.mxu0
        %v1544 = vadd.f32 0.0, %v1543
        %1545 = vmatmul.f32.gmra.mxu0 %v1518
        %v1546 = vpop.f32.mrf.mxu0
        %v1547 = vadd.f32 0.0, %v1546
        %1548 = vdwg.mxu0
        %v1549 = vmul.f32 %v1509, 0.125
        %v1550 = vmul.f32 %v1512, 0.125
        %v1551 = vmul.f32 %v1544, 0.125
        %v1552 = vmul.f32 %v1547, 0.125
        %v1553 = vsel %vm1110, %v1549, -1e+09
        %v1554 = vsel %vm1111, %v1550, -1e+09
        %v1555 = vsel %vm1110, %v1551, -1e+09
        %v1556 = vsel %vm1111, %v1552, -1e+09
        %vm1557 = vcmask 130048
        %v1558 = vsel %vm1557, %v1553, -inf
        %1559 = vmax.xlane.f32.xlu0 %v1558
        %v1560 = vpop.xlane.xlu0 %1559
        %v1561 = vsel %vm1557, %v1554, -inf
        %1562 = vmax.xlane.f32.xlu0 %v1561
        %v1563 = vpop.xlane.xlu0 %1562
        %v1564 = vsel %vm1557, %v1555, -inf
        %1565 = vmax.xlane.f32.xlu0 %v1564
        %v1566 = vpop.xlane.xlu0 %1565
        %v1567 = vsel %vm1557, %v1556, -inf
        %1568 = vmax.xlane.f32.xlu0 %v1567
        %v1569 = vpop.xlane.xlu0 %1568
        %v1570 = vsub.f32 %v1553, %v1560
        %v1571 = vsub.f32 %v1554, %v1563
        %v1572 = vsub.f32 %v1555, %v1566
        %v1573 = vsub.f32 %v1556, %v1569
        %v1574 = vmul.f32 %v1570, 1.442695
        %v1575 = vpow.pop %v1574
        %v1576 = vmul.f32 %v1571, 1.442695
        %v1577 = vpow.pop %v1576
        %v1578 = vmul.f32 %v1572, 1.442695
        %v1579 = vpow.pop %v1578
        %v1580 = vmul.f32 %v1573, 1.442695
        %v1581 = vpow.pop %v1580
        %v1582 = vsel %vm1557, %v1575, 0.0
        %1583 = vadd.xlane.f32.xlu0 %v1582
        %v1584 = vpop.xlane.xlu0 %1583
        %v1585 = vsel %vm1557, %v1577, 0.0
        %1586 = vadd.xlane.f32.xlu0 %v1585
        %v1587 = vpop.xlane.xlu0 %1586
        %v1588 = vsel %vm1557, %v1579, 0.0
        %1589 = vadd.xlane.f32.xlu0 %v1588
        %v1590 = vpop.xlane.xlu0 %1589
        %v1591 = vsel %vm1557, %v1581, 0.0
        %1592 = vadd.xlane.f32.xlu0 %v1591
        %v1593 = vpop.xlane.xlu0 %1592
        %v1594 = vrcp.pop %v1584
        %v1595 = vrcp.pop %v1587
        %v1596 = vrcp.pop %v1590
        %v1597 = vrcp.pop %v1593
        %v1598 = vmul.f32 %v1575, %v1594
        %v1599 = vmul.f32 %v1577, %v1595
        %v1600 = vmul.f32 %v1579, %v1596
        %v1601 = vmul.f32 %v1581, %v1597
        %v1603 = vsel %vm1557, %v1598, 0
        %v1606 = vsel %vm1557, %v1599, 0
        %1608 = vmatpush.msra.mxu0 0.0
        %1609 = vmatpush.msra.mxu0 0.0
        %1610 = vmatpush.msra.mxu0 0.0
        %1611 = vmatpush.msra.mxu0 0.0
        %1612 = vmatpush.msra.mxu0 0.0
        %1613 = vmatpush.msra.mxu0 0.0
        %1614 = vmatpush.msra.mxu0 0.0
        %1615 = vmatpush.msra.mxu0 0.0
        %1616 = vmatpush.msra.mxu0 0.0
        %1617 = vmatpush.msra.mxu0 0.0
        %1618 = vmatpush.msra.mxu0 0.0
        %1619 = vmatpush.msra.mxu0 0.0
        %1620 = vmatpush.msra.mxu0 0.0
        %1621 = vmatpush.msra.mxu0 0.0
        %1622 = vmatpush.msra.mxu0 %v1471
        %1623 = vmatpush.msra.mxu0 %v1469
        %1624 = vmatmul.f32.gmra.mxu0 %v1603
        %v1625 = vpop.f32.mrf.mxu0
        %v1626 = vadd.f32 0.0, %v1625
        %1627 = vmatmul.f32.gmra.mxu0 %v1606
        %v1628 = vpop.f32.mrf.mxu0
        %v1629 = vadd.f32 0.0, %v1628
        %1630 = vdwg.mxu0
        %v1632 = vsel %vm1557, %v1600, 0
        %v1635 = vsel %vm1557, %v1601, 0
        %1637 = vmatpush.msra.mxu0 0.0
        %1638 = vmatpush.msra.mxu0 0.0
        %1639 = vmatpush.msra.mxu0 0.0
        %1640 = vmatpush.msra.mxu0 0.0
        %1641 = vmatpush.msra.mxu0 0.0
        %1642 = vmatpush.msra.mxu0 0.0
        %1643 = vmatpush.msra.mxu0 0.0
        %1644 = vmatpush.msra.mxu0 0.0
        %1645 = vmatpush.msra.mxu0 0.0
        %1646 = vmatpush.msra.mxu0 0.0
        %1647 = vmatpush.msra.mxu0 0.0
        %1648 = vmatpush.msra.mxu0 0.0
        %1649 = vmatpush.msra.mxu0 0.0
        %1650 = vmatpush.msra.mxu0 0.0
        %1651 = vmatpush.msra.mxu0 %v1476
        %1652 = vmatpush.msra.mxu0 %v1474
        %1653 = vmatmul.f32.gmra.mxu0 %v1632
        %v1654 = vpop.f32.mrf.mxu0
        %v1655 = vadd.f32 0.0, %v1654
        %1656 = vmatmul.f32.gmra.mxu0 %v1635
        %v1657 = vpop.f32.mrf.mxu0
        %v1658 = vadd.f32 0.0, %v1657
        %1659 = vdwg.mxu0
        %1660 = vst.msk [vmem:[#allocation3] sm:$0xff] %vm1478, %v1626
        %1661 = vst.msk [vmem:[#allocation3 + $0x8] sm:$0xff] %vm1478, %v1629
        %1662 = vst.msk [vmem:[#allocation3 + $0x10] sm:$0xff] %vm1478, %v1655
        %1663 = vst.msk [vmem:[#allocation3 + $0x18] sm:$0xff] %vm1478, %v1658
        %1664 = vrot.lane.b32.xlu0 %v1295, 64
        %v1665 = vpop.permute.xlu0 %1664
        %1666 = vrot.lane.b32.xlu0 %v1297, 64
        %v1667 = vpop.permute.xlu0 %1666
        %1668 = vrot.lane.b32.xlu0 %v1382, 64
        %v1669 = vpop.permute.xlu0 %1668
        %1670 = vrot.lane.b32.xlu0 %v1384, 64
        %v1671 = vpop.permute.xlu0 %1670
        %v1672 = vsel %vm1478, %v1665, 0
        %v1674 = vsel %vm1478, %v1667, 0
        %v1676 = vsel %vm1478, %v1669, 0
        %v1678 = vsel %vm1478, %v1671, 0
        %1680 = vmatpush.xpose.msra.mxu0 0.0
        %1681 = vmatpush.xpose.msra.mxu0 0.0
        %1682 = vmatpush.xpose.msra.mxu0 0.0
        %1683 = vmatpush.xpose.msra.mxu0 0.0
        %1684 = vmatpush.xpose.msra.mxu0 0.0
        %1685 = vmatpush.xpose.msra.mxu0 0.0
        %1686 = vmatpush.xpose.msra.mxu0 0.0
        %1687 = vmatpush.xpose.msra.mxu0 0.0
        %1688 = vmatpush.xpose.msra.mxu0 0.0
        %1689 = vmatpush.xpose.msra.mxu0 0.0
        %1690 = vmatpush.xpose.msra.mxu0 0.0
        %1691 = vmatpush.xpose.msra.mxu0 0.0
        %1692 = vmatpush.xpose.msra.mxu0 0.0
        %1693 = vmatpush.xpose.msra.mxu0 0.0
        %1694 = vmatpush.xpose.msra.mxu0 %v1678
        %1695 = vmatpush.xpose.msra.mxu0 %v1676
        %1696 = vmatmul.f32.gmra.mxu0 %v1672
        %v1697 = vpop.f32.mrf.mxu0
        %v1698 = vadd.f32 0.0, %v1697
        %1699 = vmatmul.f32.gmra.mxu0 %v1674
        %v1700 = vpop.f32.mrf.mxu0
        %v1701 = vadd.f32 0.0, %v1700
        %1702 = vdwg.mxu0
        %1703 = vrot.lane.b32.xlu0 %v1300, 64
        %v1704 = vpop.permute.xlu0 %1703
        %1705 = vrot.lane.b32.xlu0 %v1302, 64
        %v1706 = vpop.permute.xlu0 %1705
        %1707 = vrot.lane.b32.xlu0 %v1387, 64
        %v1708 = vpop.permute.xlu0 %1707
        %1709 = vrot.lane.b32.xlu0 %v1389, 64
        %v1710 = vpop.permute.xlu0 %1709
        %v1711 = vsel %vm1478, %v1704, 0
        %v1713 = vsel %vm1478, %v1706, 0
        %v1715 = vsel %vm1478, %v1708, 0
        %v1717 = vsel %vm1478, %v1710, 0
        %1719 = vmatpush.xpose.msra.mxu0 0.0
        %1720 = vmatpush.xpose.msra.mxu0 0.0
        %1721 = vmatpush.xpose.msra.mxu0 0.0
        %1722 = vmatpush.xpose.msra.mxu0 0.0
        %1723 = vmatpush.xpose.msra.mxu0 0.0
        %1724 = vmatpush.xpose.msra.mxu0 0.0
        %1725 = vmatpush.xpose.msra.mxu0 0.0
        %1726 = vmatpush.xpose.msra.mxu0 0.0
        %1727 = vmatpush.xpose.msra.mxu0 0.0
        %1728 = vmatpush.xpose.msra.mxu0 0.0
        %1729 = vmatpush.xpose.msra.mxu0 0.0
        %1730 = vmatpush.xpose.msra.mxu0 0.0
        %1731 = vmatpush.xpose.msra.mxu0 0.0
        %1732 = vmatpush.xpose.msra.mxu0 0.0
        %1733 = vmatpush.xpose.msra.mxu0 %v1717
        %1734 = vmatpush.xpose.msra.mxu0 %v1715
        %1735 = vmatmul.f32.gmra.mxu0 %v1711
        %v1736 = vpop.f32.mrf.mxu0
        %v1737 = vadd.f32 0.0, %v1736
        %1738 = vmatmul.f32.gmra.mxu0 %v1713
        %v1739 = vpop.f32.mrf.mxu0
        %v1740 = vadd.f32 0.0, %v1739
        %1741 = vdwg.mxu0
        %v1742 = vmul.f32 %v1698, 0.125
        %v1743 = vmul.f32 %v1701, 0.125
        %v1744 = vmul.f32 %v1737, 0.125
        %v1745 = vmul.f32 %v1740, 0.125
        %v1746 = vsel %vm1110, %v1742, -1e+09
        %v1747 = vsel %vm1111, %v1743, -1e+09
        %v1748 = vsel %vm1110, %v1744, -1e+09
        %v1749 = vsel %vm1111, %v1745, -1e+09
        %v1750 = vsel %vm1557, %v1746, -inf
        %1751 = vmax.xlane.f32.xlu0 %v1750
        %v1752 = vpop.xlane.xlu0 %1751
        %v1753 = vsel %vm1557, %v1747, -inf
        %1754 = vmax.xlane.f32.xlu0 %v1753
        %v1755 = vpop.xlane.xlu0 %1754
        %v1756 = vsel %vm1557, %v1748, -inf
        %1757 = vmax.xlane.f32.xlu0 %v1756
        %v1758 = vpop.xlane.xlu0 %1757
        %v1759 = vsel %vm1557, %v1749, -inf
        %1760 = vmax.xlane.f32.xlu0 %v1759
        %v1761 = vpop.xlane.xlu0 %1760
        %v1762 = vsub.f32 %v1746, %v1752
        %v1763 = vsub.f32 %v1747, %v1755
        %v1764 = vsub.f32 %v1748, %v1758
        %v1765 = vsub.f32 %v1749, %v1761
        %v1766 = vmul.f32 %v1762, 1.442695
        %v1767 = vpow.pop %v1766
        %v1768 = vmul.f32 %v1763, 1.442695
        %v1769 = vpow.pop %v1768
        %v1770 = vmul.f32 %v1764, 1.442695
        %v1771 = vpow.pop %v1770
        %v1772 = vmul.f32 %v1765, 1.442695
        %v1773 = vpow.pop %v1772
        %v1774 = vsel %vm1557, %v1767, 0.0
        %1775 = vadd.xlane.f32.xlu0 %v1774
        %v1776 = vpop.xlane.xlu0 %1775
        %v1777 = vsel %vm1557, %v1769, 0.0
        %1778 = vadd.xlane.f32.xlu0 %v1777
        %v1779 = vpop.xlane.xlu0 %1778
        %v1780 = vsel %vm1557, %v1771, 0.0
        %1781 = vadd.xlane.f32.xlu0 %v1780
        %v1782 = vpop.xlane.xlu0 %1781
        %v1783 = vsel %vm1557, %v1773, 0.0
        %1784 = vadd.xlane.f32.xlu0 %v1783
        %v1785 = vpop.xlane.xlu0 %1784
        %v1786 = vrcp.pop %v1776
        %v1787 = vrcp.pop %v1779
        %v1788 = vrcp.pop %v1782
        %v1789 = vrcp.pop %v1785
        %v1790 = vmul.f32 %v1767, %v1786
        %v1791 = vmul.f32 %v1769, %v1787
        %v1792 = vmul.f32 %v1771, %v1788
        %v1793 = vmul.f32 %v1773, %v1789
        %1796 = vrot.lane.b32.xlu0 %v1469, 64
        %v1797 = vpop.permute.xlu0 %1796
        %1798 = vrot.lane.b32.xlu0 %v1471, 64
        %v1799 = vpop.permute.xlu0 %1798
        %v1803 = vsel %vm1557, %v1790, 0
        %v1806 = vsel %vm1557, %v1791, 0
        %1808 = vmatpush.msra.mxu0 0.0
        %1809 = vmatpush.msra.mxu0 0.0
        %1810 = vmatpush.msra.mxu0 0.0
        %1811 = vmatpush.msra.mxu0 0.0
        %1812 = vmatpush.msra.mxu0 0.0
        %1813 = vmatpush.msra.mxu0 0.0
        %1814 = vmatpush.msra.mxu0 0.0
        %1815 = vmatpush.msra.mxu0 0.0
        %1816 = vmatpush.msra.mxu0 0.0
        %1817 = vmatpush.msra.mxu0 0.0
        %1818 = vmatpush.msra.mxu0 0.0
        %1819 = vmatpush.msra.mxu0 0.0
        %1820 = vmatpush.msra.mxu0 0.0
        %1821 = vmatpush.msra.mxu0 0.0
        %1822 = vmatpush.msra.mxu0 %v1799
        %1823 = vmatpush.msra.mxu0 %v1797
        %1824 = vmatmul.f32.gmra.mxu0 %v1803
        %v1825 = vpop.f32.mrf.mxu0
        %v1826 = vadd.f32 0.0, %v1825
        %1827 = vmatmul.f32.gmra.mxu0 %v1806
        %v1828 = vpop.f32.mrf.mxu0
        %v1829 = vadd.f32 0.0, %v1828
        %1830 = vdwg.mxu0
        %1833 = vrot.lane.b32.xlu0 %v1474, 64
        %v1834 = vpop.permute.xlu0 %1833
        %1835 = vrot.lane.b32.xlu0 %v1476, 64
        %v1836 = vpop.permute.xlu0 %1835
        %v1840 = vsel %vm1557, %v1792, 0
        %v1843 = vsel %vm1557, %v1793, 0
        %1845 = vmatpush.msra.mxu0 0.0
        %1846 = vmatpush.msra.mxu0 0.0
        %1847 = vmatpush.msra.mxu0 0.0
        %1848 = vmatpush.msra.mxu0 0.0
        %1849 = vmatpush.msra.mxu0 0.0
        %1850 = vmatpush.msra.mxu0 0.0
        %1851 = vmatpush.msra.mxu0 0.0
        %1852 = vmatpush.msra.mxu0 0.0
        %1853 = vmatpush.msra.mxu0 0.0
        %1854 = vmatpush.msra.mxu0 0.0
        %1855 = vmatpush.msra.mxu0 0.0
        %1856 = vmatpush.msra.mxu0 0.0
        %1857 = vmatpush.msra.mxu0 0.0
        %1858 = vmatpush.msra.mxu0 0.0
        %1859 = vmatpush.msra.mxu0 %v1836
        %1860 = vmatpush.msra.mxu0 %v1834
        %1861 = vmatmul.f32.gmra.mxu0 %v1840
        %v1862 = vpop.f32.mrf.mxu0
        %v1863 = vadd.f32 0.0, %v1862
        %1864 = vmatmul.f32.gmra.mxu0 %v1843
        %v1865 = vpop.f32.mrf.mxu0
        %v1866 = vadd.f32 0.0, %v1865
        %1867 = vdwg.mxu0
        %1872 = vrot.lane.b32.xlu0 %v1826, 64
        %v1873 = vpop.permute.xlu0 %1872
        %1874 = vrot.lane.b32.xlu0 %v1829, 64
        %v1875 = vpop.permute.xlu0 %1874
        %1876 = vrot.lane.b32.xlu0 %v1863, 64
        %v1877 = vpop.permute.xlu0 %1876
        %1878 = vrot.lane.b32.xlu0 %v1866, 64
        %v1879 = vpop.permute.xlu0 %1878
        %vm1884 = vcmask 1048064
        %1885 = vst.msk [vmem:[#allocation3] sm:$0xff] %vm1884, %v1873
        %1886 = vst.msk [vmem:[#allocation3 + $0x8] sm:$0xff] %vm1884, %v1875
        %1887 = vst.msk [vmem:[#allocation3 + $0x10] sm:$0xff] %vm1884, %v1877
        %1888 = vst.msk [vmem:[#allocation3 + $0x18] sm:$0xff] %vm1884, %v1879
        %v1889 = vld [vmem:[#allocation3] sm:$0xff]
        %v1890 = vld [vmem:[#allocation3 + $0x8] sm:$0xff]
        %v1891 = vld [vmem:[#allocation3 + $0x10] sm:$0xff]
        %v1892 = vld [vmem:[#allocation3 + $0x18] sm:$0xff]
        %v1893 = vpack.c.bf16 %v1890, %v1889
        %v1894 = vpack.c.bf16 %v1892, %v1891
        %v1895 = vld [vmem:[%s916] sm:$0xf]
        %v1896 = vld [vmem:[%s916 + $0x4] sm:$0xf]
        %v1897 = vld [vmem:[%s916 + $0x8] sm:$0xf]
        %v1898 = vld [vmem:[%s916 + $0xc] sm:$0xf]
        %v1899 = vld [vmem:[%s916 + $0x10] sm:$0xf]
        %v1900 = vld [vmem:[%s916 + $0x14] sm:$0xf]
        %v1901 = vld [vmem:[%s916 + $0x18] sm:$0xf]
        %v1902 = vld [vmem:[%s916 + $0x1c] sm:$0xf]
        %v1903 = vld [vmem:[%s916 + $0x20] sm:$0xf]
        %v1904 = vld [vmem:[%s916 + $0x24] sm:$0xf]
        %v1905 = vld [vmem:[%s916 + $0x28] sm:$0xf]
        %v1906 = vld [vmem:[%s916 + $0x2c] sm:$0xf]
        %v1907 = vld [vmem:[%s916 + $0x30] sm:$0xf]
        %v1908 = vld [vmem:[%s916 + $0x34] sm:$0xf]
        %v1909 = vld [vmem:[%s916 + $0x38] sm:$0xf]
        %v1910 = vld [vmem:[%s916 + $0x3c] sm:$0xf]
        %v1911 = vld [vmem:[%s925] sm:$0x1]
        %v1913 = vperm.slane %v1911, 0
        %v1931 = vunpack.c.l.b16 %v1895
        %v1932 = vunpack.c.l.b16 %v1896
        %v1933 = vunpack.c.l.b16 %v1897
        %v1934 = vunpack.c.l.b16 %v1898
        %v1935 = vunpack.c.l.b16 %v1899
        %v1936 = vunpack.c.l.b16 %v1900
        %v1937 = vunpack.c.l.b16 %v1901
        %v1938 = vunpack.c.l.b16 %v1902
        %v1939 = vunpack.c.l.b16 %v1903
        %v1940 = vunpack.c.l.b16 %v1904
        %v1941 = vunpack.c.l.b16 %v1905
        %v1942 = vunpack.c.l.b16 %v1906
        %v1943 = vunpack.c.l.b16 %v1907
        %v1944 = vunpack.c.l.b16 %v1908
        %v1945 = vunpack.c.l.b16 %v1909
        %v1946 = vunpack.c.l.b16 %v1910
        %v1947 = vpack.c.b16 %v1932, %v1931
        %v1948 = vpack.c.b16 %v1934, %v1933
        %v1949 = vpack.c.b16 %v1936, %v1935
        %v1950 = vpack.c.b16 %v1938, %v1937
        %v1951 = vpack.c.b16 %v1940, %v1939
        %v1952 = vpack.c.b16 %v1942, %v1941
        %v1953 = vpack.c.b16 %v1944, %v1943
        %v1954 = vpack.c.b16 %v1946, %v1945
        %1963 = vmatpush.bf16.msra.mxu0 %v1954
        %1964 = vmatpush.bf16.msra.mxu0 %v1953
        %1965 = vmatpush.bf16.msra.mxu0 %v1952
        %1966 = vmatpush.bf16.msra.mxu0 %v1951
        %1967 = vmatpush.bf16.msra.mxu0 %v1950
        %1968 = vmatpush.bf16.msra.mxu0 %v1949
        %1969 = vmatpush.bf16.msra.mxu0 %v1948
        %1970 = vmatpush.bf16.msra.mxu0 %v1947
        %1971 = vmatmul.bf16.gmra.mxu0 %v1893
        %v1972 = vpop.f32.mrf.mxu0
        %v1973 = vadd.f32 %v1913, %v1972
        %v1974 = vpop.f32.mrf.mxu0
        %v1975 = vadd.f32 %v1913, %v1974
        %1976 = vmatmul.bf16.gmra.mxu0 %v1894
        %v1977 = vpop.f32.mrf.mxu0
        %v1978 = vadd.f32 %v1913, %v1977
        %v1979 = vpop.f32.mrf.mxu0
        %v1980 = vadd.f32 %v1913, %v1979
        %1981 = vdwg.mxu0
        %v1982 = vadd.f32 %v1101, %v1973
        %v1983 = vadd.f32 %v1102, %v1975
        %v1984 = vadd.f32 %v1103, %v1978
        %v1985 = vadd.f32 %v1104, %v1980
        %v1986 = vld [vmem:[%s934] sm:$0x1]
        %v1987 = vld [vmem:[%s943] sm:$0x1]
        %1988 = vadd.xlane.f32.xlu0 %v1982
        %v1989 = vpop.xlane.xlu0 %1988
        %1990 = vadd.xlane.f32.xlu0 %v1983
        %v1991 = vpop.xlane.xlu0 %1990
        %1992 = vadd.xlane.f32.xlu0 %v1984
        %v1993 = vpop.xlane.xlu0 %1992
        %1994 = vadd.xlane.f32.xlu0 %v1985
        %v1995 = vpop.xlane.xlu0 %1994
        %v1996 = vmul.f32 %v1989, %v1128
        %v1997 = vmul.f32 %v1991, %v1128
        %v1998 = vmul.f32 %v1993, %v1128
        %v1999 = vmul.f32 %v1995, %v1128
        %v2000 = vsub.f32 %v1982, %v1996
        %v2001 = vsub.f32 %v1983, %v1997
        %v2002 = vsub.f32 %v1984, %v1998
        %v2003 = vsub.f32 %v1985, %v1999
        %v2004 = vmul.f32 %v2000, %v2000
        %v2005 = vmul.f32 %v2001, %v2001
        %v2006 = vmul.f32 %v2002, %v2002
        %v2007 = vmul.f32 %v2003, %v2003
        %2008 = vadd.xlane.f32.xlu0 %v2004
        %v2009 = vpop.xlane.xlu0 %2008
        %2010 = vadd.xlane.f32.xlu0 %v2005
        %v2011 = vpop.xlane.xlu0 %2010
        %2012 = vadd.xlane.f32.xlu0 %v2006
        %v2013 = vpop.xlane.xlu0 %2012
        %2014 = vadd.xlane.f32.xlu0 %v2007
        %v2015 = vpop.xlane.xlu0 %2014
        %v2016 = vmul.f32 %v2009, %v1128
        %v2017 = vmul.f32 %v2011, %v1128
        %v2018 = vmul.f32 %v2013, %v1128
        %v2019 = vmul.f32 %v2015, %v1128
        %v2020 = vadd.f32 %v2016, 1e-05
        %v2021 = vadd.f32 %v2017, 1e-05
        %v2022 = vadd.f32 %v2018, 1e-05
        %v2023 = vadd.f32 %v2019, 1e-05
        %v2024 = vrsqrt.pop %v2020
        %v2025 = vmul.f32 %v2024, %v2020
        %v2026 = vmul.f32 %v2025, %v2024
        %v2027 = vmul.f32 0.5, %v2026
        %v2028 = vsub.f32 1.5, %v2027
        %v2029 = vmul.f32 %v2024, %v2028
        %vm2030 = vweird.f32 %v2020
        %vm2031 = vweird.f32 %v2024
        %vm2032 = vmor %vm2030, %vm2031
        %v2033 = vsel %vm2032, %v2024, %v2029
        %v2034 = vrsqrt.pop %v2021
        %v2035 = vmul.f32 %v2034, %v2021
        %v2036 = vmul.f32 %v2035, %v2034
        %v2037 = vmul.f32 0.5, %v2036
        %v2038 = vsub.f32 1.5, %v2037
        %v2039 = vmul.f32 %v2034, %v2038
        %vm2040 = vweird.f32 %v2021
        %vm2041 = vweird.f32 %v2034
        %vm2042 = vmor %vm2040, %vm2041
        %v2043 = vsel %vm2042, %v2034, %v2039
        %v2044 = vrsqrt.pop %v2022
        %v2045 = vmul.f32 %v2044, %v2022
        %v2046 = vmul.f32 %v2045, %v2044
        %v2047 = vmul.f32 0.5, %v2046
        %v2048 = vsub.f32 1.5, %v2047
        %v2049 = vmul.f32 %v2044, %v2048
        %vm2050 = vweird.f32 %v2022
        %vm2051 = vweird.f32 %v2044
        %vm2052 = vmor %vm2050, %vm2051
        %v2053 = vsel %vm2052, %v2044, %v2049
        %v2054 = vrsqrt.pop %v2023
        %v2055 = vmul.f32 %v2054, %v2023
        %v2056 = vmul.f32 %v2055, %v2054
        %v2057 = vmul.f32 0.5, %v2056
        %v2058 = vsub.f32 1.5, %v2057
        %v2059 = vmul.f32 %v2054, %v2058
        %vm2060 = vweird.f32 %v2023
        %vm2061 = vweird.f32 %v2054
        %vm2062 = vmor %vm2060, %vm2061
        %v2063 = vsel %vm2062, %v2054, %v2059
        %v2064 = vmul.f32 %v2000, %v2033
        %v2065 = vmul.f32 %v2001, %v2043
        %v2066 = vmul.f32 %v2002, %v2053
        %v2067 = vmul.f32 %v2003, %v2063
        %v2069 = vperm.slane %v1986, 0
        %v2071 = vmul.f32 %v2064, %v2069
        %v2072 = vmul.f32 %v2065, %v2069
        %v2073 = vmul.f32 %v2066, %v2069
        %v2074 = vmul.f32 %v2067, %v2069
        %v2076 = vperm.slane %v1987, 0
        %v2078 = vadd.f32 %v2071, %v2076
        %v2079 = vadd.f32 %v2072, %v2076
        %v2080 = vadd.f32 %v2073, %v2076
        %v2081 = vadd.f32 %v2074, %v2076
        %v2082 = vpack.c.bf16 %v2079, %v2078
        %v2083 = vpack.c.bf16 %v2081, %v2080
        %v2084 = vld [vmem:[%s953] sm:$0xff]
        %v2085 = vld [vmem:[%s953 + $0x8] sm:$0xff]
        %v2086 = vld [vmem:[%s953 + $0x10] sm:$0xff]
        %v2087 = vld [vmem:[%s953 + $0x18] sm:$0xff]
        %v2088 = vld [vmem:[%s953 + $0x20] sm:$0xff]
        %v2089 = vld [vmem:[%s953 + $0x28] sm:$0xff]
        %v2090 = vld [vmem:[%s953 + $0x30] sm:$0xff]
        %v2091 = vld [vmem:[%s953 + $0x38] sm:$0xff]
        %v2092 = vld [vmem:[%s953 + $0x40] sm:$0xff]
        %v2093 = vld [vmem:[%s953 + $0x48] sm:$0xff]
        %v2094 = vld [vmem:[%s953 + $0x50] sm:$0xff]
        %v2095 = vld [vmem:[%s953 + $0x58] sm:$0xff]
        %v2096 = vld [vmem:[%s953 + $0x60] sm:$0xff]
        %v2097 = vld [vmem:[%s953 + $0x68] sm:$0xff]
        %v2098 = vld [vmem:[%s953 + $0x70] sm:$0xff]
        %v2099 = vld [vmem:[%s953 + $0x78] sm:$0xff]
        %v2100 = vld [vmem:[%s953 + $0x80] sm:$0xff]
        %v2101 = vld [vmem:[%s953 + $0x88] sm:$0xff]
        %v2102 = vld [vmem:[%s953 + $0x90] sm:$0xff]
        %v2103 = vld [vmem:[%s953 + $0x98] sm:$0xff]
        %v2104 = vld [vmem:[%s953 + $0xa0] sm:$0xff]
        %v2105 = vld [vmem:[%s953 + $0xa8] sm:$0xff]
        %v2106 = vld [vmem:[%s953 + $0xb0] sm:$0xff]
        %v2107 = vld [vmem:[%s953 + $0xb8] sm:$0xff]
        %v2108 = vld [vmem:[%s953 + $0xc0] sm:$0xff]
        %v2109 = vld [vmem:[%s953 + $0xc8] sm:$0xff]
        %v2110 = vld [vmem:[%s953 + $0xd0] sm:$0xff]
        %v2111 = vld [vmem:[%s953 + $0xd8] sm:$0xff]
        %v2112 = vld [vmem:[%s953 + $0xe0] sm:$0xff]
        %v2113 = vld [vmem:[%s953 + $0xe8] sm:$0xff]
        %v2114 = vld [vmem:[%s953 + $0xf0] sm:$0xff]
        %v2115 = vld [vmem:[%s953 + $0xf8] sm:$0xff]
        %v2116 = vld [vmem:[%s1085] sm:$0xf]
        %v2118 = vperm.slane %v2116, 0
        %v2119 = vperm.slane %v2116, 1
        %v2120 = vperm.slane %v2116, 2
        %v2121 = vperm.slane %v2116, 3
        %v2158 = vunpack.c.l.b16 %v2084
        %v2159 = vunpack.c.h.b16 %v2084
        %v2160 = vunpack.c.l.b16 %v2085
        %v2161 = vunpack.c.h.b16 %v2085
        %v2162 = vunpack.c.l.b16 %v2086
        %v2163 = vunpack.c.h.b16 %v2086
        %v2164 = vunpack.c.l.b16 %v2087
        %v2165 = vunpack.c.h.b16 %v2087
        %v2166 = vunpack.c.l.b16 %v2088
        %v2167 = vunpack.c.h.b16 %v2088
        %v2168 = vunpack.c.l.b16 %v2089
        %v2169 = vunpack.c.h.b16 %v2089
        %v2170 = vunpack.c.l.b16 %v2090
        %v2171 = vunpack.c.h.b16 %v2090
        %v2172 = vunpack.c.l.b16 %v2091
        %v2173 = vunpack.c.h.b16 %v2091
        %v2174 = vunpack.c.l.b16 %v2092
        %v2175 = vunpack.c.h.b16 %v2092
        %v2176 = vunpack.c.l.b16 %v2093
        %v2177 = vunpack.c.h.b16 %v2093
        %v2178 = vunpack.c.l.b16 %v2094
        %v2179 = vunpack.c.h.b16 %v2094
        %v2180 = vunpack.c.l.b16 %v2095
        %v2181 = vunpack.c.h.b16 %v2095
        %v2182 = vunpack.c.l.b16 %v2096
        %v2183 = vunpack.c.h.b16 %v2096
        %v2184 = vunpack.c.l.b16 %v2097
        %v2185 = vunpack.c.h.b16 %v2097
        %v2186 = vunpack.c.l.b16 %v2098
        %v2187 = vunpack.c.h.b16 %v2098
        %v2188 = vunpack.c.l.b16 %v2099
        %v2189 = vunpack.c.h.b16 %v2099
        %v2190 = vunpack.c.l.b16 %v2100
        %v2191 = vunpack.c.h.b16 %v2100
        %v2192 = vunpack.c.l.b16 %v2101
        %v2193 = vunpack.c.h.b16 %v2101
        %v2194 = vunpack.c.l.b16 %v2102
        %v2195 = vunpack.c.h.b16 %v2102
        %v2196 = vunpack.c.l.b16 %v2103
        %v2197 = vunpack.c.h.b16 %v2103
        %v2198 = vunpack.c.l.b16 %v2104
        %v2199 = vunpack.c.h.b16 %v2104
        %v2200 = vunpack.c.l.b16 %v2105
        %v2201 = vunpack.c.h.b16 %v2105
        %v2202 = vunpack.c.l.b16 %v2106
        %v2203 = vunpack.c.h.b16 %v2106
        %v2204 = vunpack.c.l.b16 %v2107
        %v2205 = vunpack.c.h.b16 %v2107
        %v2206 = vunpack.c.l.b16 %v2108
        %v2207 = vunpack.c.h.b16 %v2108
        %v2208 = vunpack.c.l.b16 %v2109
        %v2209 = vunpack.c.h.b16 %v2109
        %v2210 = vunpack.c.l.b16 %v2110
        %v2211 = vunpack.c.h.b16 %v2110
        %v2212 = vunpack.c.l.b16 %v2111
        %v2213 = vunpack.c.h.b16 %v2111
        %v2214 = vunpack.c.l.b16 %v2112
        %v2215 = vunpack.c.h.b16 %v2112
        %v2216 = vunpack.c.l.b16 %v2113
        %v2217 = vunpack.c.h.b16 %v2113
        %v2218 = vunpack.c.l.b16 %v2114
        %v2219 = vunpack.c.h.b16 %v2114
        %v2220 = vunpack.c.l.b16 %v2115
        %v2221 = vunpack.c.h.b16 %v2115
        %v2222 = vpack.c.b16 %v2162, %v2158
        %v2223 = vpack.c.b16 %v2163, %v2159
        %v2224 = vpack.c.b16 %v2164, %v2160
        %v2225 = vpack.c.b16 %v2165, %v2161
        %v2226 = vpack.c.b16 %v2170, %v2166
        %v2227 = vpack.c.b16 %v2171, %v2167
        %v2228 = vpack.c.b16 %v2172, %v2168
        %v2229 = vpack.c.b16 %v2173, %v2169
        %v2230 = vpack.c.b16 %v2178, %v2174
        %v2231 = vpack.c.b16 %v2179, %v2175
        %v2232 = vpack.c.b16 %v2180, %v2176
        %v2233 = vpack.c.b16 %v2181, %v2177
        %v2234 = vpack.c.b16 %v2186, %v2182
        %v2235 = vpack.c.b16 %v2187, %v2183
        %v2236 = vpack.c.b16 %v2188, %v2184
        %v2237 = vpack.c.b16 %v2189, %v2185
        %v2238 = vpack.c.b16 %v2194, %v2190
        %v2239 = vpack.c.b16 %v2195, %v2191
        %v2240 = vpack.c.b16 %v2196, %v2192
        %v2241 = vpack.c.b16 %v2197, %v2193
        %v2242 = vpack.c.b16 %v2202, %v2198
        %v2243 = vpack.c.b16 %v2203, %v2199
        %v2244 = vpack.c.b16 %v2204, %v2200
        %v2245 = vpack.c.b16 %v2205, %v2201
        %v2246 = vpack.c.b16 %v2210, %v2206
        %v2247 = vpack.c.b16 %v2211, %v2207
        %v2248 = vpack.c.b16 %v2212, %v2208
        %v2249 = vpack.c.b16 %v2213, %v2209
        %v2250 = vpack.c.b16 %v2218, %v2214
        %v2251 = vpack.c.b16 %v2219, %v2215
        %v2252 = vpack.c.b16 %v2220, %v2216
        %v2253 = vpack.c.b16 %v2221, %v2217
        %2286 = vmatpush.bf16.msra.mxu0 %v2250
        %2287 = vmatpush.bf16.msra.mxu0 %v2246
        %2288 = vmatpush.bf16.msra.mxu0 %v2242
        %2289 = vmatpush.bf16.msra.mxu0 %v2238
        %2290 = vmatpush.bf16.msra.mxu0 %v2234
        %2291 = vmatpush.bf16.msra.mxu0 %v2230
        %2292 = vmatpush.bf16.msra.mxu0 %v2226
        %2293 = vmatpush.bf16.msra.mxu0 %v2222
        %2294 = vmatmul.bf16.gmra.mxu0 %v2082
        %v2295 = vpop.f32.mrf.mxu0
        %v2296 = vadd.f32 %v2118, %v2295
        %v2297 = vpop.f32.mrf.mxu0
        %v2298 = vadd.f32 %v2118, %v2297
        %2299 = vmatmul.bf16.gmra.mxu0 %v2083
        %v2300 = vpop.f32.mrf.mxu0
        %v2301 = vadd.f32 %v2118, %v2300
        %v2302 = vpop.f32.mrf.mxu0
        %v2303 = vadd.f32 %v2118, %v2302
        %2304 = vdwg.mxu0
        %2305 = vmatpush.bf16.msra.mxu0 %v2251
        %2306 = vmatpush.bf16.msra.mxu0 %v2247
        %2307 = vmatpush.bf16.msra.mxu0 %v2243
        %2308 = vmatpush.bf16.msra.mxu0 %v2239
        %2309 = vmatpush.bf16.msra.mxu0 %v2235
        %2310 = vmatpush.bf16.msra.mxu0 %v2231
        %2311 = vmatpush.bf16.msra.mxu0 %v2227
        %2312 = vmatpush.bf16.msra.mxu0 %v2223
        %2313 = vmatmul.bf16.gmra.mxu0 %v2082
        %v2314 = vpop.f32.mrf.mxu0
        %v2315 = vadd.f32 %v2119, %v2314
        %v2316 = vpop.f32.mrf.mxu0
        %v2317 = vadd.f32 %v2119, %v2316
        %2318 = vmatmul.bf16.gmra.mxu0 %v2083
        %v2319 = vpop.f32.mrf.mxu0
        %v2320 = vadd.f32 %v2119, %v2319
        %v2321 = vpop.f32.mrf.mxu0
        %v2322 = vadd.f32 %v2119, %v2321
        %2323 = vdwg.mxu0
        %2324 = vmatpush.bf16.msra.mxu0 %v2252
        %2325 = vmatpush.bf16.msra.mxu0 %v2248
        %2326 = vmatpush.bf16.msra.mxu0 %v2244
        %2327 = vmatpush.bf16.msra.mxu0 %v2240
        %2328 = vmatpush.bf16.msra.mxu0 %v2236
        %2329 = vmatpush.bf16.msra.mxu0 %v2232
        %2330 = vmatpush.bf16.msra.mxu0 %v2228
        %2331 = vmatpush.bf16.msra.mxu0 %v2224
        %2332 = vmatmul.bf16.gmra.mxu0 %v2082
        %v2333 = vpop.f32.mrf.mxu0
        %v2334 = vadd.f32 %v2120, %v2333
        %v2335 = vpop.f32.mrf.mxu0
        %v2336 = vadd.f32 %v2120, %v2335
        %2337 = vmatmul.bf16.gmra.mxu0 %v2083
        %v2338 = vpop.f32.mrf.mxu0
        %v2339 = vadd.f32 %v2120, %v2338
        %v2340 = vpop.f32.mrf.mxu0
        %v2341 = vadd.f32 %v2120, %v2340
        %2342 = vdwg.mxu0
        %2343 = vmatpush.bf16.msra.mxu0 %v2253
        %2344 = vmatpush.bf16.msra.mxu0 %v2249
        %2345 = vmatpush.bf16.msra.mxu0 %v2245
        %2346 = vmatpush.bf16.msra.mxu0 %v2241
        %2347 = vmatpush.bf16.msra.mxu0 %v2237
        %2348 = vmatpush.bf16.msra.mxu0 %v2233
        %2349 = vmatpush.bf16.msra.mxu0 %v2229
        %2350 = vmatpush.bf16.msra.mxu0 %v2225
        %2351 = vmatmul.bf16.gmra.mxu0 %v2082
        %v2352 = vpop.f32.mrf.mxu0
        %v2353 = vadd.f32 %v2121, %v2352
        %v2354 = vpop.f32.mrf.mxu0
        %v2355 = vadd.f32 %v2121, %v2354
        %2356 = vmatmul.bf16.gmra.mxu0 %v2083
        %v2357 = vpop.f32.mrf.mxu0
        %v2358 = vadd.f32 %v2121, %v2357
        %v2359 = vpop.f32.mrf.mxu0
        %v2360 = vadd.f32 %v2121, %v2359
        %2361 = vdwg.mxu0
        %v2362 = vmul.f32 %v2296, 1.702
        %v2363 = vmul.f32 %v2315, 1.702
        %v2364 = vmul.f32 %v2334, 1.702
        %v2365 = vmul.f32 %v2353, 1.702
        %v2366 = vmul.f32 %v2298, 1.702
        %v2367 = vmul.f32 %v2317, 1.702
        %v2368 = vmul.f32 %v2336, 1.702
        %v2369 = vmul.f32 %v2355, 1.702
        %v2370 = vmul.f32 %v2301, 1.702
        %v2371 = vmul.f32 %v2320, 1.702
        %v2372 = vmul.f32 %v2339, 1.702
        %v2373 = vmul.f32 %v2358, 1.702
        %v2374 = vmul.f32 %v2303, 1.702
        %v2375 = vmul.f32 %v2322, 1.702
        %v2376 = vmul.f32 %v2341, 1.702
        %v2377 = vmul.f32 %v2360, 1.702
        %v2378 = vxor.u32 %v2362, 2147483648
        %v2379 = vxor.u32 %v2363, 2147483648
        %v2380 = vxor.u32 %v2364, 2147483648
        %v2381 = vxor.u32 %v2365, 2147483648
        %v2382 = vxor.u32 %v2366, 2147483648
        %v2383 = vxor.u32 %v2367, 2147483648
        %v2384 = vxor.u32 %v2368, 2147483648
        %v2385 = vxor.u32 %v2369, 2147483648
        %v2386 = vxor.u32 %v2370, 2147483648
        %v2387 = vxor.u32 %v2371, 2147483648
        %v2388 = vxor.u32 %v2372, 2147483648
        %v2389 = vxor.u32 %v2373, 2147483648
        %v2390 = vxor.u32 %v2374, 2147483648
        %v2391 = vxor.u32 %v2375, 2147483648
        %v2392 = vxor.u32 %v2376, 2147483648
        %v2393 = vxor.u32 %v2377, 2147483648
        %v2394 = vmul.f32 %v2378, 1.442695
        %v2395 = vpow.pop %v2394
        %v2396 = vmul.f32 %v2379, 1.442695
        %v2397 = vpow.pop %v2396
        %v2398 = vmul.f32 %v2380, 1.442695
        %v2399 = vpow.pop %v2398
        %v2400 = vmul.f32 %v2381, 1.442695
        %v2401 = vpow.pop %v2400
        %v2402 = vmul.f32 %v2382, 1.442695
        %v2403 = vpow.pop %v2402
        %v2404 = vmul.f32 %v2383, 1.442695
        %v2405 = vpow.pop %v2404
        %v2406 = vmul.f32 %v2384, 1.442695
        %v2407 = vpow.pop %v2406
        %v2408 = vmul.f32 %v2385, 1.442695
        %v2409 = vpow.pop %v2408
        %v2410 = vmul.f32 %v2386, 1.442695
        %v2411 = vpow.pop %v2410
        %v2412 = vmul.f32 %v2387, 1.442695
        %v2413 = vpow.pop %v2412
        %v2414 = vmul.f32 %v2388, 1.442695
        %v2415 = vpow.pop %v2414
        %v2416 = vmul.f32 %v2389, 1.442695
        %v2417 = vpow.pop %v2416
        %v2418 = vmul.f32 %v2390, 1.442695
        %v2419 = vpow.pop %v2418
        %v2420 = vmul.f32 %v2391, 1.442695
        %v2421 = vpow.pop %v2420
        %v2422 = vmul.f32 %v2392, 1.442695
        %v2423 = vpow.pop %v2422
        %v2424 = vmul.f32 %v2393, 1.442695
        %v2425 = vpow.pop %v2424
        %v2426 = vadd.f32 %v2395, 1.0
        %v2427 = vadd.f32 %v2397, 1.0
        %v2428 = vadd.f32 %v2399, 1.0
        %v2429 = vadd.f32 %v2401, 1.0
        %v2430 = vadd.f32 %v2403, 1.0
        %v2431 = vadd.f32 %v2405, 1.0
        %v2432 = vadd.f32 %v2407, 1.0
        %v2433 = vadd.f32 %v2409, 1.0
        %v2434 = vadd.f32 %v2411, 1.0
        %v2435 = vadd.f32 %v2413, 1.0
        %v2436 = vadd.f32 %v2415, 1.0
        %v2437 = vadd.f32 %v2417, 1.0
        %v2438 = vadd.f32 %v2419, 1.0
        %v2439 = vadd.f32 %v2421, 1.0
        %v2440 = vadd.f32 %v2423, 1.0
        %v2441 = vadd.f32 %v2425, 1.0
        %v2442 = vrcp.pop %v2426
        %v2443 = vmul.f32 %v2426, %v2442
        %v2444 = vsub.f32 1.0, %v2443
        %v2445 = vmul.f32 %v2442, %v2444
        %v2446 = vadd.f32 %v2442, %v2445
        %vm2447 = vweird.f32 %v2426
        %vm2448 = vweird.f32 %v2442
        %vm2449 = vmor %vm2447, %vm2448
        %v2450 = vsel %vm2449, %v2442, %v2446
        %v2451 = vand.u32 2147483647, %v2426
        %vm2452 = vcmp.eq.f32.partialorder %v2451, 8.507059e+37
        %v2453 = vand.u32 %v2426, 2147483648
        %v2454 = vor.u32 1.1754944e-38, %v2453
        %v2455 = vsel %vm2452, %v2454, %v2450
        %v2456 = vmul.f32 1.0, %v2455
        %v2457 = vrcp.pop %v2427
        %v2458 = vmul.f32 %v2427, %v2457
        %v2459 = vsub.f32 1.0, %v2458
        %v2460 = vmul.f32 %v2457, %v2459
        %v2461 = vadd.f32 %v2457, %v2460
        %vm2462 = vweird.f32 %v2427
        %vm2463 = vweird.f32 %v2457
        %vm2464 = vmor %vm2462, %vm2463
        %v2465 = vsel %vm2464, %v2457, %v2461
        %v2466 = vand.u32 2147483647, %v2427
        %vm2467 = vcmp.eq.f32.partialorder %v2466, 8.507059e+37
        %v2468 = vand.u32 %v2427, 2147483648
        %v2469 = vor.u32 1.1754944e-38, %v2468
        %v2470 = vsel %vm2467, %v2469, %v2465
        %v2471 = vmul.f32 1.0, %v2470
        %v2472 = vrcp.pop %v2428
        %v2473 = vmul.f32 %v2428, %v2472
        %v2474 = vsub.f32 1.0, %v2473
        %v2475 = vmul.f32 %v2472, %v2474
        %v2476 = vadd.f32 %v2472, %v2475
        %vm2477 = vweird.f32 %v2428
        %vm2478 = vweird.f32 %v2472
        %vm2479 = vmor %vm2477, %vm2478
        %v2480 = vsel %vm2479, %v2472, %v2476
        %v2481 = vand.u32 2147483647, %v2428
        %vm2482 = vcmp.eq.f32.partialorder %v2481, 8.507059e+37
        %v2483 = vand.u32 %v2428, 2147483648
        %v2484 = vor.u32 1.1754944e-38, %v2483
        %v2485 = vsel %vm2482, %v2484, %v2480
        %v2486 = vmul.f32 1.0, %v2485
        %v2487 = vrcp.pop %v2429
        %v2488 = vmul.f32 %v2429, %v2487
        %v2489 = vsub.f32 1.0, %v2488
        %v2490 = vmul.f32 %v2487, %v2489
        %v2491 = vadd.f32 %v2487, %v2490
        %vm2492 = vweird.f32 %v2429
        %vm2493 = vweird.f32 %v2487
        %vm2494 = vmor %vm2492, %vm2493
        %v2495 = vsel %vm2494, %v2487, %v2491
        %v2496 = vand.u32 2147483647, %v2429
        %vm2497 = vcmp.eq.f32.partialorder %v2496, 8.507059e+37
        %v2498 = vand.u32 %v2429, 2147483648
        %v2499 = vor.u32 1.1754944e-38, %v2498
        %v2500 = vsel %vm2497, %v2499, %v2495
        %v2501 = vmul.f32 1.0, %v2500
        %v2502 = vrcp.pop %v2430
        %v2503 = vmul.f32 %v2430, %v2502
        %v2504 = vsub.f32 1.0, %v2503
        %v2505 = vmul.f32 %v2502, %v2504
        %v2506 = vadd.f32 %v2502, %v2505
        %vm2507 = vweird.f32 %v2430
        %vm2508 = vweird.f32 %v2502
        %vm2509 = vmor %vm2507, %vm2508
        %v2510 = vsel %vm2509, %v2502, %v2506
        %v2511 = vand.u32 2147483647, %v2430
        %vm2512 = vcmp.eq.f32.partialorder %v2511, 8.507059e+37
        %v2513 = vand.u32 %v2430, 2147483648
        %v2514 = vor.u32 1.1754944e-38, %v2513
        %v2515 = vsel %vm2512, %v2514, %v2510
        %v2516 = vmul.f32 1.0, %v2515
        %v2517 = vrcp.pop %v2431
        %v2518 = vmul.f32 %v2431, %v2517
        %v2519 = vsub.f32 1.0, %v2518
        %v2520 = vmul.f32 %v2517, %v2519
        %v2521 = vadd.f32 %v2517, %v2520
        %vm2522 = vweird.f32 %v2431
        %vm2523 = vweird.f32 %v2517
        %vm2524 = vmor %vm2522, %vm2523
        %v2525 = vsel %vm2524, %v2517, %v2521
        %v2526 = vand.u32 2147483647, %v2431
        %vm2527 = vcmp.eq.f32.partialorder %v2526, 8.507059e+37
        %v2528 = vand.u32 %v2431, 2147483648
        %v2529 = vor.u32 1.1754944e-38, %v2528
        %v2530 = vsel %vm2527, %v2529, %v2525
        %v2531 = vmul.f32 1.0, %v2530
        %v2532 = vrcp.pop %v2432
        %v2533 = vmul.f32 %v2432, %v2532
        %v2534 = vsub.f32 1.0, %v2533
        %v2535 = vmul.f32 %v2532, %v2534
        %v2536 = vadd.f32 %v2532, %v2535
        %vm2537 = vweird.f32 %v2432
        %vm2538 = vweird.f32 %v2532
        %vm2539 = vmor %vm2537, %vm2538
        %v2540 = vsel %vm2539, %v2532, %v2536
        %v2541 = vand.u32 2147483647, %v2432
        %vm2542 = vcmp.eq.f32.partialorder %v2541, 8.507059e+37
        %v2543 = vand.u32 %v2432, 2147483648
        %v2544 = vor.u32 1.1754944e-38, %v2543
        %v2545 = vsel %vm2542, %v2544, %v2540
        %v2546 = vmul.f32 1.0, %v2545
        %v2547 = vrcp.pop %v2433
        %v2548 = vmul.f32 %v2433, %v2547
        %v2549 = vsub.f32 1.0, %v2548
        %v2550 = vmul.f32 %v2547, %v2549
        %v2551 = vadd.f32 %v2547, %v2550
        %vm2552 = vweird.f32 %v2433
        %vm2553 = vweird.f32 %v2547
        %vm2554 = vmor %vm2552, %vm2553
        %v2555 = vsel %vm2554, %v2547, %v2551
        %v2556 = vand.u32 2147483647, %v2433
        %vm2557 = vcmp.eq.f32.partialorder %v2556, 8.507059e+37
        %v2558 = vand.u32 %v2433, 2147483648
        %v2559 = vor.u32 1.1754944e-38, %v2558
        %v2560 = vsel %vm2557, %v2559, %v2555
        %v2561 = vmul.f32 1.0, %v2560
        %v2562 = vrcp.pop %v2434
        %v2563 = vmul.f32 %v2434, %v2562
        %v2564 = vsub.f32 1.0, %v2563
        %v2565 = vmul.f32 %v2562, %v2564
        %v2566 = vadd.f32 %v2562, %v2565
        %vm2567 = vweird.f32 %v2434
        %vm2568 = vweird.f32 %v2562
        %vm2569 = vmor %vm2567, %vm2568
        %v2570 = vsel %vm2569, %v2562, %v2566
        %v2571 = vand.u32 2147483647, %v2434
        %vm2572 = vcmp.eq.f32.partialorder %v2571, 8.507059e+37
        %v2573 = vand.u32 %v2434, 2147483648
        %v2574 = vor.u32 1.1754944e-38, %v2573
        %v2575 = vsel %vm2572, %v2574, %v2570
        %v2576 = vmul.f32 1.0, %v2575
        %v2577 = vrcp.pop %v2435
        %v2578 = vmul.f32 %v2435, %v2577
        %v2579 = vsub.f32 1.0, %v2578
        %v2580 = vmul.f32 %v2577, %v2579
        %v2581 = vadd.f32 %v2577, %v2580
        %vm2582 = vweird.f32 %v2435
        %vm2583 = vweird.f32 %v2577
        %vm2584 = vmor %vm2582, %vm2583
        %v2585 = vsel %vm2584, %v2577, %v2581
        %v2586 = vand.u32 2147483647, %v2435
        %vm2587 = vcmp.eq.f32.partialorder %v2586, 8.507059e+37
        %v2588 = vand.u32 %v2435, 2147483648
        %v2589 = vor.u32 1.1754944e-38, %v2588
        %v2590 = vsel %vm2587, %v2589, %v2585
        %v2591 = vmul.f32 1.0, %v2590
        %v2592 = vrcp.pop %v2436
        %v2593 = vmul.f32 %v2436, %v2592
        %v2594 = vsub.f32 1.0, %v2593
        %v2595 = vmul.f32 %v2592, %v2594
        %v2596 = vadd.f32 %v2592, %v2595
        %vm2597 = vweird.f32 %v2436
        %vm2598 = vweird.f32 %v2592
        %vm2599 = vmor %vm2597, %vm2598
        %v2600 = vsel %vm2599, %v2592, %v2596
        %v2601 = vand.u32 2147483647, %v2436
        %vm2602 = vcmp.eq.f32.partialorder %v2601, 8.507059e+37
        %v2603 = vand.u32 %v2436, 2147483648
        %v2604 = vor.u32 1.1754944e-38, %v2603
        %v2605 = vsel %vm2602, %v2604, %v2600
        %v2606 = vmul.f32 1.0, %v2605
        %v2607 = vrcp.pop %v2437
        %v2608 = vmul.f32 %v2437, %v2607
        %v2609 = vsub.f32 1.0, %v2608
        %v2610 = vmul.f32 %v2607, %v2609
        %v2611 = vadd.f32 %v2607, %v2610
        %vm2612 = vweird.f32 %v2437
        %vm2613 = vweird.f32 %v2607
        %vm2614 = vmor %vm2612, %vm2613
        %v2615 = vsel %vm2614, %v2607, %v2611
        %v2616 = vand.u32 2147483647, %v2437
        %vm2617 = vcmp.eq.f32.partialorder %v2616, 8.507059e+37
        %v2618 = vand.u32 %v2437, 2147483648
        %v2619 = vor.u32 1.1754944e-38, %v2618
        %v2620 = vsel %vm2617, %v2619, %v2615
        %v2621 = vmul.f32 1.0, %v2620
        %v2622 = vrcp.pop %v2438
        %v2623 = vmul.f32 %v2438, %v2622
        %v2624 = vsub.f32 1.0, %v2623
        %v2625 = vmul.f32 %v2622, %v2624
        %v2626 = vadd.f32 %v2622, %v2625
        %vm2627 = vweird.f32 %v2438
        %vm2628 = vweird.f32 %v2622
        %vm2629 = vmor %vm2627, %vm2628
        %v2630 = vsel %vm2629, %v2622, %v2626
        %v2631 = vand.u32 2147483647, %v2438
        %vm2632 = vcmp.eq.f32.partialorder %v2631, 8.507059e+37
        %v2633 = vand.u32 %v2438, 2147483648
        %v2634 = vor.u32 1.1754944e-38, %v2633
        %v2635 = vsel %vm2632, %v2634, %v2630
        %v2636 = vmul.f32 1.0, %v2635
        %v2637 = vrcp.pop %v2439
        %v2638 = vmul.f32 %v2439, %v2637
        %v2639 = vsub.f32 1.0, %v2638
        %v2640 = vmul.f32 %v2637, %v2639
        %v2641 = vadd.f32 %v2637, %v2640
        %vm2642 = vweird.f32 %v2439
        %vm2643 = vweird.f32 %v2637
        %vm2644 = vmor %vm2642, %vm2643
        %v2645 = vsel %vm2644, %v2637, %v2641
        %v2646 = vand.u32 2147483647, %v2439
        %vm2647 = vcmp.eq.f32.partialorder %v2646, 8.507059e+37
        %v2648 = vand.u32 %v2439, 2147483648
        %v2649 = vor.u32 1.1754944e-38, %v2648
        %v2650 = vsel %vm2647, %v2649, %v2645
        %v2651 = vmul.f32 1.0, %v2650
        %v2652 = vrcp.pop %v2440
        %v2653 = vmul.f32 %v2440, %v2652
        %v2654 = vsub.f32 1.0, %v2653
        %v2655 = vmul.f32 %v2652, %v2654
        %v2656 = vadd.f32 %v2652, %v2655
        %vm2657 = vweird.f32 %v2440
        %vm2658 = vweird.f32 %v2652
        %vm2659 = vmor %vm2657, %vm2658
        %v2660 = vsel %vm2659, %v2652, %v2656
        %v2661 = vand.u32 2147483647, %v2440
        %vm2662 = vcmp.eq.f32.partialorder %v2661, 8.507059e+37
        %v2663 = vand.u32 %v2440, 2147483648
        %v2664 = vor.u32 1.1754944e-38, %v2663
        %v2665 = vsel %vm2662, %v2664, %v2660
        %v2666 = vmul.f32 1.0, %v2665
        %v2667 = vrcp.pop %v2441
        %v2668 = vmul.f32 %v2441, %v2667
        %v2669 = vsub.f32 1.0, %v2668
        %v2670 = vmul.f32 %v2667, %v2669
        %v2671 = vadd.f32 %v2667, %v2670
        %vm2672 = vweird.f32 %v2441
        %vm2673 = vweird.f32 %v2667
        %vm2674 = vmor %vm2672, %vm2673
        %v2675 = vsel %vm2674, %v2667, %v2671
        %v2676 = vand.u32 2147483647, %v2441
        %vm2677 = vcmp.eq.f32.partialorder %v2676, 8.507059e+37
        %v2678 = vand.u32 %v2441, 2147483648
        %v2679 = vor.u32 1.1754944e-38, %v2678
        %v2680 = vsel %vm2677, %v2679, %v2675
        %v2681 = vmul.f32 1.0, %v2680
        %v2682 = vmul.f32 %v2296, %v2456
        %v2683 = vmul.f32 %v2315, %v2471
        %v2684 = vmul.f32 %v2334, %v2486
        %v2685 = vmul.f32 %v2353, %v2501
        %v2686 = vmul.f32 %v2298, %v2516
        %v2687 = vmul.f32 %v2317, %v2531
        %v2688 = vmul.f32 %v2336, %v2546
        %v2689 = vmul.f32 %v2355, %v2561
        %v2690 = vmul.f32 %v2301, %v2576
        %v2691 = vmul.f32 %v2320, %v2591
        %v2692 = vmul.f32 %v2339, %v2606
        %v2693 = vmul.f32 %v2358, %v2621
        %v2694 = vmul.f32 %v2303, %v2636
        %v2695 = vmul.f32 %v2322, %v2651
        %v2696 = vmul.f32 %v2341, %v2666
        %v2697 = vmul.f32 %v2360, %v2681
        %v2698 = vpack.c.bf16 %v2686, %v2682
        %v2699 = vpack.c.bf16 %v2687, %v2683
        %v2700 = vpack.c.bf16 %v2688, %v2684
        %v2701 = vpack.c.bf16 %v2689, %v2685
        %v2702 = vpack.c.bf16 %v2694, %v2690
        %v2703 = vpack.c.bf16 %v2695, %v2691
        %v2704 = vpack.c.bf16 %v2696, %v2692
        %v2705 = vpack.c.bf16 %v2697, %v2693
        %v2706 = vld [vmem:[%s963] sm:$0xf]
        %v2707 = vld [vmem:[%s963 + $0x4] sm:$0xf]
        %v2708 = vld [vmem:[%s963 + $0x8] sm:$0xf]
        %v2709 = vld [vmem:[%s963 + $0xc] sm:$0xf]
        %v2710 = vld [vmem:[%s963 + $0x10] sm:$0xf]
        %v2711 = vld [vmem:[%s963 + $0x14] sm:$0xf]
        %v2712 = vld [vmem:[%s963 + $0x18] sm:$0xf]
        %v2713 = vld [vmem:[%s963 + $0x1c] sm:$0xf]
        %v2714 = vld [vmem:[%s963 + $0x20] sm:$0xf]
        %v2715 = vld [vmem:[%s963 + $0x24] sm:$0xf]
        %v2716 = vld [vmem:[%s963 + $0x28] sm:$0xf]
        %v2717 = vld [vmem:[%s963 + $0x2c] sm:$0xf]
        %v2718 = vld [vmem:[%s963 + $0x30] sm:$0xf]
        %v2719 = vld [vmem:[%s963 + $0x34] sm:$0xf]
        %v2720 = vld [vmem:[%s963 + $0x38] sm:$0xf]
        %v2721 = vld [vmem:[%s963 + $0x3c] sm:$0xf]
        %v2722 = vld [vmem:[%s963 + $0x40] sm:$0xf]
        %v2723 = vld [vmem:[%s963 + $0x44] sm:$0xf]
        %v2724 = vld [vmem:[%s963 + $0x48] sm:$0xf]
        %v2725 = vld [vmem:[%s963 + $0x4c] sm:$0xf]
        %v2726 = vld [vmem:[%s963 + $0x50] sm:$0xf]
        %v2727 = vld [vmem:[%s963 + $0x54] sm:$0xf]
        %v2728 = vld [vmem:[%s963 + $0x58] sm:$0xf]
        %v2729 = vld [vmem:[%s963 + $0x5c] sm:$0xf]
        %v2730 = vld [vmem:[%s963 + $0x60] sm:$0xf]
        %v2731 = vld [vmem:[%s963 + $0x64] sm:$0xf]
        %v2732 = vld [vmem:[%s963 + $0x68] sm:$0xf]
        %v2733 = vld [vmem:[%s963 + $0x6c] sm:$0xf]
        %v2734 = vld [vmem:[%s963 + $0x70] sm:$0xf]
        %v2735 = vld [vmem:[%s963 + $0x74] sm:$0xf]
        %v2736 = vld [vmem:[%s963 + $0x78] sm:$0xf]
        %v2737 = vld [vmem:[%s963 + $0x7c] sm:$0xf]
        %v2738 = vld [vmem:[%s963 + $0x80] sm:$0xf]
        %v2739 = vld [vmem:[%s963 + $0x84] sm:$0xf]
        %v2740 = vld [vmem:[%s963 + $0x88] sm:$0xf]
        %v2741 = vld [vmem:[%s963 + $0x8c] sm:$0xf]
        %v2742 = vld [vmem:[%s963 + $0x90] sm:$0xf]
        %v2743 = vld [vmem:[%s963 + $0x94] sm:$0xf]
        %v2744 = vld [vmem:[%s963 + $0x98] sm:$0xf]
        %v2745 = vld [vmem:[%s963 + $0x9c] sm:$0xf]
        %v2746 = vld [vmem:[%s963 + $0xa0] sm:$0xf]
        %v2747 = vld [vmem:[%s963 + $0xa4] sm:$0xf]
        %v2748 = vld [vmem:[%s963 + $0xa8] sm:$0xf]
        %v2749 = vld [vmem:[%s963 + $0xac] sm:$0xf]
        %v2750 = vld [vmem:[%s963 + $0xb0] sm:$0xf]
        %v2751 = vld [vmem:[%s963 + $0xb4] sm:$0xf]
        %v2752 = vld [vmem:[%s963 + $0xb8] sm:$0xf]
        %v2753 = vld [vmem:[%s963 + $0xbc] sm:$0xf]
        %v2754 = vld [vmem:[%s963 + $0xc0] sm:$0xf]
        %v2755 = vld [vmem:[%s963 + $0xc4] sm:$0xf]
        %v2756 = vld [vmem:[%s963 + $0xc8] sm:$0xf]
        %v2757 = vld [vmem:[%s963 + $0xcc] sm:$0xf]
        %v2758 = vld [vmem:[%s963 + $0xd0] sm:$0xf]
        %v2759 = vld [vmem:[%s963 + $0xd4] sm:$0xf]
        %v2760 = vld [vmem:[%s963 + $0xd8] sm:$0xf]
        %v2761 = vld [vmem:[%s963 + $0xdc] sm:$0xf]
        %v2762 = vld [vmem:[%s963 + $0xe0] sm:$0xf]
        %v2763 = vld [vmem:[%s963 + $0xe4] sm:$0xf]
        %v2764 = vld [vmem:[%s963 + $0xe8] sm:$0xf]
        %v2765 = vld [vmem:[%s963 + $0xec] sm:$0xf]
        %v2766 = vld [vmem:[%s963 + $0xf0] sm:$0xf]
        %v2767 = vld [vmem:[%s963 + $0xf4] sm:$0xf]
        %v2768 = vld [vmem:[%s963 + $0xf8] sm:$0xf]
        %v2769 = vld [vmem:[%s963 + $0xfc] sm:$0xf]
        %v2834 = vunpack.c.l.b16 %v2706
        %v2835 = vunpack.c.l.b16 %v2707
        %v2836 = vunpack.c.l.b16 %v2708
        %v2837 = vunpack.c.l.b16 %v2709
        %v2838 = vunpack.c.l.b16 %v2710
        %v2839 = vunpack.c.l.b16 %v2711
        %v2840 = vunpack.c.l.b16 %v2712
        %v2841 = vunpack.c.l.b16 %v2713
        %v2842 = vunpack.c.l.b16 %v2714
        %v2843 = vunpack.c.l.b16 %v2715
        %v2844 = vunpack.c.l.b16 %v2716
        %v2845 = vunpack.c.l.b16 %v2717
        %v2846 = vunpack.c.l.b16 %v2718
        %v2847 = vunpack.c.l.b16 %v2719
        %v2848 = vunpack.c.l.b16 %v2720
        %v2849 = vunpack.c.l.b16 %v2721
        %v2850 = vunpack.c.l.b16 %v2722
        %v2851 = vunpack.c.l.b16 %v2723
        %v2852 = vunpack.c.l.b16 %v2724
        %v2853 = vunpack.c.l.b16 %v2725
        %v2854 = vunpack.c.l.b16 %v2726
        %v2855 = vunpack.c.l.b16 %v2727
        %v2856 = vunpack.c.l.b16 %v2728
        %v2857 = vunpack.c.l.b16 %v2729
        %v2858 = vunpack.c.l.b16 %v2730
        %v2859 = vunpack.c.l.b16 %v2731
        %v2860 = vunpack.c.l.b16 %v2732
        %v2861 = vunpack.c.l.b16 %v2733
        %v2862 = vunpack.c.l.b16 %v2734
        %v2863 = vunpack.c.l.b16 %v2735
        %v2864 = vunpack.c.l.b16 %v2736
        %v2865 = vunpack.c.l.b16 %v2737
        %v2866 = vunpack.c.l.b16 %v2738
        %v2867 = vunpack.c.l.b16 %v2739
        %v2868 = vunpack.c.l.b16 %v2740
        %v2869 = vunpack.c.l.b16 %v2741
        %v2870 = vunpack.c.l.b16 %v2742
        %v2871 = vunpack.c.l.b16 %v2743
        %v2872 = vunpack.c.l.b16 %v2744
        %v2873 = vunpack.c.l.b16 %v2745
        %v2874 = vunpack.c.l.b16 %v2746
        %v2875 = vunpack.c.l.b16 %v2747
        %v2876 = vunpack.c.l.b16 %v2748
        %v2877 = vunpack.c.l.b16 %v2749
        %v2878 = vunpack.c.l.b16 %v2750
        %v2879 = vunpack.c.l.b16 %v2751
        %v2880 = vunpack.c.l.b16 %v2752
        %v2881 = vunpack.c.l.b16 %v2753
        %v2882 = vunpack.c.l.b16 %v2754
        %v2883 = vunpack.c.l.b16 %v2755
        %v2884 = vunpack.c.l.b16 %v2756
        %v2885 = vunpack.c.l.b16 %v2757
        %v2886 = vunpack.c.l.b16 %v2758
        %v2887 = vunpack.c.l.b16 %v2759
        %v2888 = vunpack.c.l.b16 %v2760
        %v2889 = vunpack.c.l.b16 %v2761
        %v2890 = vunpack.c.l.b16 %v2762
        %v2891 = vunpack.c.l.b16 %v2763
        %v2892 = vunpack.c.l.b16 %v2764
        %v2893 = vunpack.c.l.b16 %v2765
        %v2894 = vunpack.c.l.b16 %v2766
        %v2895 = vunpack.c.l.b16 %v2767
        %v2896 = vunpack.c.l.b16 %v2768
        %v2897 = vunpack.c.l.b16 %v2769
        %v2898 = vpack.c.b16 %v2835, %v2834
        %v2899 = vpack.c.b16 %v2837, %v2836
        %v2900 = vpack.c.b16 %v2839, %v2838
        %v2901 = vpack.c.b16 %v2841, %v2840
        %v2902 = vpack.c.b16 %v2843, %v2842
        %v2903 = vpack.c.b16 %v2845, %v2844
        %v2904 = vpack.c.b16 %v2847, %v2846
        %v2905 = vpack.c.b16 %v2849, %v2848
        %v2906 = vpack.c.b16 %v2851, %v2850
        %v2907 = vpack.c.b16 %v2853, %v2852
        %v2908 = vpack.c.b16 %v2855, %v2854
        %v2909 = vpack.c.b16 %v2857, %v2856
        %v2910 = vpack.c.b16 %v2859, %v2858
        %v2911 = vpack.c.b16 %v2861, %v2860
        %v2912 = vpack.c.b16 %v2863, %v2862
        %v2913 = vpack.c.b16 %v2865, %v2864
        %v2914 = vpack.c.b16 %v2867, %v2866
        %v2915 = vpack.c.b16 %v2869, %v2868
        %v2916 = vpack.c.b16 %v2871, %v2870
        %v2917 = vpack.c.b16 %v2873, %v2872
        %v2918 = vpack.c.b16 %v2875, %v2874
        %v2919 = vpack.c.b16 %v2877, %v2876
        %v2920 = vpack.c.b16 %v2879, %v2878
        %v2921 = vpack.c.b16 %v2881, %v2880
        %v2922 = vpack.c.b16 %v2883, %v2882
        %v2923 = vpack.c.b16 %v2885, %v2884
        %v2924 = vpack.c.b16 %v2887, %v2886
        %v2925 = vpack.c.b16 %v2889, %v2888
        %v2926 = vpack.c.b16 %v2891, %v2890
        %v2927 = vpack.c.b16 %v2893, %v2892
        %v2928 = vpack.c.b16 %v2895, %v2894
        %v2929 = vpack.c.b16 %v2897, %v2896
        %2962 = vmatpush.bf16.msra.mxu0 %v2905
        %2963 = vmatpush.bf16.msra.mxu0 %v2904
        %2964 = vmatpush.bf16.msra.mxu0 %v2903
        %2965 = vmatpush.bf16.msra.mxu0 %v2902
        %2966 = vmatpush.bf16.msra.mxu0 %v2901
        %2967 = vmatpush.bf16.msra.mxu0 %v2900
        %2968 = vmatpush.bf16.msra.mxu0 %v2899
        %2969 = vmatpush.bf16.msra.mxu0 %v2898
        %2970 = vmatmul.bf16.gmra.mxu0 %v2698
        %v2971 = vpop.f32.mrf.mxu0
        %v2972 = vadd.f32 0.0, %v2971
        %v2973 = vpop.f32.mrf.mxu0
        %v2974 = vadd.f32 0.0, %v2973
        %2975 = vmatmul.bf16.gmra.mxu0 %v2702
        %v2976 = vpop.f32.mrf.mxu0
        %v2977 = vadd.f32 0.0, %v2976
        %v2978 = vpop.f32.mrf.mxu0
        %v2979 = vadd.f32 0.0, %v2978
        %2980 = vdwg.mxu0
        %2981 = vmatpush.bf16.msra.mxu0 %v2913
        %2982 = vmatpush.bf16.msra.mxu0 %v2912
        %2983 = vmatpush.bf16.msra.mxu0 %v2911
        %2984 = vmatpush.bf16.msra.mxu0 %v2910
        %2985 = vmatpush.bf16.msra.mxu0 %v2909
        %2986 = vmatpush.bf16.msra.mxu0 %v2908
        %2987 = vmatpush.bf16.msra.mxu0 %v2907
        %2988 = vmatpush.bf16.msra.mxu0 %v2906
        %2989 = vmatmul.bf16.gmra.mxu0 %v2699
        %v2990 = vpop.f32.mrf.mxu0
        %v2991 = vadd.f32 %v2972, %v2990
        %v2992 = vpop.f32.mrf.mxu0
        %v2993 = vadd.f32 %v2974, %v2992
        %2994 = vmatmul.bf16.gmra.mxu0 %v2703
        %v2995 = vpop.f32.mrf.mxu0
        %v2996 = vadd.f32 %v2977, %v2995
        %v2997 = vpop.f32.mrf.mxu0
        %v2998 = vadd.f32 %v2979, %v2997
        %2999 = vdwg.mxu0
        %3000 = vmatpush.bf16.msra.mxu0 %v2921
        %3001 = vmatpush.bf16.msra.mxu0 %v2920
        %3002 = vmatpush.bf16.msra.mxu0 %v2919
        %3003 = vmatpush.bf16.msra.mxu0 %v2918
        %3004 = vmatpush.bf16.msra.mxu0 %v2917
        %3005 = vmatpush.bf16.msra.mxu0 %v2916
        %3006 = vmatpush.bf16.msra.mxu0 %v2915
        %3007 = vmatpush.bf16.msra.mxu0 %v2914
        %3008 = vmatmul.bf16.gmra.mxu0 %v2700
        %v3009 = vpop.f32.mrf.mxu0
        %v3010 = vadd.f32 %v2991, %v3009
        %v3011 = vpop.f32.mrf.mxu0
        %v3012 = vadd.f32 %v2993, %v3011
        %3013 = vmatmul.bf16.gmra.mxu0 %v2704
        %v3014 = vpop.f32.mrf.mxu0
        %v3015 = vadd.f32 %v2996, %v3014
        %v3016 = vpop.f32.mrf.mxu0
        %v3017 = vadd.f32 %v2998, %v3016
        %3018 = vdwg.mxu0
        %3019 = vmatpush.bf16.msra.mxu0 %v2929
        %3020 = vmatpush.bf16.msra.mxu0 %v2928
        %3021 = vmatpush.bf16.msra.mxu0 %v2927
        %3022 = vmatpush.bf16.msra.mxu0 %v2926
        %3023 = vmatpush.bf16.msra.mxu0 %v2925
        %3024 = vmatpush.bf16.msra.mxu0 %v2924
        %3025 = vmatpush.bf16.msra.mxu0 %v2923
        %3026 = vmatpush.bf16.msra.mxu0 %v2922
        %3027 = vmatmul.bf16.gmra.mxu0 %v2701
        %v3028 = vpop.f32.mrf.mxu0
        %v3029 = vadd.f32 %v3010, %v3028
        %v3030 = vpop.f32.mrf.mxu0
        %v3031 = vadd.f32 %v3012, %v3030
        %3032 = vmatmul.bf16.gmra.mxu0 %v2705
        %v3033 = vpop.f32.mrf.mxu0
        %v3034 = vadd.f32 %v3015, %v3033
        %v3035 = vpop.f32.mrf.mxu0
        %v3036 = vadd.f32 %v3017, %v3035
        %3037 = vdwg.mxu0
        %v3038 = vadd.f32 %v1982, %v3029
        %v3039 = vadd.f32 %v1983, %v3031
        %v3040 = vadd.f32 %v1984, %v3034
        %v3041 = vadd.f32 %v1985, %v3036
        %v3042 = vld [vmem:[%s1088] sm:$0x1]
        %v3044 = vperm.slane %v3042, 0
        %v3046 = vadd.f32 %v3038, %v3044
        %v3047 = vadd.f32 %v3039, %v3044
        %v3048 = vadd.f32 %v3040, %v3044
        %v3049 = vadd.f32 %v3041, %v3044
        %3050 = vst [vmem:[#allocation2] sm:$0xff] %v3046
        %3051 = vst [vmem:[#allocation2 + $0x8] sm:$0xff] %v3047
        %3052 = vst [vmem:[#allocation2 + $0x10] sm:$0xff] %v3048
        %3053 = vst [vmem:[#allocation2 + $0x18] sm:$0xff] %v3049
        %p3054 = scmp.eq.s32.totalorder %s50, 1
        // Predicated region
        $region153: #{tpu_custom_call.1} parent=95 // pred_check
          %p3055 = pneg %p3054
        $region154: #{tpu_custom_call.1} parent=95 // pred_check_branch
          %3057 = sbr.rel (%p3055) target = $region156
        $region155: #{tpu_custom_call.1} parent=95 // pred_region
          %v3058 = vld [vmem:[%s17] sm:$0x1]
          %v3059 = vld [vmem:[%s18] sm:$0x1]
          %3060 = vadd.xlane.f32.xlu0 %v3046
          %v3061 = vpop.xlane.xlu0 %3060
          %3062 = vadd.xlane.f32.xlu0 %v3047
          %v3063 = vpop.xlane.xlu0 %3062
          %3064 = vadd.xlane.f32.xlu0 %v3048
          %v3065 = vpop.xlane.xlu0 %3064
          %3066 = vadd.xlane.f32.xlu0 %v3049
          %v3067 = vpop.xlane.xlu0 %3066
          %v3068 = vmul.f32 %v3061, %v1128
          %v3069 = vmul.f32 %v3063, %v1128
          %v3070 = vmul.f32 %v3065, %v1128
          %v3071 = vmul.f32 %v3067, %v1128
          %v3072 = vsub.f32 %v3046, %v3068
          %v3073 = vsub.f32 %v3047, %v3069
          %v3074 = vsub.f32 %v3048, %v3070
          %v3075 = vsub.f32 %v3049, %v3071
          %v3076 = vmul.f32 %v3072, %v3072
          %v3077 = vmul.f32 %v3073, %v3073
          %v3078 = vmul.f32 %v3074, %v3074
          %v3079 = vmul.f32 %v3075, %v3075
          %3080 = vadd.xlane.f32.xlu0 %v3076
          %v3081 = vpop.xlane.xlu0 %3080
          %3082 = vadd.xlane.f32.xlu0 %v3077
          %v3083 = vpop.xlane.xlu0 %3082
          %3084 = vadd.xlane.f32.xlu0 %v3078
          %v3085 = vpop.xlane.xlu0 %3084
          %3086 = vadd.xlane.f32.xlu0 %v3079
          %v3087 = vpop.xlane.xlu0 %3086
          %v3088 = vmul.f32 %v3081, %v1128
          %v3089 = vmul.f32 %v3083, %v1128
          %v3090 = vmul.f32 %v3085, %v1128
          %v3091 = vmul.f32 %v3087, %v1128
          %v3092 = vadd.f32 %v3088, 1e-05
          %v3093 = vadd.f32 %v3089, 1e-05
          %v3094 = vadd.f32 %v3090, 1e-05
          %v3095 = vadd.f32 %v3091, 1e-05
          %v3096 = vrsqrt.pop %v3092
          %v3097 = vmul.f32 %v3096, %v3092
          %v3098 = vmul.f32 %v3097, %v3096
          %v3099 = vmul.f32 0.5, %v3098
          %v3100 = vsub.f32 1.5, %v3099
          %v3101 = vmul.f32 %v3096, %v3100
          %vm3102 = vweird.f32 %v3092
          %vm3103 = vweird.f32 %v3096
          %vm3104 = vmor %vm3102, %vm3103
          %v3105 = vsel %vm3104, %v3096, %v3101
          %v3106 = vrsqrt.pop %v3093
          %v3107 = vmul.f32 %v3106, %v3093
          %v3108 = vmul.f32 %v3107, %v3106
          %v3109 = vmul.f32 0.5, %v3108
          %v3110 = vsub.f32 1.5, %v3109
          %v3111 = vmul.f32 %v3106, %v3110
          %vm3112 = vweird.f32 %v3093
          %vm3113 = vweird.f32 %v3106
          %vm3114 = vmor %vm3112, %vm3113
          %v3115 = vsel %vm3114, %v3106, %v3111
          %v3116 = vrsqrt.pop %v3094
          %v3117 = vmul.f32 %v3116, %v3094
          %v3118 = vmul.f32 %v3117, %v3116
          %v3119 = vmul.f32 0.5, %v3118
          %v3120 = vsub.f32 1.5, %v3119
          %v3121 = vmul.f32 %v3116, %v3120
          %vm3122 = vweird.f32 %v3094
          %vm3123 = vweird.f32 %v3116
          %vm3124 = vmor %vm3122, %vm3123
          %v3125 = vsel %vm3124, %v3116, %v3121
          %v3126 = vrsqrt.pop %v3095
          %v3127 = vmul.f32 %v3126, %v3095
          %v3128 = vmul.f32 %v3127, %v3126
          %v3129 = vmul.f32 0.5, %v3128
          %v3130 = vsub.f32 1.5, %v3129
          %v3131 = vmul.f32 %v3126, %v3130
          %vm3132 = vweird.f32 %v3095
          %vm3133 = vweird.f32 %v3126
          %vm3134 = vmor %vm3132, %vm3133
          %v3135 = vsel %vm3134, %v3126, %v3131
          %v3136 = vmul.f32 %v3072, %v3105
          %v3137 = vmul.f32 %v3073, %v3115
          %v3138 = vmul.f32 %v3074, %v3125
          %v3139 = vmul.f32 %v3075, %v3135
          %v3141 = vperm.slane %v3058, 0
          %v3143 = vmul.f32 %v3136, %v3141
          %v3144 = vmul.f32 %v3137, %v3141
          %v3145 = vmul.f32 %v3138, %v3141
          %v3146 = vmul.f32 %v3139, %v3141
          %v3148 = vperm.slane %v3059, 0
          %v3150 = vadd.f32 %v3143, %v3148
          %v3151 = vadd.f32 %v3144, %v3148
          %v3152 = vadd.f32 %v3145, %v3148
          %v3153 = vadd.f32 %v3146, %v3148
          %3154 = vst [vmem:[#allocation25] sm:$0xff] %v3150
          %3155 = vst [vmem:[#allocation25 + $0x8] sm:$0xff] %v3151
          %3156 = vst [vmem:[#allocation25 + $0x10] sm:$0xff] %v3152
          %3157 = vst [vmem:[#allocation25 + $0x18] sm:$0xff] %v3153
        $region156: #{tpu_custom_call.1} parent=95 // pred_fallthru
          _
        // Predicated region
        $region157: #{tpu_custom_call.1} parent=95 // pred_check
          %p3158 = pneg %p542
        $region158: #{tpu_custom_call.1} parent=95 // pred_check_branch
          %3160 = sbr.rel (%p3158) target = $region160
        $region159: #{tpu_custom_call.1} parent=95 // pred_region
          %3162 = vsyncadd [#allocation6], 0
          %s3163 = sshll.u32 [#allocation25], 4
          %s3164 = int_to_ptr.vmem [resolvable:$true] %s3163
          %s3165 = sshll.u32 %s19, 4
          %s3166 = int_to_ptr.hbm [resolvable:$true] %s3165
          %3171 = dma.vmem_to_hbm [thread:$0]  %s3164, 512, %s3166, [#allocation6], 128, 128, 8
        $region160: #{tpu_custom_call.1} parent=95 // pred_fallthru
          _
        // Predicated region
        $region161: #{tpu_custom_call.1} parent=95 // pred_check
          %p3172 = pneg %p542
        $region162: #{tpu_custom_call.1} parent=95 // pred_check_branch
          %3174 = sbr.rel (%p3172) target = $region164
        $region163: #{tpu_custom_call.1} parent=95 // pred_region
          %3176 = dma.done [#allocation6], 512
        $region164: #{tpu_custom_call.1} parent=95 // pred_fallthru
          _
      $region96: #{tpu_custom_call.1} parent=5 // pred_fallthru
        _
      %p3177 = scmp.le.s32.totalorder 2, %s45
      // Predicated region
      $region165: #{tpu_custom_call.1} parent=5 // pred_check
        %p3178 = pneg %p3177
      $region166: #{tpu_custom_call.1} parent=5 // pred_check_branch
        %3180 = sbr.rel (%p3178) target = $region168
      $region167: #{tpu_custom_call.1} parent=5 // pred_region
        %s3181 = ssub.s32 %s45, 2
      $region168: #{tpu_custom_call.1} parent=5 // pred_fallthru
        _
    $region6: #{tpu_custom_call.1} parent=1 // loop_footer
      %s49 = sadd.s32 1, %s45
    $region7: #{tpu_custom_call.1} parent=1 // loop_footer_branch
      %44 = sbr.rel target = $region3
    $region8: #{tpu_custom_call.1} parent=1 // loop_exit
      _
    %3182 = vsyncpa [#allocation5], 1
    %s3183 = scalar_lea.sflag [#allocation5], 1
    %3184 = vsyncpa %s3183, 1
    %3185 = vsyncpa [#allocation8], 1
    %s3186 = scalar_lea.sflag [#allocation8], 1
    %3187 = vsyncpa %s3186, 1
    %3188 = vsyncpa [#allocation11], 1
    %s3189 = scalar_lea.sflag [#allocation11], 1
    %3190 = vsyncpa %s3189, 1
    %3191 = vsyncpa [#allocation14], 1
    %s3192 = scalar_lea.sflag [#allocation14], 1
    %3193 = vsyncpa %s3192, 1
    %3194 = vsyncpa [#allocation17], 1
    %s3195 = scalar_lea.sflag [#allocation17], 1
    %3196 = vsyncpa %s3195, 1
    %3197 = vsyncpa [#allocation20], 1
    %s3198 = scalar_lea.sflag [#allocation20], 1
    %3199 = vsyncpa %s3198, 1
    %3200 = vsyncpa [#allocation23], 1
    %s3201 = scalar_lea.sflag [#allocation23], 1
    %3202 = vsyncpa %s3201, 1
    %3203 = vsyncpa [#allocation6], 1
    %s3204 = scalar_lea.sflag [#allocation6], 1
    %3205 = vsyncpa %s3204, 1

</llo_original>
